<compile_context>
chip_gen: v5e
topology: v5e:2x2
jax: 0.10.0
libtpu: 0.0.40
codegen_flags: <defaults>
</compile_context>

<pallas_src>
import functools

import numpy as np
import jax
import jax.numpy as jnp
from jax.experimental import pallas as pl
from jax.experimental.pallas import tpu as pltpu


# --------------------------------- kernel ----------------------------------------
def _gates_to_hc(gates, c, H):
    """One-EUP-pass LSTM nonlinearity (i|f|g|o, PyTorch order).

    The wrapper pre-doubles the g-gate (3rd quarter) weight columns and bias, so
    gates[:, 2H:3H] already holds 2*z_g and tanh(z_g) = 2*sigmoid(2*z_g) - 1 is
    recovered with cheap VALU ops on top of a single full-[B, 4H] sigmoid pass."""
    sig = jax.nn.sigmoid(gates)                 # single full-tile EUP pass
    i = sig[:, 0 * H:1 * H]
    f = sig[:, 1 * H:2 * H]
    g = 2.0 * sig[:, 2 * H:3 * H] - 1.0         # tanh via sigmoid identity (VALU)
    o = sig[:, 3 * H:4 * H]
    c_new = f * c + i * g                       # f32 state math
    h_new = o * jnp.tanh(c_new)
    return h_new, c_new


def lstm_autoencoder_kernel(steps, compute_dtype, split_dots,
                            x_ref,
                            e_wih0_ref, e_whh0_ref, e_b0_ref,
                            e_w1_ref, e_b1_ref,
                            d_wih0_ref, d_whh0_ref, d_b0_ref,
                            d_w1_ref, d_b1_ref,
                            d_w2_ref, d_b2_ref,
                            out_ref):
    T, Bb, I = x_ref.shape
    H1 = e_whh0_ref.shape[0]
    H2 = d_whh0_ref.shape[0]
    f32 = jnp.float32
    cd = compute_dtype

    # ---- hoisted loads (loop-invariant; keeps repeated vld/broadcast out of steps)
    x = x_ref[...].astype(cd)                                   # [T, Bb, I]
    e_whh0 = e_whh0_ref[...]
    e_w1 = e_w1_ref[...]
    d_whh0 = d_whh0_ref[...]
    d_w1 = d_w1_ref[...]
    d_w2 = d_w2_ref[...]
    # Only the recurrent-cell biases need hoisted broadcasts; the cell-0 biases are
    # folded into the hoisted x-projections below (fewer per-step adds, fewer live
    # vregs across the unrolled loops).
    e_b1 = jnp.broadcast_to(e_b1_ref[...], (Bb, 4 * H2)).astype(f32)
    d_b1 = jnp.broadcast_to(d_b1_ref[...], (Bb, 4 * H1)).astype(f32)
    d_b2 = jnp.broadcast_to(d_b2_ref[...], (Bb, 4 * I)).astype(f32)

    if split_dots:  # v7x: MRB accumulates in place -> drop the per-step lane concat
        e_wih1, e_whh1 = e_w1[:H1, :], e_w1[H1:, :]
        d_wih1, d_whh1 = d_w1[:H2, :], d_w1[H2:, :]
        d_wih2, d_whh2 = d_w2[:H1, :], d_w2[H1:, :]

    # ---- time-invariant encoder input projection: one [T*Bb, I] matmul, bias folded
    x2d = x.reshape(T * Bb, I)
    xg_enc = (jnp.dot(x2d, e_wih0_ref[...], preferred_element_type=f32)
              .reshape(T, Bb, 4 * H1) + e_b0_ref[...].astype(f32))

    # ------------------ Encoder: 2-layer LSTM over the sequence ------------------
    h1 = jnp.zeros((Bb, H1), f32); c1 = jnp.zeros((Bb, H1), f32)
    h2 = jnp.zeros((Bb, H2), f32); c2 = jnp.zeros((Bb, H2), f32)
    for t in range(T):                                          # fully unrolled
        g0 = xg_enc[t] + jnp.dot(h1.astype(cd), e_whh0, preferred_element_type=f32)
        h1, c1 = _gates_to_hc(g0, c1, H1)
        if split_dots:
            g1 = (jnp.dot(h1.astype(cd), e_wih1, preferred_element_type=f32)
                  + jnp.dot(h2.astype(cd), e_whh1, preferred_element_type=f32) + e_b1)
        else:
            xh = jnp.concatenate([h1.astype(cd), h2.astype(cd)], axis=1)
            g1 = jnp.dot(xh, e_w1, preferred_element_type=f32) + e_b1
        h2, c2 = _gates_to_hc(g1, c2, H2)

    # ---- decoder cell-0 x-projection computed AFTER the encoder so its result is
    # ---- not live across the unrolled encoder loop (vreg-pressure control).
    xg_dec = (jnp.dot(x2d, d_wih0_ref[...], preferred_element_type=f32)
              .reshape(T, Bb, 4 * H2) + d_b0_ref[...].astype(f32))

    # ------------- Decoder: 3-cell LSTMCell stack on the reversed input ----------
    dh0, dc0 = h2, c2                                           # encoder representation
    dh1 = jnp.zeros((Bb, H1), f32); dc1 = jnp.zeros((Bb, H1), f32)
    dh2 = jnp.zeros((Bb, I), f32);  dc2 = jnp.zeros((Bb, I), f32)
    outs = []
    for t in range(steps):                                      # fully unrolled
        g0 = (xg_dec[T - 1 - t]                                 # sequence.flip(0)[t]
              + jnp.dot(dh0.astype(cd), d_whh0, preferred_element_type=f32))
        dh0, dc0 = _gates_to_hc(g0, dc0, H2)
        if split_dots:
            g1 = (jnp.dot(dh0.astype(cd), d_wih1, preferred_element_type=f32)
                  + jnp.dot(dh1.astype(cd), d_whh1, preferred_element_type=f32) + d_b1)
        else:
            xh1 = jnp.concatenate([dh0.astype(cd), dh1.astype(cd)], axis=1)
            g1 = jnp.dot(xh1, d_w1, preferred_element_type=f32) + d_b1
        dh1, dc1 = _gates_to_hc(g1, dc1, H1)
        if split_dots:
            g2 = (jnp.dot(dh1.astype(cd), d_wih2, preferred_element_type=f32)
                  + jnp.dot(dh2.astype(cd), d_whh2, preferred_element_type=f32) + d_b2)
        else:
            xh2 = jnp.concatenate([dh1.astype(cd), dh2.astype(cd)], axis=1)
            g2 = jnp.dot(xh2, d_w2, preferred_element_type=f32) + d_b2
        dh2, dc2 = _gates_to_hc(g2, dc2, I)
        outs.append(dh2)

    # Lane-dense, batch-major epilogue store: [Bb, steps*I] (= 128 lanes at the demo
    # shapes) -> unmasked vst writeback, and no output transpose in the wrapper.
    out_ref[...] = jnp.concatenate(outs, axis=1).astype(out_ref.dtype)


# --------------------------------- wrapper ---------------------------------------
def _device_kind():
    try:
        return jax.devices()[0].device_kind.lower()
    except Exception:  # pragma: no cover - CPU/interpret fallback
        return ""


def _scale_g_gate(arr, H):
    """Double the g-gate (3rd quarter) columns so the kernel can use
    tanh(z) = 2*sigmoid(2z) - 1 with a single sigmoid pass (x2 is exact in bf16)."""
    return arr.at[..., 2 * H:3 * H].multiply(2.0)


def lstm_autoencoder_forward(x, params, *, batch_first=True, decoding_steps=-1,
                             compute_dtype=None, batch_block=None, split_dots=None):
    """x: [B, T, I] if batch_first else [T, B, I]. Returns the reconstruction."""
    kind = _device_kind()
    is_v7 = "v7" in kind
    is_v5e = ("v5e" in kind) or ("v5 lite" in kind) or ("v5lite" in kind)

    if compute_dtype is None:
        # v5e has no bf16 VPU/EUP and the tiny-K matmuls gain nothing from bf16
        # MXU operands, so per-step bf16 packs would just add serial VALU work.
        compute_dtype = jnp.float32 if is_v5e else jnp.bfloat16
    if split_dots is None:
        # v7x MRB accumulates matmul results in place -> two dots beat concat+dot;
        # v5e/v6e (MRF FIFO, one pop per matmul) keep the single fused matmul.
        split_dots = is_v7

    seq = jnp.transpose(x, (1, 0, 2)) if batch_first else x
    seq = seq.astype(jnp.float32)
    T, B, I = seq.shape
    steps = T if decoding_steps == -1 else decoding_steps
    # Decoder re-reads the reversed input; steps > T would index out of bounds
    # (no runtime bounds check on VMEM refs), so guard here like PyTorch would error.
    assert 0 < steps <= T, "decoding_steps must be in [1, T]"

    (e_wih0, e_whh0, e_b0, e_wih1, e_whh1, e_b1,
     d_wih0, d_whh0, d_b0, d_wih1, d_whh1, d_b1,
     d_wih2, d_whh2, d_b2) = params
    H1, H2 = e_whh0.shape[0], e_whh1.shape[0]
    cd = compute_dtype

    # Fuse wih/whh for the purely-recurrent cells (operand is concat([x_t, h])).
    e_w1 = jnp.concatenate([e_wih1, e_whh1], axis=0)   # [H1+H2, 4*H2]
    d_w1 = jnp.concatenate([d_wih1, d_whh1], axis=0)   # [H2+H1, 4*H1]
    d_w2 = jnp.concatenate([d_wih2, d_whh2], axis=0)   # [H1+I , 4*I ]

    # Pre-double the g-gate columns of every weight/bias once, outside the kernel.
    e_wih0_s = _scale_g_gate(e_wih0, H1); e_whh0_s = _scale_g_gate(e_whh0, H1)
    e_b0_s = _scale_g_gate(e_b0, H1)
    e_w1_s = _scale_g_gate(e_w1, H2);     e_b1_s = _scale_g_gate(e_b1, H2)
    d_wih0_s = _scale_g_gate(d_wih0, H2); d_whh0_s = _scale_g_gate(d_whh0, H2)
    d_b0_s = _scale_g_gate(d_b0, H2)
    d_w1_s = _scale_g_gate(d_w1, H1);     d_b1_s = _scale_g_gate(d_b1, H1)
    d_w2_s = _scale_g_gate(d_w2, I);      d_b2_s = _scale_g_gate(d_b2, I)

    kernel_args = (seq,                                          # kept f32 at the DMA
                   e_wih0_s.astype(cd), e_whh0_s.astype(cd), e_b0_s,
                   e_w1_s.astype(cd), e_b1_s,
                   d_wih0_s.astype(cd), d_whh0_s.astype(cd), d_b0_s,
                   d_w1_s.astype(cd), d_b1_s,
                   d_w2_s.astype(cd), d_b2_s)

    # Generation-aware batch blocking: the grid is a sequential loop on one TC, so
    # extra grid steps replay the entire serial recurrence. v5e/v6e (1 TC): one
    # block (grid=(1,)). v7x (2 TCs): exactly one block per TensorCore when B
    # permits (block must satisfy the (8, 128) sublane rule).
    if batch_block is None:
        batch_block = B
        if is_v7:
            half = B // 2
            if half >= 8 and half % 8 == 0 and 2 * half == B:
                batch_block = half
    bb = batch_block
    assert B % bb == 0 and (bb % 8 == 0 or bb == B)
    grid = (B // bb,)

    def full_spec(a):
        return pl.BlockSpec(a.shape, lambda b: (0,) * a.ndim)

    in_specs = ([pl.BlockSpec((T, bb, I), lambda b: (0, b, 0))]
                + [full_spec(a) for a in kernel_args[1:]])
    # Lane-dense, batch-major output: [B, steps*I].
    out_spec = pl.BlockSpec((bb, steps * I), lambda b: (b, 0))

    kernel = functools.partial(lstm_autoencoder_kernel, steps, cd, split_dots)
    recon2d = pl.pallas_call(
        kernel,
        out_shape=jax.ShapeDtypeStruct((B, steps * I), jnp.float32),
        grid=grid,
        in_specs=in_specs,
        out_specs=out_spec,
        compiler_params=pltpu.CompilerParams(
            dimension_semantics=("parallel",)),
        # No manual streaming / vmem_limit_bytes: resident data (~200 KB) is far
        # under the scoped VMEM limit on every generation; the kernel is
        # latency-bound on the serial recurrence.
    )(*kernel_args)

    recon = recon2d.reshape(B, steps, I)                         # already batch-major
    return recon if batch_first else jnp.transpose(recon, (1, 0, 2))


# ------------------------------ parameter setup ---------------------------------
def _init_cell(key, in_dim, h_dim):
    k = 1.0 / np.sqrt(h_dim)
    k1, k2, k3, k4 = jax.random.split(key, 4)
    wih = jax.random.uniform(k1, (in_dim, 4 * h_dim), jnp.float32, -k, k)
    whh = jax.random.uniform(k2, (h_dim, 4 * h_dim), jnp.float32, -k, k)
    b_ih = jax.random.uniform(k3, (4 * h_dim,), jnp.float32, -k, k)
    b_hh = jax.random.uniform(k4, (4 * h_dim,), jnp.float32, -k, k)
    b = (b_ih + b_hh).reshape(1, 4 * h_dim)
    return wih, whh, b


def init_params(key, input_size, hidden_size):
    assert len(hidden_size) == 2, "kernel is specialized to a 2-layer encoder"
    I = input_size
    H1, H2 = hidden_size
    keys = jax.random.split(key, 5)
    enc0 = _init_cell(keys[0], I, H1)     # encoder layer 0: I  -> H1
    enc1 = _init_cell(keys[1], H1, H2)    # encoder layer 1: H1 -> H2
    # decoder hidden sizes = reversed([I, H1, H2]) = [H2, H1, I]
    dec0 = _init_cell(keys[2], I, H2)     # decoder cell 0:  I  -> H2
    dec1 = _init_cell(keys[3], H2, H1)    # decoder cell 1:  H2 -> H1
    dec2 = _init_cell(keys[4], H1, I)     # decoder cell 2:  H1 -> I
    return (*enc0, *enc1, *dec0, *dec1, *dec2)


# --------------------------- pure-JAX reference ----------------------------------
def _lstm_cell_ref(x, h, c, wih, whh, b, H):
    gates = (jnp.dot(x, wih, preferred_element_type=jnp.float32)
             + jnp.dot(h, whh, preferred_element_type=jnp.float32) + b)
    i = jax.nn.sigmoid(gates[:, 0 * H:1 * H])
    f = jax.nn.sigmoid(gates[:, 1 * H:2 * H])
    g = jnp.tanh(gates[:, 2 * H:3 * H])
    o = jax.nn.sigmoid(gates[:, 3 * H:4 * H])
    c_new = f * c + i * g
    return o * jnp.tanh(c_new), c_new


def reference_forward(x, params, *, batch_first=True, decoding_steps=-1):
    (e_wih0, e_whh0, e_b0, e_wih1, e_whh1, e_b1,
     d_wih0, d_whh0, d_b0, d_wih1, d_whh1, d_b1,
     d_wih2, d_whh2, d_b2) = params
    seq = jnp.transpose(x, (1, 0, 2)) if batch_first else x
    T, B, I = seq.shape
    H1, H2 = e_whh0.shape[0], e_whh1.shape[0]
    steps = T if decoding_steps == -1 else decoding_steps

    h1 = c1 = jnp.zeros((B, H1), jnp.float32)
    h2 = c2 = jnp.zeros((B, H2), jnp.float32)
    for t in range(T):
        h1, c1 = _lstm_cell_ref(seq[t], h1, c1, e_wih0, e_whh0, e_b0, H1)
        h2, c2 = _lstm_cell_ref(h1, h2, c2, e_wih1, e_whh1, e_b1, H2)

    dh0, dc0 = h2, c2
    dh1 = dc1 = jnp.zeros((B, H1), jnp.float32)
    dh2 = dc2 = jnp.zeros((B, I), jnp.float32)
    outs = []
    for t in range(steps):
        x_t = seq[T - 1 - t]
        dh0, dc0 = _lstm_cell_ref(x_t, dh0, dc0, d_wih0, d_whh0, d_b0, H2)
        dh1, dc1 = _lstm_cell_ref(dh0, dh1, dc1, d_wih1, d_whh1, d_b1, H1)
        dh2, dc2 = _lstm_cell_ref(dh1, dh2, dc2, d_wih2, d_whh2, d_b2, I)
        outs.append(dh2)
    recon = jnp.stack(outs, axis=0)
    return jnp.transpose(recon, (1, 0, 2)) if batch_first else recon


if __name__ == "__main__":
    key = jax.random.PRNGKey(0)
    B, T, I = 16, 8, 16
    hidden = [32, 32]

    kx, kp = jax.random.split(key)
    x = jax.random.normal(kx, (B, T, I), jnp.float32)   # batch_first input [B, T, I]
    params = init_params(kp, I, hidden)

    ref = jax.block_until_ready(reference_forward(x, params))

    # f32 compute path: tight check against the pure-JAX reference.
    recon_f32 = jax.block_until_ready(
        lstm_autoencoder_forward(x, params, compute_dtype=jnp.float32))
    assert recon_f32.shape == (B, T, I), recon_f32.shape
    np.testing.assert_allclose(np.asarray(recon_f32), np.asarray(ref),
                               atol=2e-2, rtol=2e-2)

    # bf16 MXU-operand path: f32 accumulation + f32 state math; checked against the
    # f32 reference within a bf16 precision budget (T=8, error compounding is small).
    recon_bf16 = jax.block_until_ready(
        lstm_autoencoder_forward(x, params, compute_dtype=jnp.bfloat16))
    assert recon_bf16.shape == (B, T, I), recon_bf16.shape
    np.testing.assert_allclose(np.asarray(recon_bf16), np.asarray(ref),
                               atol=6e-2, rtol=6e-2)

    # Chip-dispatched defaults (compute dtype, batch blocking, dot form).
    recon_auto = jax.block_until_ready(lstm_autoencoder_forward(x, params))
    assert recon_auto.shape == (B, T, I), recon_auto.shape
    np.testing.assert_allclose(np.asarray(recon_auto), np.asarray(ref),
                               atol=6e-2, rtol=6e-2)

    print("KERNEL_OK")
</pallas_src>

<mosaic_0001>
module attributes {stable_mosaic.version = 11 : i64} {
  func.func @lstm_autoencoder_kernel(%arg0: i32, %arg1: memref<8x16x16xf32, #tpu.memory_space<vmem>>, %arg2: memref<16x128xf32, #tpu.memory_space<vmem>>, %arg3: memref<32x128xf32, #tpu.memory_space<vmem>>, %arg4: memref<1x128xf32, #tpu.memory_space<vmem>>, %arg5: memref<64x128xf32, #tpu.memory_space<vmem>>, %arg6: memref<1x128xf32, #tpu.memory_space<vmem>>, %arg7: memref<16x128xf32, #tpu.memory_space<vmem>>, %arg8: memref<32x128xf32, #tpu.memory_space<vmem>>, %arg9: memref<1x128xf32, #tpu.memory_space<vmem>>, %arg10: memref<64x128xf32, #tpu.memory_space<vmem>>, %arg11: memref<1x128xf32, #tpu.memory_space<vmem>>, %arg12: memref<48x64xf32, #tpu.memory_space<vmem>>, %arg13: memref<1x64xf32, #tpu.memory_space<vmem>>, %arg14: memref<16x128xf32, #tpu.memory_space<vmem>>) attributes {dimension_semantics = [#tpu.dimension_semantics<parallel>], iteration_bounds = array<i64: 1>, scalar_prefetch = 0 : i64, scratch_operands = 0 : i64, tpu.core_type = #tpu.core_type<tc>, window_params = [{transform_indices = @transform_0, window_bounds = array<i64: 8, 16, 16>}, {pipeline_mode = #tpu.pipeline_mode<synchronous>, transform_indices = @transform_1, window_bounds = array<i64: 16, 128>}, {pipeline_mode = #tpu.pipeline_mode<synchronous>, transform_indices = @transform_2, window_bounds = array<i64: 32, 128>}, {pipeline_mode = #tpu.pipeline_mode<synchronous>, transform_indices = @transform_3, window_bounds = array<i64: 1, 128>}, {pipeline_mode = #tpu.pipeline_mode<synchronous>, transform_indices = @transform_4, window_bounds = array<i64: 64, 128>}, {pipeline_mode = #tpu.pipeline_mode<synchronous>, transform_indices = @transform_5, window_bounds = array<i64: 1, 128>}, {pipeline_mode = #tpu.pipeline_mode<synchronous>, transform_indices = @transform_6, window_bounds = array<i64: 16, 128>}, {pipeline_mode = #tpu.pipeline_mode<synchronous>, transform_indices = @transform_7, window_bounds = array<i64: 32, 128>}, {pipeline_mode = #tpu.pipeline_mode<synchronous>, transform_indices = @transform_8, window_bounds = array<i64: 1, 128>}, {pipeline_mode = #tpu.pipeline_mode<synchronous>, transform_indices = @transform_9, window_bounds = array<i64: 64, 128>}, {pipeline_mode = #tpu.pipeline_mode<synchronous>, transform_indices = @transform_10, window_bounds = array<i64: 1, 128>}, {pipeline_mode = #tpu.pipeline_mode<synchronous>, transform_indices = @transform_11, window_bounds = array<i64: 48, 64>}, {pipeline_mode = #tpu.pipeline_mode<synchronous>, transform_indices = @transform_12, window_bounds = array<i64: 1, 64>}, {transform_indices = @transform_13, window_bounds = array<i64: 16, 128>}]} {
    %c0 = arith.constant 0 : index
    %c0_0 = arith.constant 0 : index
    %c0_1 = arith.constant 0 : index
    %0 = vector.load %arg1[%c0, %c0_0, %c0_1] : memref<8x16x16xf32, #tpu.memory_space<vmem>>, vector<8x16x16xf32>
    %c0_2 = arith.constant 0 : index
    %c0_3 = arith.constant 0 : index
    %1 = vector.load %arg3[%c0_2, %c0_3] : memref<32x128xf32, #tpu.memory_space<vmem>>, vector<32x128xf32>
    %c0_4 = arith.constant 0 : index
    %c0_5 = arith.constant 0 : index
    %2 = vector.load %arg5[%c0_4, %c0_5] : memref<64x128xf32, #tpu.memory_space<vmem>>, vector<64x128xf32>
    %c0_6 = arith.constant 0 : index
    %c0_7 = arith.constant 0 : index
    %3 = vector.load %arg8[%c0_6, %c0_7] : memref<32x128xf32, #tpu.memory_space<vmem>>, vector<32x128xf32>
    %c0_8 = arith.constant 0 : index
    %c0_9 = arith.constant 0 : index
    %4 = vector.load %arg10[%c0_8, %c0_9] : memref<64x128xf32, #tpu.memory_space<vmem>>, vector<64x128xf32>
    %c0_10 = arith.constant 0 : index
    %c0_11 = arith.constant 0 : index
    %5 = vector.load %arg12[%c0_10, %c0_11] : memref<48x64xf32, #tpu.memory_space<vmem>>, vector<48x64xf32>
    %c0_12 = arith.constant 0 : index
    %c0_13 = arith.constant 0 : index
    %6 = vector.load %arg6[%c0_12, %c0_13] : memref<1x128xf32, #tpu.memory_space<vmem>>, vector<1x128xf32>
    %7 = vector.shape_cast %6 : vector<1x128xf32> to vector<1x128xf32>
    %8 = vector.broadcast %7 : vector<1x128xf32> to vector<16x128xf32>
    %c0_14 = arith.constant 0 : index
    %c0_15 = arith.constant 0 : index
    %9 = vector.load %arg11[%c0_14, %c0_15] : memref<1x128xf32, #tpu.memory_space<vmem>>, vector<1x128xf32>
    %10 = vector.shape_cast %9 : vector<1x128xf32> to vector<1x128xf32>
    %11 = vector.broadcast %10 : vector<1x128xf32> to vector<16x128xf32>
    %c0_16 = arith.constant 0 : index
    %c0_17 = arith.constant 0 : index
    %12 = vector.load %arg13[%c0_16, %c0_17] : memref<1x64xf32, #tpu.memory_space<vmem>>, vector<1x64xf32>
    %13 = vector.shape_cast %12 : vector<1x64xf32> to vector<1x64xf32>
    %14 = vector.broadcast %13 : vector<1x64xf32> to vector<16x64xf32>
    %15 = vector.shape_cast %0 : vector<8x16x16xf32> to vector<128x16xf32>
    %c0_18 = arith.constant 0 : index
    %c0_19 = arith.constant 0 : index
    %16 = vector.load %arg2[%c0_18, %c0_19] : memref<16x128xf32, #tpu.memory_space<vmem>>, vector<16x128xf32>
    %cst = arith.constant dense<0.000000e+00> : vector<128x128xf32>
    %17 = tpu.matmul %15, %16, %cst {dimension_numbers = #tpu.dot_dimension_numbers<[1], [0], [0], [1], [0, 0, 1, 1], [], []>} : vector<128x16xf32>, vector<16x128xf32>, vector<128x128xf32> -> vector<128x128xf32>
    %18 = vector.shape_cast %17 : vector<128x128xf32> to vector<8x16x128xf32>
    %c0_20 = arith.constant 0 : index
    %c0_21 = arith.constant 0 : index
    %19 = vector.load %arg4[%c0_20, %c0_21] : memref<1x128xf32, #tpu.memory_space<vmem>>, vector<1x128xf32>
    %20 = vector.shape_cast %19 : vector<1x128xf32> to vector<1x1x128xf32>
    %21 = vector.broadcast %20 : vector<1x1x128xf32> to vector<8x16x128xf32>
    %22 = arith.addf %18, %21 : vector<8x16x128xf32>
    %cst_22 = arith.constant 0.000000e+00 : f32
    %23 = vector.broadcast %cst_22 : f32 to vector<16x32xf32>
    %cst_23 = arith.constant 0.000000e+00 : f32
    %24 = vector.broadcast %cst_23 : f32 to vector<16x32xf32>
    %cst_24 = arith.constant 0.000000e+00 : f32
    %25 = vector.broadcast %cst_24 : f32 to vector<16x32xf32>
    %cst_25 = arith.constant 0.000000e+00 : f32
    %26 = vector.broadcast %cst_25 : f32 to vector<16x32xf32>
    %27 = vector.extract_strided_slice %22 {offsets = [0, 0, 0], sizes = [1, 16, 128], strides = [1, 1, 1]} : vector<8x16x128xf32> to vector<1x16x128xf32>
    %28 = vector.shape_cast %27 : vector<1x16x128xf32> to vector<16x128xf32>
    %cst_26 = arith.constant dense<0.000000e+00> : vector<16x128xf32>
    %29 = tpu.matmul %23, %1, %cst_26 {dimension_numbers = #tpu.dot_dimension_numbers<[1], [0], [0], [1], [0, 0, 1, 1], [], []>} : vector<16x32xf32>, vector<32x128xf32>, vector<16x128xf32> -> vector<16x128xf32>
    %30 = arith.addf %28, %29 : vector<16x128xf32>
    %31 = arith.negf %30 : vector<16x128xf32>
    %32 = math.exp %31 : vector<16x128xf32>
    %cst_27 = arith.constant 1.000000e+00 : f32
    %33 = vector.broadcast %cst_27 : f32 to vector<16x128xf32>
    %34 = arith.addf %33, %32 : vector<16x128xf32>
    %35 = arith.divf %33, %34 : vector<16x128xf32>
    %36 = vector.extract_strided_slice %35 {offsets = [0, 0], sizes = [16, 32], strides = [1, 1]} : vector<16x128xf32> to vector<16x32xf32>
    %37 = vector.extract_strided_slice %35 {offsets = [0, 32], sizes = [16, 32], strides = [1, 1]} : vector<16x128xf32> to vector<16x32xf32>
    %38 = vector.extract_strided_slice %35 {offsets = [0, 64], sizes = [16, 32], strides = [1, 1]} : vector<16x128xf32> to vector<16x32xf32>
    %cst_28 = arith.constant 2.000000e+00 : f32
    %39 = vector.broadcast %cst_28 : f32 to vector<16x32xf32>
    %40 = arith.mulf %39, %38 : vector<16x32xf32>
    %cst_29 = arith.constant 1.000000e+00 : f32
    %41 = vector.broadcast %cst_29 : f32 to vector<16x32xf32>
    %42 = arith.subf %40, %41 : vector<16x32xf32>
    %43 = vector.extract_strided_slice %35 {offsets = [0, 96], sizes = [16, 32], strides = [1, 1]} : vector<16x128xf32> to vector<16x32xf32>
    %44 = arith.mulf %37, %24 : vector<16x32xf32>
    %45 = arith.mulf %36, %42 : vector<16x32xf32>
    %46 = arith.addf %44, %45 : vector<16x32xf32>
    %47 = math.tanh %46 : vector<16x32xf32>
    %48 = arith.mulf %43, %47 : vector<16x32xf32>
    %49 = tpu.concatenate %48, %25 in 1 : vector<16x32xf32>, vector<16x32xf32> -> vector<16x64xf32>
    %cst_30 = arith.constant dense<0.000000e+00> : vector<16x128xf32>
    %50 = tpu.matmul %49, %2, %cst_30 {dimension_numbers = #tpu.dot_dimension_numbers<[1], [0], [0], [1], [0, 0, 1, 1], [], []>} : vector<16x64xf32>, vector<64x128xf32>, vector<16x128xf32> -> vector<16x128xf32>
    %51 = arith.addf %50, %8 : vector<16x128xf32>
    %52 = arith.negf %51 : vector<16x128xf32>
    %53 = math.exp %52 : vector<16x128xf32>
    %cst_31 = arith.constant 1.000000e+00 : f32
    %54 = vector.broadcast %cst_31 : f32 to vector<16x128xf32>
    %55 = arith.addf %54, %53 : vector<16x128xf32>
    %56 = arith.divf %54, %55 : vector<16x128xf32>
    %57 = vector.extract_strided_slice %56 {offsets = [0, 0], sizes = [16, 32], strides = [1, 1]} : vector<16x128xf32> to vector<16x32xf32>
    %58 = vector.extract_strided_slice %56 {offsets = [0, 32], sizes = [16, 32], strides = [1, 1]} : vector<16x128xf32> to vector<16x32xf32>
    %59 = vector.extract_strided_slice %56 {offsets = [0, 64], sizes = [16, 32], strides = [1, 1]} : vector<16x128xf32> to vector<16x32xf32>
    %cst_32 = arith.constant 2.000000e+00 : f32
    %60 = vector.broadcast %cst_32 : f32 to vector<16x32xf32>
    %61 = arith.mulf %60, %59 : vector<16x32xf32>
    %cst_33 = arith.constant 1.000000e+00 : f32
    %62 = vector.broadcast %cst_33 : f32 to vector<16x32xf32>
    %63 = arith.subf %61, %62 : vector<16x32xf32>
    %64 = vector.extract_strided_slice %56 {offsets = [0, 96], sizes = [16, 32], strides = [1, 1]} : vector<16x128xf32> to vector<16x32xf32>
    %65 = arith.mulf %58, %26 : vector<16x32xf32>
    %66 = arith.mulf %57, %63 : vector<16x32xf32>
    %67 = arith.addf %65, %66 : vector<16x32xf32>
    %68 = math.tanh %67 : vector<16x32xf32>
    %69 = arith.mulf %64, %68 : vector<16x32xf32>
    %70 = vector.extract_strided_slice %22 {offsets = [1, 0, 0], sizes = [1, 16, 128], strides = [1, 1, 1]} : vector<8x16x128xf32> to vector<1x16x128xf32>
    %71 = vector.shape_cast %70 : vector<1x16x128xf32> to vector<16x128xf32>
    %cst_34 = arith.constant dense<0.000000e+00> : vector<16x128xf32>
    %72 = tpu.matmul %48, %1, %cst_34 {dimension_numbers = #tpu.dot_dimension_numbers<[1], [0], [0], [1], [0, 0, 1, 1], [], []>} : vector<16x32xf32>, vector<32x128xf32>, vector<16x128xf32> -> vector<16x128xf32>
    %73 = arith.addf %71, %72 : vector<16x128xf32>
    %74 = arith.negf %73 : vector<16x128xf32>
    %75 = math.exp %74 : vector<16x128xf32>
    %cst_35 = arith.constant 1.000000e+00 : f32
    %76 = vector.broadcast %cst_35 : f32 to vector<16x128xf32>
    %77 = arith.addf %76, %75 : vector<16x128xf32>
    %78 = arith.divf %76, %77 : vector<16x128xf32>
    %79 = vector.extract_strided_slice %78 {offsets = [0, 0], sizes = [16, 32], strides = [1, 1]} : vector<16x128xf32> to vector<16x32xf32>
    %80 = vector.extract_strided_slice %78 {offsets = [0, 32], sizes = [16, 32], strides = [1, 1]} : vector<16x128xf32> to vector<16x32xf32>
    %81 = vector.extract_strided_slice %78 {offsets = [0, 64], sizes = [16, 32], strides = [1, 1]} : vector<16x128xf32> to vector<16x32xf32>
    %cst_36 = arith.constant 2.000000e+00 : f32
    %82 = vector.broadcast %cst_36 : f32 to vector<16x32xf32>
    %83 = arith.mulf %82, %81 : vector<16x32xf32>
    %cst_37 = arith.constant 1.000000e+00 : f32
    %84 = vector.broadcast %cst_37 : f32 to vector<16x32xf32>
    %85 = arith.subf %83, %84 : vector<16x32xf32>
    %86 = vector.extract_strided_slice %78 {offsets = [0, 96], sizes = [16, 32], strides = [1, 1]} : vector<16x128xf32> to vector<16x32xf32>
    %87 = arith.mulf %80, %46 : vector<16x32xf32>
    %88 = arith.mulf %79, %85 : vector<16x32xf32>
    %89 = arith.addf %87, %88 : vector<16x32xf32>
    %90 = math.tanh %89 : vector<16x32xf32>
    %91 = arith.mulf %86, %90 : vector<16x32xf32>
    %92 = tpu.concatenate %91, %69 in 1 : vector<16x32xf32>, vector<16x32xf32> -> vector<16x64xf32>
    %cst_38 = arith.constant dense<0.000000e+00> : vector<16x128xf32>
    %93 = tpu.matmul %92, %2, %cst_38 {dimension_numbers = #tpu.dot_dimension_numbers<[1], [0], [0], [1], [0, 0, 1, 1], [], []>} : vector<16x64xf32>, vector<64x128xf32>, vector<16x128xf32> -> vector<16x128xf32>
    %94 = arith.addf %93, %8 : vector<16x128xf32>
    %95 = arith.negf %94 : vector<16x128xf32>
    %96 = math.exp %95 : vector<16x128xf32>
    %cst_39 = arith.constant 1.000000e+00 : f32
    %97 = vector.broadcast %cst_39 : f32 to vector<16x128xf32>
    %98 = arith.addf %97, %96 : vector<16x128xf32>
    %99 = arith.divf %97, %98 : vector<16x128xf32>
    %100 = vector.extract_strided_slice %99 {offsets = [0, 0], sizes = [16, 32], strides = [1, 1]} : vector<16x128xf32> to vector<16x32xf32>
    %101 = vector.extract_strided_slice %99 {offsets = [0, 32], sizes = [16, 32], strides = [1, 1]} : vector<16x128xf32> to vector<16x32xf32>
    %102 = vector.extract_strided_slice %99 {offsets = [0, 64], sizes = [16, 32], strides = [1, 1]} : vector<16x128xf32> to vector<16x32xf32>
    %cst_40 = arith.constant 2.000000e+00 : f32
    %103 = vector.broadcast %cst_40 : f32 to vector<16x32xf32>
    %104 = arith.mulf %103, %102 : vector<16x32xf32>
    %cst_41 = arith.constant 1.000000e+00 : f32
    %105 = vector.broadcast %cst_41 : f32 to vector<16x32xf32>
    %106 = arith.subf %104, %105 : vector<16x32xf32>
    %107 = vector.extract_strided_slice %99 {offsets = [0, 96], sizes = [16, 32], strides = [1, 1]} : vector<16x128xf32> to vector<16x32xf32>
    %108 = arith.mulf %101, %67 : vector<16x32xf32>
    %109 = arith.mulf %100, %106 : vector<16x32xf32>
    %110 = arith.addf %108, %109 : vector<16x32xf32>
    %111 = math.tanh %110 : vector<16x32xf32>
    %112 = arith.mulf %107, %111 : vector<16x32xf32>
    %113 = vector.extract_strided_slice %22 {offsets = [2, 0, 0], sizes = [1, 16, 128], strides = [1, 1, 1]} : vector<8x16x128xf32> to vector<1x16x128xf32>
    %114 = vector.shape_cast %113 : vector<1x16x128xf32> to vector<16x128xf32>
    %cst_42 = arith.constant dense<0.000000e+00> : vector<16x128xf32>
    %115 = tpu.matmul %91, %1, %cst_42 {dimension_numbers = #tpu.dot_dimension_numbers<[1], [0], [0], [1], [0, 0, 1, 1], [], []>} : vector<16x32xf32>, vector<32x128xf32>, vector<16x128xf32> -> vector<16x128xf32>
    %116 = arith.addf %114, %115 : vector<16x128xf32>
    %117 = arith.negf %116 : vector<16x128xf32>
    %118 = math.exp %117 : vector<16x128xf32>
    %cst_43 = arith.constant 1.000000e+00 : f32
    %119 = vector.broadcast %cst_43 : f32 to vector<16x128xf32>
    %120 = arith.addf %119, %118 : vector<16x128xf32>
    %121 = arith.divf %119, %120 : vector<16x128xf32>
    %122 = vector.extract_strided_slice %121 {offsets = [0, 0], sizes = [16, 32], strides = [1, 1]} : vector<16x128xf32> to vector<16x32xf32>
    %123 = vector.extract_strided_slice %121 {offsets = [0, 32], sizes = [16, 32], strides = [1, 1]} : vector<16x128xf32> to vector<16x32xf32>
    %124 = vector.extract_strided_slice %121 {offsets = [0, 64], sizes = [16, 32], strides = [1, 1]} : vector<16x128xf32> to vector<16x32xf32>
    %cst_44 = arith.constant 2.000000e+00 : f32
    %125 = vector.broadcast %cst_44 : f32 to vector<16x32xf32>
    %126 = arith.mulf %125, %124 : vector<16x32xf32>
    %cst_45 = arith.constant 1.000000e+00 : f32
    %127 = vector.broadcast %cst_45 : f32 to vector<16x32xf32>
    %128 = arith.subf %126, %127 : vector<16x32xf32>
    %129 = vector.extract_strided_slice %121 {offsets = [0, 96], sizes = [16, 32], strides = [1, 1]} : vector<16x128xf32> to vector<16x32xf32>
    %130 = arith.mulf %123, %89 : vector<16x32xf32>
    %131 = arith.mulf %122, %128 : vector<16x32xf32>
    %132 = arith.addf %130, %131 : vector<16x32xf32>
    %133 = math.tanh %132 : vector<16x32xf32>
    %134 = arith.mulf %129, %133 : vector<16x32xf32>
    %135 = tpu.concatenate %134, %112 in 1 : vector<16x32xf32>, vector<16x32xf32> -> vector<16x64xf32>
    %cst_46 = arith.constant dense<0.000000e+00> : vector<16x128xf32>
    %136 = tpu.matmul %135, %2, %cst_46 {dimension_numbers = #tpu.dot_dimension_numbers<[1], [0], [0], [1], [0, 0, 1, 1], [], []>} : vector<16x64xf32>, vector<64x128xf32>, vector<16x128xf32> -> vector<16x128xf32>
    %137 = arith.addf %136, %8 : vector<16x128xf32>
    %138 = arith.negf %137 : vector<16x128xf32>
    %139 = math.exp %138 : vector<16x128xf32>
    %cst_47 = arith.constant 1.000000e+00 : f32
    %140 = vector.broadcast %cst_47 : f32 to vector<16x128xf32>
    %141 = arith.addf %140, %139 : vector<16x128xf32>
    %142 = arith.divf %140, %141 : vector<16x128xf32>
    %143 = vector.extract_strided_slice %142 {offsets = [0, 0], sizes = [16, 32], strides = [1, 1]} : vector<16x128xf32> to vector<16x32xf32>
    %144 = vector.extract_strided_slice %142 {offsets = [0, 32], sizes = [16, 32], strides = [1, 1]} : vector<16x128xf32> to vector<16x32xf32>
    %145 = vector.extract_strided_slice %142 {offsets = [0, 64], sizes = [16, 32], strides = [1, 1]} : vector<16x128xf32> to vector<16x32xf32>
    %cst_48 = arith.constant 2.000000e+00 : f32
    %146 = vector.broadcast %cst_48 : f32 to vector<16x32xf32>
    %147 = arith.mulf %146, %145 : vector<16x32xf32>
    %cst_49 = arith.constant 1.000000e+00 : f32
    %148 = vector.broadcast %cst_49 : f32 to vector<16x32xf32>
    %149 = arith.subf %147, %148 : vector<16x32xf32>
    %150 = vector.extract_strided_slice %142 {offsets = [0, 96], sizes = [16, 32], strides = [1, 1]} : vector<16x128xf32> to vector<16x32xf32>
    %151 = arith.mulf %144, %110 : vector<16x32xf32>
    %152 = arith.mulf %143, %149 : vector<16x32xf32>
    %153 = arith.addf %151, %152 : vector<16x32xf32>
    %154 = math.tanh %153 : vector<16x32xf32>
    %155 = arith.mulf %150, %154 : vector<16x32xf32>
    %156 = vector.extract_strided_slice %22 {offsets = [3, 0, 0], sizes = [1, 16, 128], strides = [1, 1, 1]} : vector<8x16x128xf32> to vector<1x16x128xf32>
    %157 = vector.shape_cast %156 : vector<1x16x128xf32> to vector<16x128xf32>
    %cst_50 = arith.constant dense<0.000000e+00> : vector<16x128xf32>
    %158 = tpu.matmul %134, %1, %cst_50 {dimension_numbers = #tpu.dot_dimension_numbers<[1], [0], [0], [1], [0, 0, 1, 1], [], []>} : vector<16x32xf32>, vector<32x128xf32>, vector<16x128xf32> -> vector<16x128xf32>
    %159 = arith.addf %157, %158 : vector<16x128xf32>
    %160 = arith.negf %159 : vector<16x128xf32>
    %161 = math.exp %160 : vector<16x128xf32>
    %cst_51 = arith.constant 1.000000e+00 : f32
    %162 = vector.broadcast %cst_51 : f32 to vector<16x128xf32>
    %163 = arith.addf %162, %161 : vector<16x128xf32>
    %164 = arith.divf %162, %163 : vector<16x128xf32>
    %165 = vector.extract_strided_slice %164 {offsets = [0, 0], sizes = [16, 32], strides = [1, 1]} : vector<16x128xf32> to vector<16x32xf32>
    %166 = vector.extract_strided_slice %164 {offsets = [0, 32], sizes = [16, 32], strides = [1, 1]} : vector<16x128xf32> to vector<16x32xf32>
    %167 = vector.extract_strided_slice %164 {offsets = [0, 64], sizes = [16, 32], strides = [1, 1]} : vector<16x128xf32> to vector<16x32xf32>
    %cst_52 = arith.constant 2.000000e+00 : f32
    %168 = vector.broadcast %cst_52 : f32 to vector<16x32xf32>
    %169 = arith.mulf %168, %167 : vector<16x32xf32>
    %cst_53 = arith.constant 1.000000e+00 : f32
    %170 = vector.broadcast %cst_53 : f32 to vector<16x32xf32>
    %171 = arith.subf %169, %170 : vector<16x32xf32>
    %172 = vector.extract_strided_slice %164 {offsets = [0, 96], sizes = [16, 32], strides = [1, 1]} : vector<16x128xf32> to vector<16x32xf32>
    %173 = arith.mulf %166, %132 : vector<16x32xf32>
    %174 = arith.mulf %165, %171 : vector<16x32xf32>
    %175 = arith.addf %173, %174 : vector<16x32xf32>
    %176 = math.tanh %175 : vector<16x32xf32>
    %177 = arith.mulf %172, %176 : vector<16x32xf32>
    %178 = tpu.concatenate %177, %155 in 1 : vector<16x32xf32>, vector<16x32xf32> -> vector<16x64xf32>
    %cst_54 = arith.constant dense<0.000000e+00> : vector<16x128xf32>
    %179 = tpu.matmul %178, %2, %cst_54 {dimension_numbers = #tpu.dot_dimension_numbers<[1], [0], [0], [1], [0, 0, 1, 1], [], []>} : vector<16x64xf32>, vector<64x128xf32>, vector<16x128xf32> -> vector<16x128xf32>
    %180 = arith.addf %179, %8 : vector<16x128xf32>
    %181 = arith.negf %180 : vector<16x128xf32>
    %182 = math.exp %181 : vector<16x128xf32>
    %cst_55 = arith.constant 1.000000e+00 : f32
    %183 = vector.broadcast %cst_55 : f32 to vector<16x128xf32>
    %184 = arith.addf %183, %182 : vector<16x128xf32>
    %185 = arith.divf %183, %184 : vector<16x128xf32>
    %186 = vector.extract_strided_slice %185 {offsets = [0, 0], sizes = [16, 32], strides = [1, 1]} : vector<16x128xf32> to vector<16x32xf32>
    %187 = vector.extract_strided_slice %185 {offsets = [0, 32], sizes = [16, 32], strides = [1, 1]} : vector<16x128xf32> to vector<16x32xf32>
    %188 = vector.extract_strided_slice %185 {offsets = [0, 64], sizes = [16, 32], strides = [1, 1]} : vector<16x128xf32> to vector<16x32xf32>
    %cst_56 = arith.constant 2.000000e+00 : f32
    %189 = vector.broadcast %cst_56 : f32 to vector<16x32xf32>
    %190 = arith.mulf %189, %188 : vector<16x32xf32>
    %cst_57 = arith.constant 1.000000e+00 : f32
    %191 = vector.broadcast %cst_57 : f32 to vector<16x32xf32>
    %192 = arith.subf %190, %191 : vector<16x32xf32>
    %193 = vector.extract_strided_slice %185 {offsets = [0, 96], sizes = [16, 32], strides = [1, 1]} : vector<16x128xf32> to vector<16x32xf32>
    %194 = arith.mulf %187, %153 : vector<16x32xf32>
    %195 = arith.mulf %186, %192 : vector<16x32xf32>
    %196 = arith.addf %194, %195 : vector<16x32xf32>
    %197 = math.tanh %196 : vector<16x32xf32>
    %198 = arith.mulf %193, %197 : vector<16x32xf32>
    %199 = vector.extract_strided_slice %22 {offsets = [4, 0, 0], sizes = [1, 16, 128], strides = [1, 1, 1]} : vector<8x16x128xf32> to vector<1x16x128xf32>
    %200 = vector.shape_cast %199 : vector<1x16x128xf32> to vector<16x128xf32>
    %cst_58 = arith.constant dense<0.000000e+00> : vector<16x128xf32>
    %201 = tpu.matmul %177, %1, %cst_58 {dimension_numbers = #tpu.dot_dimension_numbers<[1], [0], [0], [1], [0, 0, 1, 1], [], []>} : vector<16x32xf32>, vector<32x128xf32>, vector<16x128xf32> -> vector<16x128xf32>
    %202 = arith.addf %200, %201 : vector<16x128xf32>
    %203 = arith.negf %202 : vector<16x128xf32>
    %204 = math.exp %203 : vector<16x128xf32>
    %cst_59 = arith.constant 1.000000e+00 : f32
    %205 = vector.broadcast %cst_59 : f32 to vector<16x128xf32>
    %206 = arith.addf %205, %204 : vector<16x128xf32>
    %207 = arith.divf %205, %206 : vector<16x128xf32>
    %208 = vector.extract_strided_slice %207 {offsets = [0, 0], sizes = [16, 32], strides = [1, 1]} : vector<16x128xf32> to vector<16x32xf32>
    %209 = vector.extract_strided_slice %207 {offsets = [0, 32], sizes = [16, 32], strides = [1, 1]} : vector<16x128xf32> to vector<16x32xf32>
    %210 = vector.extract_strided_slice %207 {offsets = [0, 64], sizes = [16, 32], strides = [1, 1]} : vector<16x128xf32> to vector<16x32xf32>
    %cst_60 = arith.constant 2.000000e+00 : f32
    %211 = vector.broadcast %cst_60 : f32 to vector<16x32xf32>
    %212 = arith.mulf %211, %210 : vector<16x32xf32>
    %cst_61 = arith.constant 1.000000e+00 : f32
    %213 = vector.broadcast %cst_61 : f32 to vector<16x32xf32>
    %214 = arith.subf %212, %213 : vector<16x32xf32>
    %215 = vector.extract_strided_slice %207 {offsets = [0, 96], sizes = [16, 32], strides = [1, 1]} : vector<16x128xf32> to vector<16x32xf32>
    %216 = arith.mulf %209, %175 : vector<16x32xf32>
    %217 = arith.mulf %208, %214 : vector<16x32xf32>
    %218 = arith.addf %216, %217 : vector<16x32xf32>
    %219 = math.tanh %218 : vector<16x32xf32>
    %220 = arith.mulf %215, %219 : vector<16x32xf32>
    %221 = tpu.concatenate %220, %198 in 1 : vector<16x32xf32>, vector<16x32xf32> -> vector<16x64xf32>
    %cst_62 = arith.constant dense<0.000000e+00> : vector<16x128xf32>
    %222 = tpu.matmul %221, %2, %cst_62 {dimension_numbers = #tpu.dot_dimension_numbers<[1], [0], [0], [1], [0, 0, 1, 1], [], []>} : vector<16x64xf32>, vector<64x128xf32>, vector<16x128xf32> -> vector<16x128xf32>
    %223 = arith.addf %222, %8 : vector<16x128xf32>
    %224 = arith.negf %223 : vector<16x128xf32>
    %225 = math.exp %224 : vector<16x128xf32>
    %cst_63 = arith.constant 1.000000e+00 : f32
    %226 = vector.broadcast %cst_63 : f32 to vector<16x128xf32>
    %227 = arith.addf %226, %225 : vector<16x128xf32>
    %228 = arith.divf %226, %227 : vector<16x128xf32>
    %229 = vector.extract_strided_slice %228 {offsets = [0, 0], sizes = [16, 32], strides = [1, 1]} : vector<16x128xf32> to vector<16x32xf32>
    %230 = vector.extract_strided_slice %228 {offsets = [0, 32], sizes = [16, 32], strides = [1, 1]} : vector<16x128xf32> to vector<16x32xf32>
    %231 = vector.extract_strided_slice %228 {offsets = [0, 64], sizes = [16, 32], strides = [1, 1]} : vector<16x128xf32> to vector<16x32xf32>
    %cst_64 = arith.constant 2.000000e+00 : f32
    %232 = vector.broadcast %cst_64 : f32 to vector<16x32xf32>
    %233 = arith.mulf %232, %231 : vector<16x32xf32>
    %cst_65 = arith.constant 1.000000e+00 : f32
    %234 = vector.broadcast %cst_65 : f32 to vector<16x32xf32>
    %235 = arith.subf %233, %234 : vector<16x32xf32>
    %236 = vector.extract_strided_slice %228 {offsets = [0, 96], sizes = [16, 32], strides = [1, 1]} : vector<16x128xf32> to vector<16x32xf32>
    %237 = arith.mulf %230, %196 : vector<16x32xf32>
    %238 = arith.mulf %229, %235 : vector<16x32xf32>
    %239 = arith.addf %237, %238 : vector<16x32xf32>
    %240 = math.tanh %239 : vector<16x32xf32>
    %241 = arith.mulf %236, %240 : vector<16x32xf32>
    %242 = vector.extract_strided_slice %22 {offsets = [5, 0, 0], sizes = [1, 16, 128], strides = [1, 1, 1]} : vector<8x16x128xf32> to vector<1x16x128xf32>
    %243 = vector.shape_cast %242 : vector<1x16x128xf32> to vector<16x128xf32>
    %cst_66 = arith.constant dense<0.000000e+00> : vector<16x128xf32>
    %244 = tpu.matmul %220, %1, %cst_66 {dimension_numbers = #tpu.dot_dimension_numbers<[1], [0], [0], [1], [0, 0, 1, 1], [], []>} : vector<16x32xf32>, vector<32x128xf32>, vector<16x128xf32> -> vector<16x128xf32>
    %245 = arith.addf %243, %244 : vector<16x128xf32>
    %246 = arith.negf %245 : vector<16x128xf32>
    %247 = math.exp %246 : vector<16x128xf32>
    %cst_67 = arith.constant 1.000000e+00 : f32
    %248 = vector.broadcast %cst_67 : f32 to vector<16x128xf32>
    %249 = arith.addf %248, %247 : vector<16x128xf32>
    %250 = arith.divf %248, %249 : vector<16x128xf32>
    %251 = vector.extract_strided_slice %250 {offsets = [0, 0], sizes = [16, 32], strides = [1, 1]} : vector<16x128xf32> to vector<16x32xf32>
    %252 = vector.extract_strided_slice %250 {offsets = [0, 32], sizes = [16, 32], strides = [1, 1]} : vector<16x128xf32> to vector<16x32xf32>
    %253 = vector.extract_strided_slice %250 {offsets = [0, 64], sizes = [16, 32], strides = [1, 1]} : vector<16x128xf32> to vector<16x32xf32>
    %cst_68 = arith.constant 2.000000e+00 : f32
    %254 = vector.broadcast %cst_68 : f32 to vector<16x32xf32>
    %255 = arith.mulf %254, %253 : vector<16x32xf32>
    %cst_69 = arith.constant 1.000000e+00 : f32
    %256 = vector.broadcast %cst_69 : f32 to vector<16x32xf32>
    %257 = arith.subf %255, %256 : vector<16x32xf32>
    %258 = vector.extract_strided_slice %250 {offsets = [0, 96], sizes = [16, 32], strides = [1, 1]} : vector<16x128xf32> to vector<16x32xf32>
    %259 = arith.mulf %252, %218 : vector<16x32xf32>
    %260 = arith.mulf %251, %257 : vector<16x32xf32>
    %261 = arith.addf %259, %260 : vector<16x32xf32>
    %262 = math.tanh %261 : vector<16x32xf32>
    %263 = arith.mulf %258, %262 : vector<16x32xf32>
    %264 = tpu.concatenate %263, %241 in 1 : vector<16x32xf32>, vector<16x32xf32> -> vector<16x64xf32>
    %cst_70 = arith.constant dense<0.000000e+00> : vector<16x128xf32>
    %265 = tpu.matmul %264, %2, %cst_70 {dimension_numbers = #tpu.dot_dimension_numbers<[1], [0], [0], [1], [0, 0, 1, 1], [], []>} : vector<16x64xf32>, vector<64x128xf32>, vector<16x128xf32> -> vector<16x128xf32>
    %266 = arith.addf %265, %8 : vector<16x128xf32>
    %267 = arith.negf %266 : vector<16x128xf32>
    %268 = math.exp %267 : vector<16x128xf32>
    %cst_71 = arith.constant 1.000000e+00 : f32
    %269 = vector.broadcast %cst_71 : f32 to vector<16x128xf32>
    %270 = arith.addf %269, %268 : vector<16x128xf32>
    %271 = arith.divf %269, %270 : vector<16x128xf32>
    %272 = vector.extract_strided_slice %271 {offsets = [0, 0], sizes = [16, 32], strides = [1, 1]} : vector<16x128xf32> to vector<16x32xf32>
    %273 = vector.extract_strided_slice %271 {offsets = [0, 32], sizes = [16, 32], strides = [1, 1]} : vector<16x128xf32> to vector<16x32xf32>
    %274 = vector.extract_strided_slice %271 {offsets = [0, 64], sizes = [16, 32], strides = [1, 1]} : vector<16x128xf32> to vector<16x32xf32>
    %cst_72 = arith.constant 2.000000e+00 : f32
    %275 = vector.broadcast %cst_72 : f32 to vector<16x32xf32>
    %276 = arith.mulf %275, %274 : vector<16x32xf32>
    %cst_73 = arith.constant 1.000000e+00 : f32
    %277 = vector.broadcast %cst_73 : f32 to vector<16x32xf32>
    %278 = arith.subf %276, %277 : vector<16x32xf32>
    %279 = vector.extract_strided_slice %271 {offsets = [0, 96], sizes = [16, 32], strides = [1, 1]} : vector<16x128xf32> to vector<16x32xf32>
    %280 = arith.mulf %273, %239 : vector<16x32xf32>
    %281 = arith.mulf %272, %278 : vector<16x32xf32>
    %282 = arith.addf %280, %281 : vector<16x32xf32>
    %283 = math.tanh %282 : vector<16x32xf32>
    %284 = arith.mulf %279, %283 : vector<16x32xf32>
    %285 = vector.extract_strided_slice %22 {offsets = [6, 0, 0], sizes = [1, 16, 128], strides = [1, 1, 1]} : vector<8x16x128xf32> to vector<1x16x128xf32>
    %286 = vector.shape_cast %285 : vector<1x16x128xf32> to vector<16x128xf32>
    %cst_74 = arith.constant dense<0.000000e+00> : vector<16x128xf32>
    %287 = tpu.matmul %263, %1, %cst_74 {dimension_numbers = #tpu.dot_dimension_numbers<[1], [0], [0], [1], [0, 0, 1, 1], [], []>} : vector<16x32xf32>, vector<32x128xf32>, vector<16x128xf32> -> vector<16x128xf32>
    %288 = arith.addf %286, %287 : vector<16x128xf32>
    %289 = arith.negf %288 : vector<16x128xf32>
    %290 = math.exp %289 : vector<16x128xf32>
    %cst_75 = arith.constant 1.000000e+00 : f32
    %291 = vector.broadcast %cst_75 : f32 to vector<16x128xf32>
    %292 = arith.addf %291, %290 : vector<16x128xf32>
    %293 = arith.divf %291, %292 : vector<16x128xf32>
    %294 = vector.extract_strided_slice %293 {offsets = [0, 0], sizes = [16, 32], strides = [1, 1]} : vector<16x128xf32> to vector<16x32xf32>
    %295 = vector.extract_strided_slice %293 {offsets = [0, 32], sizes = [16, 32], strides = [1, 1]} : vector<16x128xf32> to vector<16x32xf32>
    %296 = vector.extract_strided_slice %293 {offsets = [0, 64], sizes = [16, 32], strides = [1, 1]} : vector<16x128xf32> to vector<16x32xf32>
    %cst_76 = arith.constant 2.000000e+00 : f32
    %297 = vector.broadcast %cst_76 : f32 to vector<16x32xf32>
    %298 = arith.mulf %297, %296 : vector<16x32xf32>
    %cst_77 = arith.constant 1.000000e+00 : f32
    %299 = vector.broadcast %cst_77 : f32 to vector<16x32xf32>
    %300 = arith.subf %298, %299 : vector<16x32xf32>
    %301 = vector.extract_strided_slice %293 {offsets = [0, 96], sizes = [16, 32], strides = [1, 1]} : vector<16x128xf32> to vector<16x32xf32>
    %302 = arith.mulf %295, %261 : vector<16x32xf32>
    %303 = arith.mulf %294, %300 : vector<16x32xf32>
    %304 = arith.addf %302, %303 : vector<16x32xf32>
    %305 = math.tanh %304 : vector<16x32xf32>
    %306 = arith.mulf %301, %305 : vector<16x32xf32>
    %307 = tpu.concatenate %306, %284 in 1 : vector<16x32xf32>, vector<16x32xf32> -> vector<16x64xf32>
    %cst_78 = arith.constant dense<0.000000e+00> : vector<16x128xf32>
    %308 = tpu.matmul %307, %2, %cst_78 {dimension_numbers = #tpu.dot_dimension_numbers<[1], [0], [0], [1], [0, 0, 1, 1], [], []>} : vector<16x64xf32>, vector<64x128xf32>, vector<16x128xf32> -> vector<16x128xf32>
    %309 = arith.addf %308, %8 : vector<16x128xf32>
    %310 = arith.negf %309 : vector<16x128xf32>
    %311 = math.exp %310 : vector<16x128xf32>
    %cst_79 = arith.constant 1.000000e+00 : f32
    %312 = vector.broadcast %cst_79 : f32 to vector<16x128xf32>
    %313 = arith.addf %312, %311 : vector<16x128xf32>
    %314 = arith.divf %312, %313 : vector<16x128xf32>
    %315 = vector.extract_strided_slice %314 {offsets = [0, 0], sizes = [16, 32], strides = [1, 1]} : vector<16x128xf32> to vector<16x32xf32>
    %316 = vector.extract_strided_slice %314 {offsets = [0, 32], sizes = [16, 32], strides = [1, 1]} : vector<16x128xf32> to vector<16x32xf32>
    %317 = vector.extract_strided_slice %314 {offsets = [0, 64], sizes = [16, 32], strides = [1, 1]} : vector<16x128xf32> to vector<16x32xf32>
    %cst_80 = arith.constant 2.000000e+00 : f32
    %318 = vector.broadcast %cst_80 : f32 to vector<16x32xf32>
    %319 = arith.mulf %318, %317 : vector<16x32xf32>
    %cst_81 = arith.constant 1.000000e+00 : f32
    %320 = vector.broadcast %cst_81 : f32 to vector<16x32xf32>
    %321 = arith.subf %319, %320 : vector<16x32xf32>
    %322 = vector.extract_strided_slice %314 {offsets = [0, 96], sizes = [16, 32], strides = [1, 1]} : vector<16x128xf32> to vector<16x32xf32>
    %323 = arith.mulf %316, %282 : vector<16x32xf32>
    %324 = arith.mulf %315, %321 : vector<16x32xf32>
    %325 = arith.addf %323, %324 : vector<16x32xf32>
    %326 = math.tanh %325 : vector<16x32xf32>
    %327 = arith.mulf %322, %326 : vector<16x32xf32>
    %328 = vector.extract_strided_slice %22 {offsets = [7, 0, 0], sizes = [1, 16, 128], strides = [1, 1, 1]} : vector<8x16x128xf32> to vector<1x16x128xf32>
    %329 = vector.shape_cast %328 : vector<1x16x128xf32> to vector<16x128xf32>
    %cst_82 = arith.constant dense<0.000000e+00> : vector<16x128xf32>
    %330 = tpu.matmul %306, %1, %cst_82 {dimension_numbers = #tpu.dot_dimension_numbers<[1], [0], [0], [1], [0, 0, 1, 1], [], []>} : vector<16x32xf32>, vector<32x128xf32>, vector<16x128xf32> -> vector<16x128xf32>
    %331 = arith.addf %329, %330 : vector<16x128xf32>
    %332 = arith.negf %331 : vector<16x128xf32>
    %333 = math.exp %332 : vector<16x128xf32>
    %cst_83 = arith.constant 1.000000e+00 : f32
    %334 = vector.broadcast %cst_83 : f32 to vector<16x128xf32>
    %335 = arith.addf %334, %333 : vector<16x128xf32>
    %336 = arith.divf %334, %335 : vector<16x128xf32>
    %337 = vector.extract_strided_slice %336 {offsets = [0, 0], sizes = [16, 32], strides = [1, 1]} : vector<16x128xf32> to vector<16x32xf32>
    %338 = vector.extract_strided_slice %336 {offsets = [0, 32], sizes = [16, 32], strides = [1, 1]} : vector<16x128xf32> to vector<16x32xf32>
    %339 = vector.extract_strided_slice %336 {offsets = [0, 64], sizes = [16, 32], strides = [1, 1]} : vector<16x128xf32> to vector<16x32xf32>
    %cst_84 = arith.constant 2.000000e+00 : f32
    %340 = vector.broadcast %cst_84 : f32 to vector<16x32xf32>
    %341 = arith.mulf %340, %339 : vector<16x32xf32>
    %cst_85 = arith.constant 1.000000e+00 : f32
    %342 = vector.broadcast %cst_85 : f32 to vector<16x32xf32>
    %343 = arith.subf %341, %342 : vector<16x32xf32>
    %344 = vector.extract_strided_slice %336 {offsets = [0, 96], sizes = [16, 32], strides = [1, 1]} : vector<16x128xf32> to vector<16x32xf32>
    %345 = arith.mulf %338, %304 : vector<16x32xf32>
    %346 = arith.mulf %337, %343 : vector<16x32xf32>
    %347 = arith.addf %345, %346 : vector<16x32xf32>
    %348 = math.tanh %347 : vector<16x32xf32>
    %349 = arith.mulf %344, %348 : vector<16x32xf32>
    %350 = tpu.concatenate %349, %327 in 1 : vector<16x32xf32>, vector<16x32xf32> -> vector<16x64xf32>
    %cst_86 = arith.constant dense<0.000000e+00> : vector<16x128xf32>
    %351 = tpu.matmul %350, %2, %cst_86 {dimension_numbers = #tpu.dot_dimension_numbers<[1], [0], [0], [1], [0, 0, 1, 1], [], []>} : vector<16x64xf32>, vector<64x128xf32>, vector<16x128xf32> -> vector<16x128xf32>
    %352 = arith.addf %351, %8 : vector<16x128xf32>
    %353 = arith.negf %352 : vector<16x128xf32>
    %354 = math.exp %353 : vector<16x128xf32>
    %cst_87 = arith.constant 1.000000e+00 : f32
    %355 = vector.broadcast %cst_87 : f32 to vector<16x128xf32>
    %356 = arith.addf %355, %354 : vector<16x128xf32>
    %357 = arith.divf %355, %356 : vector<16x128xf32>
    %358 = vector.extract_strided_slice %357 {offsets = [0, 0], sizes = [16, 32], strides = [1, 1]} : vector<16x128xf32> to vector<16x32xf32>
    %359 = vector.extract_strided_slice %357 {offsets = [0, 32], sizes = [16, 32], strides = [1, 1]} : vector<16x128xf32> to vector<16x32xf32>
    %360 = vector.extract_strided_slice %357 {offsets = [0, 64], sizes = [16, 32], strides = [1, 1]} : vector<16x128xf32> to vector<16x32xf32>
    %cst_88 = arith.constant 2.000000e+00 : f32
    %361 = vector.broadcast %cst_88 : f32 to vector<16x32xf32>
    %362 = arith.mulf %361, %360 : vector<16x32xf32>
    %cst_89 = arith.constant 1.000000e+00 : f32
    %363 = vector.broadcast %cst_89 : f32 to vector<16x32xf32>
    %364 = arith.subf %362, %363 : vector<16x32xf32>
    %365 = vector.extract_strided_slice %357 {offsets = [0, 96], sizes = [16, 32], strides = [1, 1]} : vector<16x128xf32> to vector<16x32xf32>
    %366 = arith.mulf %359, %325 : vector<16x32xf32>
    %367 = arith.mulf %358, %364 : vector<16x32xf32>
    %368 = arith.addf %366, %367 : vector<16x32xf32>
    %369 = math.tanh %368 : vector<16x32xf32>
    %370 = arith.mulf %365, %369 : vector<16x32xf32>
    %c0_90 = arith.constant 0 : index
    %c0_91 = arith.constant 0 : index
    %371 = vector.load %arg7[%c0_90, %c0_91] : memref<16x128xf32, #tpu.memory_space<vmem>>, vector<16x128xf32>
    %cst_92 = arith.constant dense<0.000000e+00> : vector<128x128xf32>
    %372 = tpu.matmul %15, %371, %cst_92 {dimension_numbers = #tpu.dot_dimension_numbers<[1], [0], [0], [1], [0, 0, 1, 1], [], []>} : vector<128x16xf32>, vector<16x128xf32>, vector<128x128xf32> -> vector<128x128xf32>
    %373 = vector.shape_cast %372 : vector<128x128xf32> to vector<8x16x128xf32>
    %c0_93 = arith.constant 0 : index
    %c0_94 = arith.constant 0 : index
    %374 = vector.load %arg9[%c0_93, %c0_94] : memref<1x128xf32, #tpu.memory_space<vmem>>, vector<1x128xf32>
    %375 = vector.shape_cast %374 : vector<1x128xf32> to vector<1x1x128xf32>
    %376 = vector.broadcast %375 : vector<1x1x128xf32> to vector<8x16x128xf32>
    %377 = arith.addf %373, %376 : vector<8x16x128xf32>
    %cst_95 = arith.constant 0.000000e+00 : f32
    %378 = vector.broadcast %cst_95 : f32 to vector<16x32xf32>
    %cst_96 = arith.constant 0.000000e+00 : f32
    %379 = vector.broadcast %cst_96 : f32 to vector<16x32xf32>
    %cst_97 = arith.constant 0.000000e+00 : f32
    %380 = vector.broadcast %cst_97 : f32 to vector<16x16xf32>
    %cst_98 = arith.constant 0.000000e+00 : f32
    %381 = vector.broadcast %cst_98 : f32 to vector<16x16xf32>
    %382 = vector.extract_strided_slice %377 {offsets = [7, 0, 0], sizes = [1, 16, 128], strides = [1, 1, 1]} : vector<8x16x128xf32> to vector<1x16x128xf32>
    %383 = vector.shape_cast %382 : vector<1x16x128xf32> to vector<16x128xf32>
    %cst_99 = arith.constant dense<0.000000e+00> : vector<16x128xf32>
    %384 = tpu.matmul %370, %3, %cst_99 {dimension_numbers = #tpu.dot_dimension_numbers<[1], [0], [0], [1], [0, 0, 1, 1], [], []>} : vector<16x32xf32>, vector<32x128xf32>, vector<16x128xf32> -> vector<16x128xf32>
    %385 = arith.addf %383, %384 : vector<16x128xf32>
    %386 = arith.negf %385 : vector<16x128xf32>
    %387 = math.exp %386 : vector<16x128xf32>
    %cst_100 = arith.constant 1.000000e+00 : f32
    %388 = vector.broadcast %cst_100 : f32 to vector<16x128xf32>
    %389 = arith.addf %388, %387 : vector<16x128xf32>
    %390 = arith.divf %388, %389 : vector<16x128xf32>
    %391 = vector.extract_strided_slice %390 {offsets = [0, 0], sizes = [16, 32], strides = [1, 1]} : vector<16x128xf32> to vector<16x32xf32>
    %392 = vector.extract_strided_slice %390 {offsets = [0, 32], sizes = [16, 32], strides = [1, 1]} : vector<16x128xf32> to vector<16x32xf32>
    %393 = vector.extract_strided_slice %390 {offsets = [0, 64], sizes = [16, 32], strides = [1, 1]} : vector<16x128xf32> to vector<16x32xf32>
    %cst_101 = arith.constant 2.000000e+00 : f32
    %394 = vector.broadcast %cst_101 : f32 to vector<16x32xf32>
    %395 = arith.mulf %394, %393 : vector<16x32xf32>
    %cst_102 = arith.constant 1.000000e+00 : f32
    %396 = vector.broadcast %cst_102 : f32 to vector<16x32xf32>
    %397 = arith.subf %395, %396 : vector<16x32xf32>
    %398 = vector.extract_strided_slice %390 {offsets = [0, 96], sizes = [16, 32], strides = [1, 1]} : vector<16x128xf32> to vector<16x32xf32>
    %399 = arith.mulf %392, %368 : vector<16x32xf32>
    %400 = arith.mulf %391, %397 : vector<16x32xf32>
    %401 = arith.addf %399, %400 : vector<16x32xf32>
    %402 = math.tanh %401 : vector<16x32xf32>
    %403 = arith.mulf %398, %402 : vector<16x32xf32>
    %404 = tpu.concatenate %403, %378 in 1 : vector<16x32xf32>, vector<16x32xf32> -> vector<16x64xf32>
    %cst_103 = arith.constant dense<0.000000e+00> : vector<16x128xf32>
    %405 = tpu.matmul %404, %4, %cst_103 {dimension_numbers = #tpu.dot_dimension_numbers<[1], [0], [0], [1], [0, 0, 1, 1], [], []>} : vector<16x64xf32>, vector<64x128xf32>, vector<16x128xf32> -> vector<16x128xf32>
    %406 = arith.addf %405, %11 : vector<16x128xf32>
    %407 = arith.negf %406 : vector<16x128xf32>
    %408 = math.exp %407 : vector<16x128xf32>
    %cst_104 = arith.constant 1.000000e+00 : f32
    %409 = vector.broadcast %cst_104 : f32 to vector<16x128xf32>
    %410 = arith.addf %409, %408 : vector<16x128xf32>
    %411 = arith.divf %409, %410 : vector<16x128xf32>
    %412 = vector.extract_strided_slice %411 {offsets = [0, 0], sizes = [16, 32], strides = [1, 1]} : vector<16x128xf32> to vector<16x32xf32>
    %413 = vector.extract_strided_slice %411 {offsets = [0, 32], sizes = [16, 32], strides = [1, 1]} : vector<16x128xf32> to vector<16x32xf32>
    %414 = vector.extract_strided_slice %411 {offsets = [0, 64], sizes = [16, 32], strides = [1, 1]} : vector<16x128xf32> to vector<16x32xf32>
    %cst_105 = arith.constant 2.000000e+00 : f32
    %415 = vector.broadcast %cst_105 : f32 to vector<16x32xf32>
    %416 = arith.mulf %415, %414 : vector<16x32xf32>
    %cst_106 = arith.constant 1.000000e+00 : f32
    %417 = vector.broadcast %cst_106 : f32 to vector<16x32xf32>
    %418 = arith.subf %416, %417 : vector<16x32xf32>
    %419 = vector.extract_strided_slice %411 {offsets = [0, 96], sizes = [16, 32], strides = [1, 1]} : vector<16x128xf32> to vector<16x32xf32>
    %420 = arith.mulf %413, %379 : vector<16x32xf32>
    %421 = arith.mulf %412, %418 : vector<16x32xf32>
    %422 = arith.addf %420, %421 : vector<16x32xf32>
    %423 = math.tanh %422 : vector<16x32xf32>
    %424 = arith.mulf %419, %423 : vector<16x32xf32>
    %425 = tpu.concatenate %424, %380 in 1 : vector<16x32xf32>, vector<16x16xf32> -> vector<16x48xf32>
    %cst_107 = arith.constant dense<0.000000e+00> : vector<16x64xf32>
    %426 = tpu.matmul %425, %5, %cst_107 {dimension_numbers = #tpu.dot_dimension_numbers<[1], [0], [0], [1], [0, 0, 1, 1], [], []>} : vector<16x48xf32>, vector<48x64xf32>, vector<16x64xf32> -> vector<16x64xf32>
    %427 = arith.addf %426, %14 : vector<16x64xf32>
    %428 = arith.negf %427 : vector<16x64xf32>
    %429 = math.exp %428 : vector<16x64xf32>
    %cst_108 = arith.constant 1.000000e+00 : f32
    %430 = vector.broadcast %cst_108 : f32 to vector<16x64xf32>
    %431 = arith.addf %430, %429 : vector<16x64xf32>
    %432 = arith.divf %430, %431 : vector<16x64xf32>
    %433 = vector.extract_strided_slice %432 {offsets = [0, 0], sizes = [16, 16], strides = [1, 1]} : vector<16x64xf32> to vector<16x16xf32>
    %434 = vector.extract_strided_slice %432 {offsets = [0, 16], sizes = [16, 16], strides = [1, 1]} : vector<16x64xf32> to vector<16x16xf32>
    %435 = vector.extract_strided_slice %432 {offsets = [0, 32], sizes = [16, 16], strides = [1, 1]} : vector<16x64xf32> to vector<16x16xf32>
    %cst_109 = arith.constant 2.000000e+00 : f32
    %436 = vector.broadcast %cst_109 : f32 to vector<16x16xf32>
    %437 = arith.mulf %436, %435 : vector<16x16xf32>
    %cst_110 = arith.constant 1.000000e+00 : f32
    %438 = vector.broadcast %cst_110 : f32 to vector<16x16xf32>
    %439 = arith.subf %437, %438 : vector<16x16xf32>
    %440 = vector.extract_strided_slice %432 {offsets = [0, 48], sizes = [16, 16], strides = [1, 1]} : vector<16x64xf32> to vector<16x16xf32>
    %441 = arith.mulf %434, %381 : vector<16x16xf32>
    %442 = arith.mulf %433, %439 : vector<16x16xf32>
    %443 = arith.addf %441, %442 : vector<16x16xf32>
    %444 = math.tanh %443 : vector<16x16xf32>
    %445 = arith.mulf %440, %444 : vector<16x16xf32>
    %446 = vector.extract_strided_slice %377 {offsets = [6, 0, 0], sizes = [1, 16, 128], strides = [1, 1, 1]} : vector<8x16x128xf32> to vector<1x16x128xf32>
    %447 = vector.shape_cast %446 : vector<1x16x128xf32> to vector<16x128xf32>
    %cst_111 = arith.constant dense<0.000000e+00> : vector<16x128xf32>
    %448 = tpu.matmul %403, %3, %cst_111 {dimension_numbers = #tpu.dot_dimension_numbers<[1], [0], [0], [1], [0, 0, 1, 1], [], []>} : vector<16x32xf32>, vector<32x128xf32>, vector<16x128xf32> -> vector<16x128xf32>
    %449 = arith.addf %447, %448 : vector<16x128xf32>
    %450 = arith.negf %449 : vector<16x128xf32>
    %451 = math.exp %450 : vector<16x128xf32>
    %cst_112 = arith.constant 1.000000e+00 : f32
    %452 = vector.broadcast %cst_112 : f32 to vector<16x128xf32>
    %453 = arith.addf %452, %451 : vector<16x128xf32>
    %454 = arith.divf %452, %453 : vector<16x128xf32>
    %455 = vector.extract_strided_slice %454 {offsets = [0, 0], sizes = [16, 32], strides = [1, 1]} : vector<16x128xf32> to vector<16x32xf32>
    %456 = vector.extract_strided_slice %454 {offsets = [0, 32], sizes = [16, 32], strides = [1, 1]} : vector<16x128xf32> to vector<16x32xf32>
    %457 = vector.extract_strided_slice %454 {offsets = [0, 64], sizes = [16, 32], strides = [1, 1]} : vector<16x128xf32> to vector<16x32xf32>
    %cst_113 = arith.constant 2.000000e+00 : f32
    %458 = vector.broadcast %cst_113 : f32 to vector<16x32xf32>
    %459 = arith.mulf %458, %457 : vector<16x32xf32>
    %cst_114 = arith.constant 1.000000e+00 : f32
    %460 = vector.broadcast %cst_114 : f32 to vector<16x32xf32>
    %461 = arith.subf %459, %460 : vector<16x32xf32>
    %462 = vector.extract_strided_slice %454 {offsets = [0, 96], sizes = [16, 32], strides = [1, 1]} : vector<16x128xf32> to vector<16x32xf32>
    %463 = arith.mulf %456, %401 : vector<16x32xf32>
    %464 = arith.mulf %455, %461 : vector<16x32xf32>
    %465 = arith.addf %463, %464 : vector<16x32xf32>
    %466 = math.tanh %465 : vector<16x32xf32>
    %467 = arith.mulf %462, %466 : vector<16x32xf32>
    %468 = tpu.concatenate %467, %424 in 1 : vector<16x32xf32>, vector<16x32xf32> -> vector<16x64xf32>
    %cst_115 = arith.constant dense<0.000000e+00> : vector<16x128xf32>
    %469 = tpu.matmul %468, %4, %cst_115 {dimension_numbers = #tpu.dot_dimension_numbers<[1], [0], [0], [1], [0, 0, 1, 1], [], []>} : vector<16x64xf32>, vector<64x128xf32>, vector<16x128xf32> -> vector<16x128xf32>
    %470 = arith.addf %469, %11 : vector<16x128xf32>
    %471 = arith.negf %470 : vector<16x128xf32>
    %472 = math.exp %471 : vector<16x128xf32>
    %cst_116 = arith.constant 1.000000e+00 : f32
    %473 = vector.broadcast %cst_116 : f32 to vector<16x128xf32>
    %474 = arith.addf %473, %472 : vector<16x128xf32>
    %475 = arith.divf %473, %474 : vector<16x128xf32>
    %476 = vector.extract_strided_slice %475 {offsets = [0, 0], sizes = [16, 32], strides = [1, 1]} : vector<16x128xf32> to vector<16x32xf32>
    %477 = vector.extract_strided_slice %475 {offsets = [0, 32], sizes = [16, 32], strides = [1, 1]} : vector<16x128xf32> to vector<16x32xf32>
    %478 = vector.extract_strided_slice %475 {offsets = [0, 64], sizes = [16, 32], strides = [1, 1]} : vector<16x128xf32> to vector<16x32xf32>
    %cst_117 = arith.constant 2.000000e+00 : f32
    %479 = vector.broadcast %cst_117 : f32 to vector<16x32xf32>
    %480 = arith.mulf %479, %478 : vector<16x32xf32>
    %cst_118 = arith.constant 1.000000e+00 : f32
    %481 = vector.broadcast %cst_118 : f32 to vector<16x32xf32>
    %482 = arith.subf %480, %481 : vector<16x32xf32>
    %483 = vector.extract_strided_slice %475 {offsets = [0, 96], sizes = [16, 32], strides = [1, 1]} : vector<16x128xf32> to vector<16x32xf32>
    %484 = arith.mulf %477, %422 : vector<16x32xf32>
    %485 = arith.mulf %476, %482 : vector<16x32xf32>
    %486 = arith.addf %484, %485 : vector<16x32xf32>
    %487 = math.tanh %486 : vector<16x32xf32>
    %488 = arith.mulf %483, %487 : vector<16x32xf32>
    %489 = tpu.concatenate %488, %445 in 1 : vector<16x32xf32>, vector<16x16xf32> -> vector<16x48xf32>
    %cst_119 = arith.constant dense<0.000000e+00> : vector<16x64xf32>
    %490 = tpu.matmul %489, %5, %cst_119 {dimension_numbers = #tpu.dot_dimension_numbers<[1], [0], [0], [1], [0, 0, 1, 1], [], []>} : vector<16x48xf32>, vector<48x64xf32>, vector<16x64xf32> -> vector<16x64xf32>
    %491 = arith.addf %490, %14 : vector<16x64xf32>
    %492 = arith.negf %491 : vector<16x64xf32>
    %493 = math.exp %492 : vector<16x64xf32>
    %cst_120 = arith.constant 1.000000e+00 : f32
    %494 = vector.broadcast %cst_120 : f32 to vector<16x64xf32>
    %495 = arith.addf %494, %493 : vector<16x64xf32>
    %496 = arith.divf %494, %495 : vector<16x64xf32>
    %497 = vector.extract_strided_slice %496 {offsets = [0, 0], sizes = [16, 16], strides = [1, 1]} : vector<16x64xf32> to vector<16x16xf32>
    %498 = vector.extract_strided_slice %496 {offsets = [0, 16], sizes = [16, 16], strides = [1, 1]} : vector<16x64xf32> to vector<16x16xf32>
    %499 = vector.extract_strided_slice %496 {offsets = [0, 32], sizes = [16, 16], strides = [1, 1]} : vector<16x64xf32> to vector<16x16xf32>
    %cst_121 = arith.constant 2.000000e+00 : f32
    %500 = vector.broadcast %cst_121 : f32 to vector<16x16xf32>
    %501 = arith.mulf %500, %499 : vector<16x16xf32>
    %cst_122 = arith.constant 1.000000e+00 : f32
    %502 = vector.broadcast %cst_122 : f32 to vector<16x16xf32>
    %503 = arith.subf %501, %502 : vector<16x16xf32>
    %504 = vector.extract_strided_slice %496 {offsets = [0, 48], sizes = [16, 16], strides = [1, 1]} : vector<16x64xf32> to vector<16x16xf32>
    %505 = arith.mulf %498, %443 : vector<16x16xf32>
    %506 = arith.mulf %497, %503 : vector<16x16xf32>
    %507 = arith.addf %505, %506 : vector<16x16xf32>
    %508 = math.tanh %507 : vector<16x16xf32>
    %509 = arith.mulf %504, %508 : vector<16x16xf32>
    %510 = vector.extract_strided_slice %377 {offsets = [5, 0, 0], sizes = [1, 16, 128], strides = [1, 1, 1]} : vector<8x16x128xf32> to vector<1x16x128xf32>
    %511 = vector.shape_cast %510 : vector<1x16x128xf32> to vector<16x128xf32>
    %cst_123 = arith.constant dense<0.000000e+00> : vector<16x128xf32>
    %512 = tpu.matmul %467, %3, %cst_123 {dimension_numbers = #tpu.dot_dimension_numbers<[1], [0], [0], [1], [0, 0, 1, 1], [], []>} : vector<16x32xf32>, vector<32x128xf32>, vector<16x128xf32> -> vector<16x128xf32>
    %513 = arith.addf %511, %512 : vector<16x128xf32>
    %514 = arith.negf %513 : vector<16x128xf32>
    %515 = math.exp %514 : vector<16x128xf32>
    %cst_124 = arith.constant 1.000000e+00 : f32
    %516 = vector.broadcast %cst_124 : f32 to vector<16x128xf32>
    %517 = arith.addf %516, %515 : vector<16x128xf32>
    %518 = arith.divf %516, %517 : vector<16x128xf32>
    %519 = vector.extract_strided_slice %518 {offsets = [0, 0], sizes = [16, 32], strides = [1, 1]} : vector<16x128xf32> to vector<16x32xf32>
    %520 = vector.extract_strided_slice %518 {offsets = [0, 32], sizes = [16, 32], strides = [1, 1]} : vector<16x128xf32> to vector<16x32xf32>
    %521 = vector.extract_strided_slice %518 {offsets = [0, 64], sizes = [16, 32], strides = [1, 1]} : vector<16x128xf32> to vector<16x32xf32>
    %cst_125 = arith.constant 2.000000e+00 : f32
    %522 = vector.broadcast %cst_125 : f32 to vector<16x32xf32>
    %523 = arith.mulf %522, %521 : vector<16x32xf32>
    %cst_126 = arith.constant 1.000000e+00 : f32
    %524 = vector.broadcast %cst_126 : f32 to vector<16x32xf32>
    %525 = arith.subf %523, %524 : vector<16x32xf32>
    %526 = vector.extract_strided_slice %518 {offsets = [0, 96], sizes = [16, 32], strides = [1, 1]} : vector<16x128xf32> to vector<16x32xf32>
    %527 = arith.mulf %520, %465 : vector<16x32xf32>
    %528 = arith.mulf %519, %525 : vector<16x32xf32>
    %529 = arith.addf %527, %528 : vector<16x32xf32>
    %530 = math.tanh %529 : vector<16x32xf32>
    %531 = arith.mulf %526, %530 : vector<16x32xf32>
    %532 = tpu.concatenate %531, %488 in 1 : vector<16x32xf32>, vector<16x32xf32> -> vector<16x64xf32>
    %cst_127 = arith.constant dense<0.000000e+00> : vector<16x128xf32>
    %533 = tpu.matmul %532, %4, %cst_127 {dimension_numbers = #tpu.dot_dimension_numbers<[1], [0], [0], [1], [0, 0, 1, 1], [], []>} : vector<16x64xf32>, vector<64x128xf32>, vector<16x128xf32> -> vector<16x128xf32>
    %534 = arith.addf %533, %11 : vector<16x128xf32>
    %535 = arith.negf %534 : vector<16x128xf32>
    %536 = math.exp %535 : vector<16x128xf32>
    %cst_128 = arith.constant 1.000000e+00 : f32
    %537 = vector.broadcast %cst_128 : f32 to vector<16x128xf32>
    %538 = arith.addf %537, %536 : vector<16x128xf32>
    %539 = arith.divf %537, %538 : vector<16x128xf32>
    %540 = vector.extract_strided_slice %539 {offsets = [0, 0], sizes = [16, 32], strides = [1, 1]} : vector<16x128xf32> to vector<16x32xf32>
    %541 = vector.extract_strided_slice %539 {offsets = [0, 32], sizes = [16, 32], strides = [1, 1]} : vector<16x128xf32> to vector<16x32xf32>
    %542 = vector.extract_strided_slice %539 {offsets = [0, 64], sizes = [16, 32], strides = [1, 1]} : vector<16x128xf32> to vector<16x32xf32>
    %cst_129 = arith.constant 2.000000e+00 : f32
    %543 = vector.broadcast %cst_129 : f32 to vector<16x32xf32>
    %544 = arith.mulf %543, %542 : vector<16x32xf32>
    %cst_130 = arith.constant 1.000000e+00 : f32
    %545 = vector.broadcast %cst_130 : f32 to vector<16x32xf32>
    %546 = arith.subf %544, %545 : vector<16x32xf32>
    %547 = vector.extract_strided_slice %539 {offsets = [0, 96], sizes = [16, 32], strides = [1, 1]} : vector<16x128xf32> to vector<16x32xf32>
    %548 = arith.mulf %541, %486 : vector<16x32xf32>
    %549 = arith.mulf %540, %546 : vector<16x32xf32>
    %550 = arith.addf %548, %549 : vector<16x32xf32>
    %551 = math.tanh %550 : vector<16x32xf32>
    %552 = arith.mulf %547, %551 : vector<16x32xf32>
    %553 = tpu.concatenate %552, %509 in 1 : vector<16x32xf32>, vector<16x16xf32> -> vector<16x48xf32>
    %cst_131 = arith.constant dense<0.000000e+00> : vector<16x64xf32>
    %554 = tpu.matmul %553, %5, %cst_131 {dimension_numbers = #tpu.dot_dimension_numbers<[1], [0], [0], [1], [0, 0, 1, 1], [], []>} : vector<16x48xf32>, vector<48x64xf32>, vector<16x64xf32> -> vector<16x64xf32>
    %555 = arith.addf %554, %14 : vector<16x64xf32>
    %556 = arith.negf %555 : vector<16x64xf32>
    %557 = math.exp %556 : vector<16x64xf32>
    %cst_132 = arith.constant 1.000000e+00 : f32
    %558 = vector.broadcast %cst_132 : f32 to vector<16x64xf32>
    %559 = arith.addf %558, %557 : vector<16x64xf32>
    %560 = arith.divf %558, %559 : vector<16x64xf32>
    %561 = vector.extract_strided_slice %560 {offsets = [0, 0], sizes = [16, 16], strides = [1, 1]} : vector<16x64xf32> to vector<16x16xf32>
    %562 = vector.extract_strided_slice %560 {offsets = [0, 16], sizes = [16, 16], strides = [1, 1]} : vector<16x64xf32> to vector<16x16xf32>
    %563 = vector.extract_strided_slice %560 {offsets = [0, 32], sizes = [16, 16], strides = [1, 1]} : vector<16x64xf32> to vector<16x16xf32>
    %cst_133 = arith.constant 2.000000e+00 : f32
    %564 = vector.broadcast %cst_133 : f32 to vector<16x16xf32>
    %565 = arith.mulf %564, %563 : vector<16x16xf32>
    %cst_134 = arith.constant 1.000000e+00 : f32
    %566 = vector.broadcast %cst_134 : f32 to vector<16x16xf32>
    %567 = arith.subf %565, %566 : vector<16x16xf32>
    %568 = vector.extract_strided_slice %560 {offsets = [0, 48], sizes = [16, 16], strides = [1, 1]} : vector<16x64xf32> to vector<16x16xf32>
    %569 = arith.mulf %562, %507 : vector<16x16xf32>
    %570 = arith.mulf %561, %567 : vector<16x16xf32>
    %571 = arith.addf %569, %570 : vector<16x16xf32>
    %572 = math.tanh %571 : vector<16x16xf32>
    %573 = arith.mulf %568, %572 : vector<16x16xf32>
    %574 = vector.extract_strided_slice %377 {offsets = [4, 0, 0], sizes = [1, 16, 128], strides = [1, 1, 1]} : vector<8x16x128xf32> to vector<1x16x128xf32>
    %575 = vector.shape_cast %574 : vector<1x16x128xf32> to vector<16x128xf32>
    %cst_135 = arith.constant dense<0.000000e+00> : vector<16x128xf32>
    %576 = tpu.matmul %531, %3, %cst_135 {dimension_numbers = #tpu.dot_dimension_numbers<[1], [0], [0], [1], [0, 0, 1, 1], [], []>} : vector<16x32xf32>, vector<32x128xf32>, vector<16x128xf32> -> vector<16x128xf32>
    %577 = arith.addf %575, %576 : vector<16x128xf32>
    %578 = arith.negf %577 : vector<16x128xf32>
    %579 = math.exp %578 : vector<16x128xf32>
    %cst_136 = arith.constant 1.000000e+00 : f32
    %580 = vector.broadcast %cst_136 : f32 to vector<16x128xf32>
    %581 = arith.addf %580, %579 : vector<16x128xf32>
    %582 = arith.divf %580, %581 : vector<16x128xf32>
    %583 = vector.extract_strided_slice %582 {offsets = [0, 0], sizes = [16, 32], strides = [1, 1]} : vector<16x128xf32> to vector<16x32xf32>
    %584 = vector.extract_strided_slice %582 {offsets = [0, 32], sizes = [16, 32], strides = [1, 1]} : vector<16x128xf32> to vector<16x32xf32>
    %585 = vector.extract_strided_slice %582 {offsets = [0, 64], sizes = [16, 32], strides = [1, 1]} : vector<16x128xf32> to vector<16x32xf32>
    %cst_137 = arith.constant 2.000000e+00 : f32
    %586 = vector.broadcast %cst_137 : f32 to vector<16x32xf32>
    %587 = arith.mulf %586, %585 : vector<16x32xf32>
    %cst_138 = arith.constant 1.000000e+00 : f32
    %588 = vector.broadcast %cst_138 : f32 to vector<16x32xf32>
    %589 = arith.subf %587, %588 : vector<16x32xf32>
    %590 = vector.extract_strided_slice %582 {offsets = [0, 96], sizes = [16, 32], strides = [1, 1]} : vector<16x128xf32> to vector<16x32xf32>
    %591 = arith.mulf %584, %529 : vector<16x32xf32>
    %592 = arith.mulf %583, %589 : vector<16x32xf32>
    %593 = arith.addf %591, %592 : vector<16x32xf32>
    %594 = math.tanh %593 : vector<16x32xf32>
    %595 = arith.mulf %590, %594 : vector<16x32xf32>
    %596 = tpu.concatenate %595, %552 in 1 : vector<16x32xf32>, vector<16x32xf32> -> vector<16x64xf32>
    %cst_139 = arith.constant dense<0.000000e+00> : vector<16x128xf32>
    %597 = tpu.matmul %596, %4, %cst_139 {dimension_numbers = #tpu.dot_dimension_numbers<[1], [0], [0], [1], [0, 0, 1, 1], [], []>} : vector<16x64xf32>, vector<64x128xf32>, vector<16x128xf32> -> vector<16x128xf32>
    %598 = arith.addf %597, %11 : vector<16x128xf32>
    %599 = arith.negf %598 : vector<16x128xf32>
    %600 = math.exp %599 : vector<16x128xf32>
    %cst_140 = arith.constant 1.000000e+00 : f32
    %601 = vector.broadcast %cst_140 : f32 to vector<16x128xf32>
    %602 = arith.addf %601, %600 : vector<16x128xf32>
    %603 = arith.divf %601, %602 : vector<16x128xf32>
    %604 = vector.extract_strided_slice %603 {offsets = [0, 0], sizes = [16, 32], strides = [1, 1]} : vector<16x128xf32> to vector<16x32xf32>
    %605 = vector.extract_strided_slice %603 {offsets = [0, 32], sizes = [16, 32], strides = [1, 1]} : vector<16x128xf32> to vector<16x32xf32>
    %606 = vector.extract_strided_slice %603 {offsets = [0, 64], sizes = [16, 32], strides = [1, 1]} : vector<16x128xf32> to vector<16x32xf32>
    %cst_141 = arith.constant 2.000000e+00 : f32
    %607 = vector.broadcast %cst_141 : f32 to vector<16x32xf32>
    %608 = arith.mulf %607, %606 : vector<16x32xf32>
    %cst_142 = arith.constant 1.000000e+00 : f32
    %609 = vector.broadcast %cst_142 : f32 to vector<16x32xf32>
    %610 = arith.subf %608, %609 : vector<16x32xf32>
    %611 = vector.extract_strided_slice %603 {offsets = [0, 96], sizes = [16, 32], strides = [1, 1]} : vector<16x128xf32> to vector<16x32xf32>
    %612 = arith.mulf %605, %550 : vector<16x32xf32>
    %613 = arith.mulf %604, %610 : vector<16x32xf32>
    %614 = arith.addf %612, %613 : vector<16x32xf32>
    %615 = math.tanh %614 : vector<16x32xf32>
    %616 = arith.mulf %611, %615 : vector<16x32xf32>
    %617 = tpu.concatenate %616, %573 in 1 : vector<16x32xf32>, vector<16x16xf32> -> vector<16x48xf32>
    %cst_143 = arith.constant dense<0.000000e+00> : vector<16x64xf32>
    %618 = tpu.matmul %617, %5, %cst_143 {dimension_numbers = #tpu.dot_dimension_numbers<[1], [0], [0], [1], [0, 0, 1, 1], [], []>} : vector<16x48xf32>, vector<48x64xf32>, vector<16x64xf32> -> vector<16x64xf32>
    %619 = arith.addf %618, %14 : vector<16x64xf32>
    %620 = arith.negf %619 : vector<16x64xf32>
    %621 = math.exp %620 : vector<16x64xf32>
    %cst_144 = arith.constant 1.000000e+00 : f32
    %622 = vector.broadcast %cst_144 : f32 to vector<16x64xf32>
    %623 = arith.addf %622, %621 : vector<16x64xf32>
    %624 = arith.divf %622, %623 : vector<16x64xf32>
    %625 = vector.extract_strided_slice %624 {offsets = [0, 0], sizes = [16, 16], strides = [1, 1]} : vector<16x64xf32> to vector<16x16xf32>
    %626 = vector.extract_strided_slice %624 {offsets = [0, 16], sizes = [16, 16], strides = [1, 1]} : vector<16x64xf32> to vector<16x16xf32>
    %627 = vector.extract_strided_slice %624 {offsets = [0, 32], sizes = [16, 16], strides = [1, 1]} : vector<16x64xf32> to vector<16x16xf32>
    %cst_145 = arith.constant 2.000000e+00 : f32
    %628 = vector.broadcast %cst_145 : f32 to vector<16x16xf32>
    %629 = arith.mulf %628, %627 : vector<16x16xf32>
    %cst_146 = arith.constant 1.000000e+00 : f32
    %630 = vector.broadcast %cst_146 : f32 to vector<16x16xf32>
    %631 = arith.subf %629, %630 : vector<16x16xf32>
    %632 = vector.extract_strided_slice %624 {offsets = [0, 48], sizes = [16, 16], strides = [1, 1]} : vector<16x64xf32> to vector<16x16xf32>
    %633 = arith.mulf %626, %571 : vector<16x16xf32>
    %634 = arith.mulf %625, %631 : vector<16x16xf32>
    %635 = arith.addf %633, %634 : vector<16x16xf32>
    %636 = math.tanh %635 : vector<16x16xf32>
    %637 = arith.mulf %632, %636 : vector<16x16xf32>
    %638 = vector.extract_strided_slice %377 {offsets = [3, 0, 0], sizes = [1, 16, 128], strides = [1, 1, 1]} : vector<8x16x128xf32> to vector<1x16x128xf32>
    %639 = vector.shape_cast %638 : vector<1x16x128xf32> to vector<16x128xf32>
    %cst_147 = arith.constant dense<0.000000e+00> : vector<16x128xf32>
    %640 = tpu.matmul %595, %3, %cst_147 {dimension_numbers = #tpu.dot_dimension_numbers<[1], [0], [0], [1], [0, 0, 1, 1], [], []>} : vector<16x32xf32>, vector<32x128xf32>, vector<16x128xf32> -> vector<16x128xf32>
    %641 = arith.addf %639, %640 : vector<16x128xf32>
    %642 = arith.negf %641 : vector<16x128xf32>
    %643 = math.exp %642 : vector<16x128xf32>
    %cst_148 = arith.constant 1.000000e+00 : f32
    %644 = vector.broadcast %cst_148 : f32 to vector<16x128xf32>
    %645 = arith.addf %644, %643 : vector<16x128xf32>
    %646 = arith.divf %644, %645 : vector<16x128xf32>
    %647 = vector.extract_strided_slice %646 {offsets = [0, 0], sizes = [16, 32], strides = [1, 1]} : vector<16x128xf32> to vector<16x32xf32>
    %648 = vector.extract_strided_slice %646 {offsets = [0, 32], sizes = [16, 32], strides = [1, 1]} : vector<16x128xf32> to vector<16x32xf32>
    %649 = vector.extract_strided_slice %646 {offsets = [0, 64], sizes = [16, 32], strides = [1, 1]} : vector<16x128xf32> to vector<16x32xf32>
    %cst_149 = arith.constant 2.000000e+00 : f32
    %650 = vector.broadcast %cst_149 : f32 to vector<16x32xf32>
    %651 = arith.mulf %650, %649 : vector<16x32xf32>
    %cst_150 = arith.constant 1.000000e+00 : f32
    %652 = vector.broadcast %cst_150 : f32 to vector<16x32xf32>
    %653 = arith.subf %651, %652 : vector<16x32xf32>
    %654 = vector.extract_strided_slice %646 {offsets = [0, 96], sizes = [16, 32], strides = [1, 1]} : vector<16x128xf32> to vector<16x32xf32>
    %655 = arith.mulf %648, %593 : vector<16x32xf32>
    %656 = arith.mulf %647, %653 : vector<16x32xf32>
    %657 = arith.addf %655, %656 : vector<16x32xf32>
    %658 = math.tanh %657 : vector<16x32xf32>
    %659 = arith.mulf %654, %658 : vector<16x32xf32>
    %660 = tpu.concatenate %659, %616 in 1 : vector<16x32xf32>, vector<16x32xf32> -> vector<16x64xf32>
    %cst_151 = arith.constant dense<0.000000e+00> : vector<16x128xf32>
    %661 = tpu.matmul %660, %4, %cst_151 {dimension_numbers = #tpu.dot_dimension_numbers<[1], [0], [0], [1], [0, 0, 1, 1], [], []>} : vector<16x64xf32>, vector<64x128xf32>, vector<16x128xf32> -> vector<16x128xf32>
    %662 = arith.addf %661, %11 : vector<16x128xf32>
    %663 = arith.negf %662 : vector<16x128xf32>
    %664 = math.exp %663 : vector<16x128xf32>
    %cst_152 = arith.constant 1.000000e+00 : f32
    %665 = vector.broadcast %cst_152 : f32 to vector<16x128xf32>
    %666 = arith.addf %665, %664 : vector<16x128xf32>
    %667 = arith.divf %665, %666 : vector<16x128xf32>
    %668 = vector.extract_strided_slice %667 {offsets = [0, 0], sizes = [16, 32], strides = [1, 1]} : vector<16x128xf32> to vector<16x32xf32>
    %669 = vector.extract_strided_slice %667 {offsets = [0, 32], sizes = [16, 32], strides = [1, 1]} : vector<16x128xf32> to vector<16x32xf32>
    %670 = vector.extract_strided_slice %667 {offsets = [0, 64], sizes = [16, 32], strides = [1, 1]} : vector<16x128xf32> to vector<16x32xf32>
    %cst_153 = arith.constant 2.000000e+00 : f32
    %671 = vector.broadcast %cst_153 : f32 to vector<16x32xf32>
    %672 = arith.mulf %671, %670 : vector<16x32xf32>
    %cst_154 = arith.constant 1.000000e+00 : f32
    %673 = vector.broadcast %cst_154 : f32 to vector<16x32xf32>
    %674 = arith.subf %672, %673 : vector<16x32xf32>
    %675 = vector.extract_strided_slice %667 {offsets = [0, 96], sizes = [16, 32], strides = [1, 1]} : vector<16x128xf32> to vector<16x32xf32>
    %676 = arith.mulf %669, %614 : vector<16x32xf32>
    %677 = arith.mulf %668, %674 : vector<16x32xf32>
    %678 = arith.addf %676, %677 : vector<16x32xf32>
    %679 = math.tanh %678 : vector<16x32xf32>
    %680 = arith.mulf %675, %679 : vector<16x32xf32>
    %681 = tpu.concatenate %680, %637 in 1 : vector<16x32xf32>, vector<16x16xf32> -> vector<16x48xf32>
    %cst_155 = arith.constant dense<0.000000e+00> : vector<16x64xf32>
    %682 = tpu.matmul %681, %5, %cst_155 {dimension_numbers = #tpu.dot_dimension_numbers<[1], [0], [0], [1], [0, 0, 1, 1], [], []>} : vector<16x48xf32>, vector<48x64xf32>, vector<16x64xf32> -> vector<16x64xf32>
    %683 = arith.addf %682, %14 : vector<16x64xf32>
    %684 = arith.negf %683 : vector<16x64xf32>
    %685 = math.exp %684 : vector<16x64xf32>
    %cst_156 = arith.constant 1.000000e+00 : f32
    %686 = vector.broadcast %cst_156 : f32 to vector<16x64xf32>
    %687 = arith.addf %686, %685 : vector<16x64xf32>
    %688 = arith.divf %686, %687 : vector<16x64xf32>
    %689 = vector.extract_strided_slice %688 {offsets = [0, 0], sizes = [16, 16], strides = [1, 1]} : vector<16x64xf32> to vector<16x16xf32>
    %690 = vector.extract_strided_slice %688 {offsets = [0, 16], sizes = [16, 16], strides = [1, 1]} : vector<16x64xf32> to vector<16x16xf32>
    %691 = vector.extract_strided_slice %688 {offsets = [0, 32], sizes = [16, 16], strides = [1, 1]} : vector<16x64xf32> to vector<16x16xf32>
    %cst_157 = arith.constant 2.000000e+00 : f32
    %692 = vector.broadcast %cst_157 : f32 to vector<16x16xf32>
    %693 = arith.mulf %692, %691 : vector<16x16xf32>
    %cst_158 = arith.constant 1.000000e+00 : f32
    %694 = vector.broadcast %cst_158 : f32 to vector<16x16xf32>
    %695 = arith.subf %693, %694 : vector<16x16xf32>
    %696 = vector.extract_strided_slice %688 {offsets = [0, 48], sizes = [16, 16], strides = [1, 1]} : vector<16x64xf32> to vector<16x16xf32>
    %697 = arith.mulf %690, %635 : vector<16x16xf32>
    %698 = arith.mulf %689, %695 : vector<16x16xf32>
    %699 = arith.addf %697, %698 : vector<16x16xf32>
    %700 = math.tanh %699 : vector<16x16xf32>
    %701 = arith.mulf %696, %700 : vector<16x16xf32>
    %702 = vector.extract_strided_slice %377 {offsets = [2, 0, 0], sizes = [1, 16, 128], strides = [1, 1, 1]} : vector<8x16x128xf32> to vector<1x16x128xf32>
    %703 = vector.shape_cast %702 : vector<1x16x128xf32> to vector<16x128xf32>
    %cst_159 = arith.constant dense<0.000000e+00> : vector<16x128xf32>
    %704 = tpu.matmul %659, %3, %cst_159 {dimension_numbers = #tpu.dot_dimension_numbers<[1], [0], [0], [1], [0, 0, 1, 1], [], []>} : vector<16x32xf32>, vector<32x128xf32>, vector<16x128xf32> -> vector<16x128xf32>
    %705 = arith.addf %703, %704 : vector<16x128xf32>
    %706 = arith.negf %705 : vector<16x128xf32>
    %707 = math.exp %706 : vector<16x128xf32>
    %cst_160 = arith.constant 1.000000e+00 : f32
    %708 = vector.broadcast %cst_160 : f32 to vector<16x128xf32>
    %709 = arith.addf %708, %707 : vector<16x128xf32>
    %710 = arith.divf %708, %709 : vector<16x128xf32>
    %711 = vector.extract_strided_slice %710 {offsets = [0, 0], sizes = [16, 32], strides = [1, 1]} : vector<16x128xf32> to vector<16x32xf32>
    %712 = vector.extract_strided_slice %710 {offsets = [0, 32], sizes = [16, 32], strides = [1, 1]} : vector<16x128xf32> to vector<16x32xf32>
    %713 = vector.extract_strided_slice %710 {offsets = [0, 64], sizes = [16, 32], strides = [1, 1]} : vector<16x128xf32> to vector<16x32xf32>
    %cst_161 = arith.constant 2.000000e+00 : f32
    %714 = vector.broadcast %cst_161 : f32 to vector<16x32xf32>
    %715 = arith.mulf %714, %713 : vector<16x32xf32>
    %cst_162 = arith.constant 1.000000e+00 : f32
    %716 = vector.broadcast %cst_162 : f32 to vector<16x32xf32>
    %717 = arith.subf %715, %716 : vector<16x32xf32>
    %718 = vector.extract_strided_slice %710 {offsets = [0, 96], sizes = [16, 32], strides = [1, 1]} : vector<16x128xf32> to vector<16x32xf32>
    %719 = arith.mulf %712, %657 : vector<16x32xf32>
    %720 = arith.mulf %711, %717 : vector<16x32xf32>
    %721 = arith.addf %719, %720 : vector<16x32xf32>
    %722 = math.tanh %721 : vector<16x32xf32>
    %723 = arith.mulf %718, %722 : vector<16x32xf32>
    %724 = tpu.concatenate %723, %680 in 1 : vector<16x32xf32>, vector<16x32xf32> -> vector<16x64xf32>
    %cst_163 = arith.constant dense<0.000000e+00> : vector<16x128xf32>
    %725 = tpu.matmul %724, %4, %cst_163 {dimension_numbers = #tpu.dot_dimension_numbers<[1], [0], [0], [1], [0, 0, 1, 1], [], []>} : vector<16x64xf32>, vector<64x128xf32>, vector<16x128xf32> -> vector<16x128xf32>
    %726 = arith.addf %725, %11 : vector<16x128xf32>
    %727 = arith.negf %726 : vector<16x128xf32>
    %728 = math.exp %727 : vector<16x128xf32>
    %cst_164 = arith.constant 1.000000e+00 : f32
    %729 = vector.broadcast %cst_164 : f32 to vector<16x128xf32>
    %730 = arith.addf %729, %728 : vector<16x128xf32>
    %731 = arith.divf %729, %730 : vector<16x128xf32>
    %732 = vector.extract_strided_slice %731 {offsets = [0, 0], sizes = [16, 32], strides = [1, 1]} : vector<16x128xf32> to vector<16x32xf32>
    %733 = vector.extract_strided_slice %731 {offsets = [0, 32], sizes = [16, 32], strides = [1, 1]} : vector<16x128xf32> to vector<16x32xf32>
    %734 = vector.extract_strided_slice %731 {offsets = [0, 64], sizes = [16, 32], strides = [1, 1]} : vector<16x128xf32> to vector<16x32xf32>
    %cst_165 = arith.constant 2.000000e+00 : f32
    %735 = vector.broadcast %cst_165 : f32 to vector<16x32xf32>
    %736 = arith.mulf %735, %734 : vector<16x32xf32>
    %cst_166 = arith.constant 1.000000e+00 : f32
    %737 = vector.broadcast %cst_166 : f32 to vector<16x32xf32>
    %738 = arith.subf %736, %737 : vector<16x32xf32>
    %739 = vector.extract_strided_slice %731 {offsets = [0, 96], sizes = [16, 32], strides = [1, 1]} : vector<16x128xf32> to vector<16x32xf32>
    %740 = arith.mulf %733, %678 : vector<16x32xf32>
    %741 = arith.mulf %732, %738 : vector<16x32xf32>
    %742 = arith.addf %740, %741 : vector<16x32xf32>
    %743 = math.tanh %742 : vector<16x32xf32>
    %744 = arith.mulf %739, %743 : vector<16x32xf32>
    %745 = tpu.concatenate %744, %701 in 1 : vector<16x32xf32>, vector<16x16xf32> -> vector<16x48xf32>
    %cst_167 = arith.constant dense<0.000000e+00> : vector<16x64xf32>
    %746 = tpu.matmul %745, %5, %cst_167 {dimension_numbers = #tpu.dot_dimension_numbers<[1], [0], [0], [1], [0, 0, 1, 1], [], []>} : vector<16x48xf32>, vector<48x64xf32>, vector<16x64xf32> -> vector<16x64xf32>
    %747 = arith.addf %746, %14 : vector<16x64xf32>
    %748 = arith.negf %747 : vector<16x64xf32>
    %749 = math.exp %748 : vector<16x64xf32>
    %cst_168 = arith.constant 1.000000e+00 : f32
    %750 = vector.broadcast %cst_168 : f32 to vector<16x64xf32>
    %751 = arith.addf %750, %749 : vector<16x64xf32>
    %752 = arith.divf %750, %751 : vector<16x64xf32>
    %753 = vector.extract_strided_slice %752 {offsets = [0, 0], sizes = [16, 16], strides = [1, 1]} : vector<16x64xf32> to vector<16x16xf32>
    %754 = vector.extract_strided_slice %752 {offsets = [0, 16], sizes = [16, 16], strides = [1, 1]} : vector<16x64xf32> to vector<16x16xf32>
    %755 = vector.extract_strided_slice %752 {offsets = [0, 32], sizes = [16, 16], strides = [1, 1]} : vector<16x64xf32> to vector<16x16xf32>
    %cst_169 = arith.constant 2.000000e+00 : f32
    %756 = vector.broadcast %cst_169 : f32 to vector<16x16xf32>
    %757 = arith.mulf %756, %755 : vector<16x16xf32>
    %cst_170 = arith.constant 1.000000e+00 : f32
    %758 = vector.broadcast %cst_170 : f32 to vector<16x16xf32>
    %759 = arith.subf %757, %758 : vector<16x16xf32>
    %760 = vector.extract_strided_slice %752 {offsets = [0, 48], sizes = [16, 16], strides = [1, 1]} : vector<16x64xf32> to vector<16x16xf32>
    %761 = arith.mulf %754, %699 : vector<16x16xf32>
    %762 = arith.mulf %753, %759 : vector<16x16xf32>
    %763 = arith.addf %761, %762 : vector<16x16xf32>
    %764 = math.tanh %763 : vector<16x16xf32>
    %765 = arith.mulf %760, %764 : vector<16x16xf32>
    %766 = vector.extract_strided_slice %377 {offsets = [1, 0, 0], sizes = [1, 16, 128], strides = [1, 1, 1]} : vector<8x16x128xf32> to vector<1x16x128xf32>
    %767 = vector.shape_cast %766 : vector<1x16x128xf32> to vector<16x128xf32>
    %cst_171 = arith.constant dense<0.000000e+00> : vector<16x128xf32>
    %768 = tpu.matmul %723, %3, %cst_171 {dimension_numbers = #tpu.dot_dimension_numbers<[1], [0], [0], [1], [0, 0, 1, 1], [], []>} : vector<16x32xf32>, vector<32x128xf32>, vector<16x128xf32> -> vector<16x128xf32>
    %769 = arith.addf %767, %768 : vector<16x128xf32>
    %770 = arith.negf %769 : vector<16x128xf32>
    %771 = math.exp %770 : vector<16x128xf32>
    %cst_172 = arith.constant 1.000000e+00 : f32
    %772 = vector.broadcast %cst_172 : f32 to vector<16x128xf32>
    %773 = arith.addf %772, %771 : vector<16x128xf32>
    %774 = arith.divf %772, %773 : vector<16x128xf32>
    %775 = vector.extract_strided_slice %774 {offsets = [0, 0], sizes = [16, 32], strides = [1, 1]} : vector<16x128xf32> to vector<16x32xf32>
    %776 = vector.extract_strided_slice %774 {offsets = [0, 32], sizes = [16, 32], strides = [1, 1]} : vector<16x128xf32> to vector<16x32xf32>
    %777 = vector.extract_strided_slice %774 {offsets = [0, 64], sizes = [16, 32], strides = [1, 1]} : vector<16x128xf32> to vector<16x32xf32>
    %cst_173 = arith.constant 2.000000e+00 : f32
    %778 = vector.broadcast %cst_173 : f32 to vector<16x32xf32>
    %779 = arith.mulf %778, %777 : vector<16x32xf32>
    %cst_174 = arith.constant 1.000000e+00 : f32
    %780 = vector.broadcast %cst_174 : f32 to vector<16x32xf32>
    %781 = arith.subf %779, %780 : vector<16x32xf32>
    %782 = vector.extract_strided_slice %774 {offsets = [0, 96], sizes = [16, 32], strides = [1, 1]} : vector<16x128xf32> to vector<16x32xf32>
    %783 = arith.mulf %776, %721 : vector<16x32xf32>
    %784 = arith.mulf %775, %781 : vector<16x32xf32>
    %785 = arith.addf %783, %784 : vector<16x32xf32>
    %786 = math.tanh %785 : vector<16x32xf32>
    %787 = arith.mulf %782, %786 : vector<16x32xf32>
    %788 = tpu.concatenate %787, %744 in 1 : vector<16x32xf32>, vector<16x32xf32> -> vector<16x64xf32>
    %cst_175 = arith.constant dense<0.000000e+00> : vector<16x128xf32>
    %789 = tpu.matmul %788, %4, %cst_175 {dimension_numbers = #tpu.dot_dimension_numbers<[1], [0], [0], [1], [0, 0, 1, 1], [], []>} : vector<16x64xf32>, vector<64x128xf32>, vector<16x128xf32> -> vector<16x128xf32>
    %790 = arith.addf %789, %11 : vector<16x128xf32>
    %791 = arith.negf %790 : vector<16x128xf32>
    %792 = math.exp %791 : vector<16x128xf32>
    %cst_176 = arith.constant 1.000000e+00 : f32
    %793 = vector.broadcast %cst_176 : f32 to vector<16x128xf32>
    %794 = arith.addf %793, %792 : vector<16x128xf32>
    %795 = arith.divf %793, %794 : vector<16x128xf32>
    %796 = vector.extract_strided_slice %795 {offsets = [0, 0], sizes = [16, 32], strides = [1, 1]} : vector<16x128xf32> to vector<16x32xf32>
    %797 = vector.extract_strided_slice %795 {offsets = [0, 32], sizes = [16, 32], strides = [1, 1]} : vector<16x128xf32> to vector<16x32xf32>
    %798 = vector.extract_strided_slice %795 {offsets = [0, 64], sizes = [16, 32], strides = [1, 1]} : vector<16x128xf32> to vector<16x32xf32>
    %cst_177 = arith.constant 2.000000e+00 : f32
    %799 = vector.broadcast %cst_177 : f32 to vector<16x32xf32>
    %800 = arith.mulf %799, %798 : vector<16x32xf32>
    %cst_178 = arith.constant 1.000000e+00 : f32
    %801 = vector.broadcast %cst_178 : f32 to vector<16x32xf32>
    %802 = arith.subf %800, %801 : vector<16x32xf32>
    %803 = vector.extract_strided_slice %795 {offsets = [0, 96], sizes = [16, 32], strides = [1, 1]} : vector<16x128xf32> to vector<16x32xf32>
    %804 = arith.mulf %797, %742 : vector<16x32xf32>
    %805 = arith.mulf %796, %802 : vector<16x32xf32>
    %806 = arith.addf %804, %805 : vector<16x32xf32>
    %807 = math.tanh %806 : vector<16x32xf32>
    %808 = arith.mulf %803, %807 : vector<16x32xf32>
    %809 = tpu.concatenate %808, %765 in 1 : vector<16x32xf32>, vector<16x16xf32> -> vector<16x48xf32>
    %cst_179 = arith.constant dense<0.000000e+00> : vector<16x64xf32>
    %810 = tpu.matmul %809, %5, %cst_179 {dimension_numbers = #tpu.dot_dimension_numbers<[1], [0], [0], [1], [0, 0, 1, 1], [], []>} : vector<16x48xf32>, vector<48x64xf32>, vector<16x64xf32> -> vector<16x64xf32>
    %811 = arith.addf %810, %14 : vector<16x64xf32>
    %812 = arith.negf %811 : vector<16x64xf32>
    %813 = math.exp %812 : vector<16x64xf32>
    %cst_180 = arith.constant 1.000000e+00 : f32
    %814 = vector.broadcast %cst_180 : f32 to vector<16x64xf32>
    %815 = arith.addf %814, %813 : vector<16x64xf32>
    %816 = arith.divf %814, %815 : vector<16x64xf32>
    %817 = vector.extract_strided_slice %816 {offsets = [0, 0], sizes = [16, 16], strides = [1, 1]} : vector<16x64xf32> to vector<16x16xf32>
    %818 = vector.extract_strided_slice %816 {offsets = [0, 16], sizes = [16, 16], strides = [1, 1]} : vector<16x64xf32> to vector<16x16xf32>
    %819 = vector.extract_strided_slice %816 {offsets = [0, 32], sizes = [16, 16], strides = [1, 1]} : vector<16x64xf32> to vector<16x16xf32>
    %cst_181 = arith.constant 2.000000e+00 : f32
    %820 = vector.broadcast %cst_181 : f32 to vector<16x16xf32>
    %821 = arith.mulf %820, %819 : vector<16x16xf32>
    %cst_182 = arith.constant 1.000000e+00 : f32
    %822 = vector.broadcast %cst_182 : f32 to vector<16x16xf32>
    %823 = arith.subf %821, %822 : vector<16x16xf32>
    %824 = vector.extract_strided_slice %816 {offsets = [0, 48], sizes = [16, 16], strides = [1, 1]} : vector<16x64xf32> to vector<16x16xf32>
    %825 = arith.mulf %818, %763 : vector<16x16xf32>
    %826 = arith.mulf %817, %823 : vector<16x16xf32>
    %827 = arith.addf %825, %826 : vector<16x16xf32>
    %828 = math.tanh %827 : vector<16x16xf32>
    %829 = arith.mulf %824, %828 : vector<16x16xf32>
    %830 = vector.extract_strided_slice %377 {offsets = [0, 0, 0], sizes = [1, 16, 128], strides = [1, 1, 1]} : vector<8x16x128xf32> to vector<1x16x128xf32>
    %831 = vector.shape_cast %830 : vector<1x16x128xf32> to vector<16x128xf32>
    %cst_183 = arith.constant dense<0.000000e+00> : vector<16x128xf32>
    %832 = tpu.matmul %787, %3, %cst_183 {dimension_numbers = #tpu.dot_dimension_numbers<[1], [0], [0], [1], [0, 0, 1, 1], [], []>} : vector<16x32xf32>, vector<32x128xf32>, vector<16x128xf32> -> vector<16x128xf32>
    %833 = arith.addf %831, %832 : vector<16x128xf32>
    %834 = arith.negf %833 : vector<16x128xf32>
    %835 = math.exp %834 : vector<16x128xf32>
    %cst_184 = arith.constant 1.000000e+00 : f32
    %836 = vector.broadcast %cst_184 : f32 to vector<16x128xf32>
    %837 = arith.addf %836, %835 : vector<16x128xf32>
    %838 = arith.divf %836, %837 : vector<16x128xf32>
    %839 = vector.extract_strided_slice %838 {offsets = [0, 0], sizes = [16, 32], strides = [1, 1]} : vector<16x128xf32> to vector<16x32xf32>
    %840 = vector.extract_strided_slice %838 {offsets = [0, 32], sizes = [16, 32], strides = [1, 1]} : vector<16x128xf32> to vector<16x32xf32>
    %841 = vector.extract_strided_slice %838 {offsets = [0, 64], sizes = [16, 32], strides = [1, 1]} : vector<16x128xf32> to vector<16x32xf32>
    %cst_185 = arith.constant 2.000000e+00 : f32
    %842 = vector.broadcast %cst_185 : f32 to vector<16x32xf32>
    %843 = arith.mulf %842, %841 : vector<16x32xf32>
    %cst_186 = arith.constant 1.000000e+00 : f32
    %844 = vector.broadcast %cst_186 : f32 to vector<16x32xf32>
    %845 = arith.subf %843, %844 : vector<16x32xf32>
    %846 = vector.extract_strided_slice %838 {offsets = [0, 96], sizes = [16, 32], strides = [1, 1]} : vector<16x128xf32> to vector<16x32xf32>
    %847 = arith.mulf %840, %785 : vector<16x32xf32>
    %848 = arith.mulf %839, %845 : vector<16x32xf32>
    %849 = arith.addf %847, %848 : vector<16x32xf32>
    %850 = math.tanh %849 : vector<16x32xf32>
    %851 = arith.mulf %846, %850 : vector<16x32xf32>
    %852 = tpu.concatenate %851, %808 in 1 : vector<16x32xf32>, vector<16x32xf32> -> vector<16x64xf32>
    %cst_187 = arith.constant dense<0.000000e+00> : vector<16x128xf32>
    %853 = tpu.matmul %852, %4, %cst_187 {dimension_numbers = #tpu.dot_dimension_numbers<[1], [0], [0], [1], [0, 0, 1, 1], [], []>} : vector<16x64xf32>, vector<64x128xf32>, vector<16x128xf32> -> vector<16x128xf32>
    %854 = arith.addf %853, %11 : vector<16x128xf32>
    %855 = arith.negf %854 : vector<16x128xf32>
    %856 = math.exp %855 : vector<16x128xf32>
    %cst_188 = arith.constant 1.000000e+00 : f32
    %857 = vector.broadcast %cst_188 : f32 to vector<16x128xf32>
    %858 = arith.addf %857, %856 : vector<16x128xf32>
    %859 = arith.divf %857, %858 : vector<16x128xf32>
    %860 = vector.extract_strided_slice %859 {offsets = [0, 0], sizes = [16, 32], strides = [1, 1]} : vector<16x128xf32> to vector<16x32xf32>
    %861 = vector.extract_strided_slice %859 {offsets = [0, 32], sizes = [16, 32], strides = [1, 1]} : vector<16x128xf32> to vector<16x32xf32>
    %862 = vector.extract_strided_slice %859 {offsets = [0, 64], sizes = [16, 32], strides = [1, 1]} : vector<16x128xf32> to vector<16x32xf32>
    %cst_189 = arith.constant 2.000000e+00 : f32
    %863 = vector.broadcast %cst_189 : f32 to vector<16x32xf32>
    %864 = arith.mulf %863, %862 : vector<16x32xf32>
    %cst_190 = arith.constant 1.000000e+00 : f32
    %865 = vector.broadcast %cst_190 : f32 to vector<16x32xf32>
    %866 = arith.subf %864, %865 : vector<16x32xf32>
    %867 = vector.extract_strided_slice %859 {offsets = [0, 96], sizes = [16, 32], strides = [1, 1]} : vector<16x128xf32> to vector<16x32xf32>
    %868 = arith.mulf %861, %806 : vector<16x32xf32>
    %869 = arith.mulf %860, %866 : vector<16x32xf32>
    %870 = arith.addf %868, %869 : vector<16x32xf32>
    %871 = math.tanh %870 : vector<16x32xf32>
    %872 = arith.mulf %867, %871 : vector<16x32xf32>
    %873 = tpu.concatenate %872, %829 in 1 : vector<16x32xf32>, vector<16x16xf32> -> vector<16x48xf32>
    %cst_191 = arith.constant dense<0.000000e+00> : vector<16x64xf32>
    %874 = tpu.matmul %873, %5, %cst_191 {dimension_numbers = #tpu.dot_dimension_numbers<[1], [0], [0], [1], [0, 0, 1, 1], [], []>} : vector<16x48xf32>, vector<48x64xf32>, vector<16x64xf32> -> vector<16x64xf32>
    %875 = arith.addf %874, %14 : vector<16x64xf32>
    %876 = arith.negf %875 : vector<16x64xf32>
    %877 = math.exp %876 : vector<16x64xf32>
    %cst_192 = arith.constant 1.000000e+00 : f32
    %878 = vector.broadcast %cst_192 : f32 to vector<16x64xf32>
    %879 = arith.addf %878, %877 : vector<16x64xf32>
    %880 = arith.divf %878, %879 : vector<16x64xf32>
    %881 = vector.extract_strided_slice %880 {offsets = [0, 0], sizes = [16, 16], strides = [1, 1]} : vector<16x64xf32> to vector<16x16xf32>
    %882 = vector.extract_strided_slice %880 {offsets = [0, 16], sizes = [16, 16], strides = [1, 1]} : vector<16x64xf32> to vector<16x16xf32>
    %883 = vector.extract_strided_slice %880 {offsets = [0, 32], sizes = [16, 16], strides = [1, 1]} : vector<16x64xf32> to vector<16x16xf32>
    %cst_193 = arith.constant 2.000000e+00 : f32
    %884 = vector.broadcast %cst_193 : f32 to vector<16x16xf32>
    %885 = arith.mulf %884, %883 : vector<16x16xf32>
    %cst_194 = arith.constant 1.000000e+00 : f32
    %886 = vector.broadcast %cst_194 : f32 to vector<16x16xf32>
    %887 = arith.subf %885, %886 : vector<16x16xf32>
    %888 = vector.extract_strided_slice %880 {offsets = [0, 48], sizes = [16, 16], strides = [1, 1]} : vector<16x64xf32> to vector<16x16xf32>
    %889 = arith.mulf %882, %827 : vector<16x16xf32>
    %890 = arith.mulf %881, %887 : vector<16x16xf32>
    %891 = arith.addf %889, %890 : vector<16x16xf32>
    %892 = math.tanh %891 : vector<16x16xf32>
    %893 = arith.mulf %888, %892 : vector<16x16xf32>
    %894 = tpu.concatenate %445, %509, %573, %637, %701, %765, %829, %893 in 1 : vector<16x16xf32>, vector<16x16xf32>, vector<16x16xf32>, vector<16x16xf32>, vector<16x16xf32>, vector<16x16xf32>, vector<16x16xf32>, vector<16x16xf32> -> vector<16x128xf32>
    %c0_195 = arith.constant 0 : index
    %c0_196 = arith.constant 0 : index
    %895 = vector.load %arg14[%c0_195, %c0_196] : memref<16x128xf32, #tpu.memory_space<vmem>>, vector<16x128xf32>
    tpu.vector_store %arg14[%c0_195, %c0_196], %894 {strides = array<i32>} : memref<16x128xf32, #tpu.memory_space<vmem>>, vector<16x128xf32>,
    return
  }
  func.func @transform_0(%arg0: i32) -> (i32, i32, i32) {
    %c0_i32 = arith.constant 0 : i32
    %c0_i32_0 = arith.constant 0 : i32
    %c0_i32_1 = arith.constant 0 : i32
    return %c0_i32, %arg0, %c0_i32_0 : i32, i32, i32
  }
  func.func @transform_1(%arg0: i32) -> (i32, i32) {
    %c0_i32 = arith.constant 0 : i32
    %c0_i32_0 = arith.constant 0 : i32
    %c0_i32_1 = arith.constant 0 : i32
    return %c0_i32, %c0_i32_0 : i32, i32
  }
  func.func @transform_2(%arg0: i32) -> (i32, i32) {
    %c0_i32 = arith.constant 0 : i32
    %c0_i32_0 = arith.constant 0 : i32
    %c0_i32_1 = arith.constant 0 : i32
    return %c0_i32, %c0_i32_0 : i32, i32
  }
  func.func @transform_3(%arg0: i32) -> (i32, i32) {
    %c0_i32 = arith.constant 0 : i32
    %c0_i32_0 = arith.constant 0 : i32
    %c0_i32_1 = arith.constant 0 : i32
    return %c0_i32, %c0_i32_0 : i32, i32
  }
  func.func @transform_4(%arg0: i32) -> (i32, i32) {
    %c0_i32 = arith.constant 0 : i32
    %c0_i32_0 = arith.constant 0 : i32
    %c0_i32_1 = arith.constant 0 : i32
    return %c0_i32, %c0_i32_0 : i32, i32
  }
  func.func @transform_5(%arg0: i32) -> (i32, i32) {
    %c0_i32 = arith.constant 0 : i32
    %c0_i32_0 = arith.constant 0 : i32
    %c0_i32_1 = arith.constant 0 : i32
    return %c0_i32, %c0_i32_0 : i32, i32
  }
  func.func @transform_6(%arg0: i32) -> (i32, i32) {
    %c0_i32 = arith.constant 0 : i32
    %c0_i32_0 = arith.constant 0 : i32
    %c0_i32_1 = arith.constant 0 : i32
    return %c0_i32, %c0_i32_0 : i32, i32
  }
  func.func @transform_7(%arg0: i32) -> (i32, i32) {
    %c0_i32 = arith.constant 0 : i32
    %c0_i32_0 = arith.constant 0 : i32
    %c0_i32_1 = arith.constant 0 : i32
    return %c0_i32, %c0_i32_0 : i32, i32
  }
  func.func @transform_8(%arg0: i32) -> (i32, i32) {
    %c0_i32 = arith.constant 0 : i32
    %c0_i32_0 = arith.constant 0 : i32
    %c0_i32_1 = arith.constant 0 : i32
    return %c0_i32, %c0_i32_0 : i32, i32
  }
  func.func @transform_9(%arg0: i32) -> (i32, i32) {
    %c0_i32 = arith.constant 0 : i32
    %c0_i32_0 = arith.constant 0 : i32
    %c0_i32_1 = arith.constant 0 : i32
    return %c0_i32, %c0_i32_0 : i32, i32
  }
  func.func @transform_10(%arg0: i32) -> (i32, i32) {
    %c0_i32 = arith.constant 0 : i32
    %c0_i32_0 = arith.constant 0 : i32
    %c0_i32_1 = arith.constant 0 : i32
    return %c0_i32, %c0_i32_0 : i32, i32
  }
  func.func @transform_11(%arg0: i32) -> (i32, i32) {
    %c0_i32 = arith.constant 0 : i32
    %c0_i32_0 = arith.constant 0 : i32
    %c0_i32_1 = arith.constant 0 : i32
    return %c0_i32, %c0_i32_0 : i32, i32
  }
  func.func @transform_12(%arg0: i32) -> (i32, i32) {
    %c0_i32 = arith.constant 0 : i32
    %c0_i32_0 = arith.constant 0 : i32
    %c0_i32_1 = arith.constant 0 : i32
    return %c0_i32, %c0_i32_0 : i32, i32
  }
  func.func @transform_13(%arg0: i32) -> (i32, i32) {
    %c0_i32 = arith.constant 0 : i32
    %c0_i32_0 = arith.constant 0 : i32
    return %arg0, %c0_i32 : i32, i32
  }
}

</mosaic_0001>

<llo_original>
// kernel: tpu_custom_call.1
$region0: #{tpu_custom_call.1}
  #allocation0 [shape = 'u32[]', space=smem, size = 0x4, offset = 0x4, fixed_abs, tag = 'smem constant byte address 0x4 - core index']
  #allocation1 [shape = 'u32[72,128]{1,0:T(1,128)}', space=vmem, size = 0x9000, scoped, tag = 'internal scratch']
  %s0 = inlined_call_operand.hbm [shape: f32[8,16,16], index: 0, kind: input, shape index: {}]
  %s1 = inlined_call_operand.hbm [shape: f32[16,128], index: 1, kind: input, shape index: {}]
  %s2 = inlined_call_operand.hbm [shape: f32[32,128], index: 2, kind: input, shape index: {}]
  %s3 = inlined_call_operand.vmem [shape: f32[1,128], index: 3, kind: input, shape index: {}]
  %s4 = inlined_call_operand.hbm [shape: f32[64,128], index: 4, kind: input, shape index: {}]
  %s5 = inlined_call_operand.vmem [shape: f32[1,128], index: 5, kind: input, shape index: {}]
  %s6 = inlined_call_operand.hbm [shape: f32[16,128], index: 6, kind: input, shape index: {}]
  %s7 = inlined_call_operand.hbm [shape: f32[32,128], index: 7, kind: input, shape index: {}]
  %s8 = inlined_call_operand.vmem [shape: f32[1,128], index: 8, kind: input, shape index: {}]
  %s9 = inlined_call_operand.hbm [shape: f32[64,128], index: 9, kind: input, shape index: {}]
  %s10 = inlined_call_operand.vmem [shape: f32[1,128], index: 10, kind: input, shape index: {}]
  %s11 = inlined_call_operand.hbm [shape: f32[48,64], index: 11, kind: input, shape index: {}]
  %s12 = inlined_call_operand.vmem [shape: f32[1,64], index: 12, kind: input, shape index: {}]
  %s13 = inlined_call_operand.hbm [shape: f32[16,128], index: 13, kind: output, shape index: {}]
  %s14 = sld [smem:[#allocation0]]
  $region94: #{tpu_custom_call.1} parent=0
    _
  %s16 = ssub.s32 1, %s14
  %s17 = scalar_select 0, %s16, %s14
  $region1: #{tpu_custom_call.1} parent=0
    #allocation2 [shape = 'u8[65536]{0}', space=vmem, size = 0x10000, scoped, tag = 'input window, operand 0, single buffered']
    #allocation3 [shape = 's32[1]{0}', space=sflag, size = 0x4, scoped, tag = 'scoped memory for tpu_custom_call.1']
    #allocation4 [shape = 's32[1]{0}', space=sflag, size = 0x4, scoped, tag = 'scoped memory for tpu_custom_call.1']
    #allocation5 [shape = 'u8[8192]{0}', space=vmem, size = 0x2000, scoped, tag = 'input window, operand 1, single buffered']
    #allocation6 [shape = 's32[1]{0}', space=sflag, size = 0x4, scoped, tag = 'scoped memory for tpu_custom_call.1']
    #allocation7 [shape = 'u8[16384]{0}', space=vmem, size = 0x4000, scoped, tag = 'input window, operand 2, single buffered']
    #allocation8 [shape = 'u8[32768]{0}', space=vmem, size = 0x8000, scoped, tag = 'input window, operand 4, single buffered']
    #allocation9 [shape = 's32[1]{0}', space=sflag, size = 0x4, scoped, tag = 'scoped memory for tpu_custom_call.1']
    #allocation10 [shape = 'u8[8192]{0}', space=vmem, size = 0x2000, scoped, tag = 'input window, operand 6, single buffered']
    #allocation11 [shape = 'u8[16384]{0}', space=vmem, size = 0x4000, scoped, tag = 'input window, operand 7, single buffered']
    #allocation12 [shape = 's32[1]{0}', space=sflag, size = 0x4, scoped, tag = 'scoped memory for tpu_custom_call.1']
    #allocation13 [shape = 'u8[32768]{0}', space=vmem, size = 0x8000, scoped, tag = 'input window, operand 9, single buffered']
    #allocation14 [shape = 'u8[24576]{0}', space=vmem, size = 0x6000, scoped, tag = 'input window, operand 11, single buffered']
    #allocation15 [shape = 's32[1]{0}', space=sflag, size = 0x4, scoped, tag = 'scoped memory for tpu_custom_call.1']
    #allocation16 [shape = 'u8[8192]{0}', space=vmem, size = 0x2000, scoped, tag = 'output window, operand 0, single buffered']
    %18 = vsyncpa [#allocation3], 0
    %19 = vsyncpa [#allocation6], 0
    %20 = vsyncpa [#allocation9], 0
    %21 = vsyncpa [#allocation12], 0
    %22 = vsyncpa [#allocation15], 0
    %23 = vsyncpa [#allocation4], 0
    // Predicated region
    $region2: #{tpu_custom_call.1} parent=1 // pred_check
      _
    $region3: #{tpu_custom_call.1} parent=1 // pred_check_branch
      %25 = sbr.rel (0) target = $region5
    $region4: #{tpu_custom_call.1} parent=1 // pred_region
      %27 = vsyncadd [#allocation3], 0
      %s28 = sshll.u32 %s0, 4
      %s29 = int_to_ptr.hbm [resolvable:$true] %s28
      %s30 = sshll.u32 [#allocation2], 4
      %s31 = int_to_ptr.vmem [resolvable:$true] %s30
      %36 = dma.hbm_to_vmem [thread:$0]  %s29, 2048, %s31, [#allocation3], 128, 128, 8
    $region5: #{tpu_custom_call.1} parent=1 // pred_fallthru
      _
    // Predicated region
    $region6: #{tpu_custom_call.1} parent=1 // pred_check
      _
    $region7: #{tpu_custom_call.1} parent=1 // pred_check_branch
      %38 = sbr.rel (0) target = $region9
    $region8: #{tpu_custom_call.1} parent=1 // pred_region
      %40 = vsyncadd [#allocation6], 0
      %s41 = sshll.u32 %s1, 4
      %s42 = int_to_ptr.hbm [resolvable:$true] %s41
      %s43 = sshll.u32 [#allocation5], 4
      %s44 = int_to_ptr.vmem [resolvable:$true] %s43
      %49 = dma.hbm_to_vmem [thread:$0]  %s42, 256, %s44, [#allocation6], 128, 128, 8
    $region9: #{tpu_custom_call.1} parent=1 // pred_fallthru
      _
    // Predicated region
    $region10: #{tpu_custom_call.1} parent=1 // pred_check
      _
    $region11: #{tpu_custom_call.1} parent=1 // pred_check_branch
      %51 = sbr.rel (0) target = $region13
    $region12: #{tpu_custom_call.1} parent=1 // pred_region
      %53 = vsyncadd [#allocation6], 0
      %s54 = sshll.u32 %s2, 4
      %s55 = int_to_ptr.hbm [resolvable:$true] %s54
      %s56 = sshll.u32 [#allocation7], 4
      %s57 = int_to_ptr.vmem [resolvable:$true] %s56
      %62 = dma.hbm_to_vmem [thread:$0]  %s55, 512, %s57, [#allocation6], 128, 128, 8
    $region13: #{tpu_custom_call.1} parent=1 // pred_fallthru
      _
    // Predicated region
    $region14: #{tpu_custom_call.1} parent=1 // pred_check
      _
    $region15: #{tpu_custom_call.1} parent=1 // pred_check_branch
      %64 = sbr.rel (0) target = $region17
    $region16: #{tpu_custom_call.1} parent=1 // pred_region
      _
    $region17: #{tpu_custom_call.1} parent=1 // pred_fallthru
      _
    // Predicated region
    $region18: #{tpu_custom_call.1} parent=1 // pred_check
      _
    $region19: #{tpu_custom_call.1} parent=1 // pred_check_branch
      %66 = sbr.rel (0) target = $region21
    $region20: #{tpu_custom_call.1} parent=1 // pred_region
      %68 = vsyncadd [#allocation9], 0
      %s69 = sshll.u32 %s4, 4
      %s70 = int_to_ptr.hbm [resolvable:$true] %s69
      %s71 = sshll.u32 [#allocation8], 4
      %s72 = int_to_ptr.vmem [resolvable:$true] %s71
      %77 = dma.hbm_to_vmem [thread:$0]  %s70, 1024, %s72, [#allocation9], 128, 128, 8
    $region21: #{tpu_custom_call.1} parent=1 // pred_fallthru
      _
    // Predicated region
    $region22: #{tpu_custom_call.1} parent=1 // pred_check
      _
    $region23: #{tpu_custom_call.1} parent=1 // pred_check_branch
      %79 = sbr.rel (0) target = $region25
    $region24: #{tpu_custom_call.1} parent=1 // pred_region
      _
    $region25: #{tpu_custom_call.1} parent=1 // pred_fallthru
      _
    // Predicated region
    $region26: #{tpu_custom_call.1} parent=1 // pred_check
      _
    $region27: #{tpu_custom_call.1} parent=1 // pred_check_branch
      %81 = sbr.rel (0) target = $region29
    $region28: #{tpu_custom_call.1} parent=1 // pred_region
      %83 = vsyncadd [#allocation9], 0
      %s84 = sshll.u32 %s6, 4
      %s85 = int_to_ptr.hbm [resolvable:$true] %s84
      %s86 = sshll.u32 [#allocation10], 4
      %s87 = int_to_ptr.vmem [resolvable:$true] %s86
      %92 = dma.hbm_to_vmem [thread:$0]  %s85, 256, %s87, [#allocation9], 128, 128, 8
    $region29: #{tpu_custom_call.1} parent=1 // pred_fallthru
      _
    // Predicated region
    $region30: #{tpu_custom_call.1} parent=1 // pred_check
      _
    $region31: #{tpu_custom_call.1} parent=1 // pred_check_branch
      %94 = sbr.rel (0) target = $region33
    $region32: #{tpu_custom_call.1} parent=1 // pred_region
      %96 = vsyncadd [#allocation12], 0
      %s97 = sshll.u32 %s7, 4
      %s98 = int_to_ptr.hbm [resolvable:$true] %s97
      %s99 = sshll.u32 [#allocation11], 4
      %s100 = int_to_ptr.vmem [resolvable:$true] %s99
      %105 = dma.hbm_to_vmem [thread:$0]  %s98, 512, %s100, [#allocation12], 128, 128, 8
    $region33: #{tpu_custom_call.1} parent=1 // pred_fallthru
      _
    // Predicated region
    $region34: #{tpu_custom_call.1} parent=1 // pred_check
      _
    $region35: #{tpu_custom_call.1} parent=1 // pred_check_branch
      %107 = sbr.rel (0) target = $region37
    $region36: #{tpu_custom_call.1} parent=1 // pred_region
      _
    $region37: #{tpu_custom_call.1} parent=1 // pred_fallthru
      _
    // Predicated region
    $region38: #{tpu_custom_call.1} parent=1 // pred_check
      _
    $region39: #{tpu_custom_call.1} parent=1 // pred_check_branch
      %109 = sbr.rel (0) target = $region41
    $region40: #{tpu_custom_call.1} parent=1 // pred_region
      %111 = vsyncadd [#allocation12], 0
      %s112 = sshll.u32 %s9, 4
      %s113 = int_to_ptr.hbm [resolvable:$true] %s112
      %s114 = sshll.u32 [#allocation13], 4
      %s115 = int_to_ptr.vmem [resolvable:$true] %s114
      %120 = dma.hbm_to_vmem [thread:$0]  %s113, 1024, %s115, [#allocation12], 128, 128, 8
    $region41: #{tpu_custom_call.1} parent=1 // pred_fallthru
      _
    // Predicated region
    $region42: #{tpu_custom_call.1} parent=1 // pred_check
      _
    $region43: #{tpu_custom_call.1} parent=1 // pred_check_branch
      %122 = sbr.rel (0) target = $region45
    $region44: #{tpu_custom_call.1} parent=1 // pred_region
      _
    $region45: #{tpu_custom_call.1} parent=1 // pred_fallthru
      _
    // Predicated region
    $region46: #{tpu_custom_call.1} parent=1 // pred_check
      _
    $region47: #{tpu_custom_call.1} parent=1 // pred_check_branch
      %124 = sbr.rel (0) target = $region49
    $region48: #{tpu_custom_call.1} parent=1 // pred_region
      %126 = vsyncadd [#allocation15], 0
      %s127 = sshll.u32 %s11, 4
      %s128 = int_to_ptr.hbm [resolvable:$true] %s127
      %s129 = sshll.u32 [#allocation14], 4
      %s130 = int_to_ptr.vmem [resolvable:$true] %s129
      %135 = dma.hbm_to_vmem [thread:$0]  %s128, 768, %s130, [#allocation15], 128, 128, 8
    $region49: #{tpu_custom_call.1} parent=1 // pred_fallthru
      _
    // Predicated region
    $region50: #{tpu_custom_call.1} parent=1 // pred_check
      _
    $region51: #{tpu_custom_call.1} parent=1 // pred_check_branch
      %137 = sbr.rel (0) target = $region53
    $region52: #{tpu_custom_call.1} parent=1 // pred_region
      _
    $region53: #{tpu_custom_call.1} parent=1 // pred_fallthru
      _
    // Predicated region
    $region54: #{tpu_custom_call.1} parent=1 // pred_check
      _
    $region55: #{tpu_custom_call.1} parent=1 // pred_check_branch
      %139 = sbr.rel (0) target = $region57
    $region56: #{tpu_custom_call.1} parent=1 // pred_region
      %141 = dma.done [#allocation3], 2048
    $region57: #{tpu_custom_call.1} parent=1 // pred_fallthru
      _
    // Predicated region
    $region58: #{tpu_custom_call.1} parent=1 // pred_check
      _
    $region59: #{tpu_custom_call.1} parent=1 // pred_check_branch
      %143 = sbr.rel (0) target = $region61
    $region60: #{tpu_custom_call.1} parent=1 // pred_region
      %145 = dma.done [#allocation6], 256
    $region61: #{tpu_custom_call.1} parent=1 // pred_fallthru
      _
    // Predicated region
    $region62: #{tpu_custom_call.1} parent=1 // pred_check
      _
    $region63: #{tpu_custom_call.1} parent=1 // pred_check_branch
      %147 = sbr.rel (0) target = $region65
    $region64: #{tpu_custom_call.1} parent=1 // pred_region
      %149 = dma.done [#allocation6], 512
    $region65: #{tpu_custom_call.1} parent=1 // pred_fallthru
      _
    // Predicated region
    $region66: #{tpu_custom_call.1} parent=1 // pred_check
      _
    $region67: #{tpu_custom_call.1} parent=1 // pred_check_branch
      %151 = sbr.rel (0) target = $region69
    $region68: #{tpu_custom_call.1} parent=1 // pred_region
      %153 = dma.done [#allocation9], 1024
    $region69: #{tpu_custom_call.1} parent=1 // pred_fallthru
      _
    // Predicated region
    $region70: #{tpu_custom_call.1} parent=1 // pred_check
      _
    $region71: #{tpu_custom_call.1} parent=1 // pred_check_branch
      %155 = sbr.rel (0) target = $region73
    $region72: #{tpu_custom_call.1} parent=1 // pred_region
      %157 = dma.done [#allocation9], 256
    $region73: #{tpu_custom_call.1} parent=1 // pred_fallthru
      _
    // Predicated region
    $region74: #{tpu_custom_call.1} parent=1 // pred_check
      _
    $region75: #{tpu_custom_call.1} parent=1 // pred_check_branch
      %159 = sbr.rel (0) target = $region77
    $region76: #{tpu_custom_call.1} parent=1 // pred_region
      %161 = dma.done [#allocation12], 512
    $region77: #{tpu_custom_call.1} parent=1 // pred_fallthru
      _
    // Predicated region
    $region78: #{tpu_custom_call.1} parent=1 // pred_check
      _
    $region79: #{tpu_custom_call.1} parent=1 // pred_check_branch
      %163 = sbr.rel (0) target = $region81
    $region80: #{tpu_custom_call.1} parent=1 // pred_region
      %165 = dma.done [#allocation12], 1024
    $region81: #{tpu_custom_call.1} parent=1 // pred_fallthru
      _
    // Predicated region
    $region82: #{tpu_custom_call.1} parent=1 // pred_check
      _
    $region83: #{tpu_custom_call.1} parent=1 // pred_check_branch
      %167 = sbr.rel (0) target = $region85
    $region84: #{tpu_custom_call.1} parent=1 // pred_region
      %169 = dma.done [#allocation15], 768
    $region85: #{tpu_custom_call.1} parent=1 // pred_fallthru
      _
    %v170 = vld [vmem:[#allocation2] sm:$0xff]
    %v171 = vld [vmem:[#allocation2 + $0x8] sm:$0xff]
    %v172 = vld [vmem:[#allocation2 + $0x10] sm:$0xff]
    %v173 = vld [vmem:[#allocation2 + $0x18] sm:$0xff]
    %v174 = vld [vmem:[#allocation2 + $0x20] sm:$0xff]
    %v175 = vld [vmem:[#allocation2 + $0x28] sm:$0xff]
    %v176 = vld [vmem:[#allocation2 + $0x30] sm:$0xff]
    %v177 = vld [vmem:[#allocation2 + $0x38] sm:$0xff]
    %v178 = vld [vmem:[#allocation2 + $0x40] sm:$0xff]
    %v179 = vld [vmem:[#allocation2 + $0x48] sm:$0xff]
    %v180 = vld [vmem:[#allocation2 + $0x50] sm:$0xff]
    %v181 = vld [vmem:[#allocation2 + $0x58] sm:$0xff]
    %v182 = vld [vmem:[#allocation2 + $0x60] sm:$0xff]
    %v183 = vld [vmem:[#allocation2 + $0x68] sm:$0xff]
    %v184 = vld [vmem:[#allocation2 + $0x70] sm:$0xff]
    %v185 = vld [vmem:[#allocation2 + $0x78] sm:$0xff]
    %v186 = vld [vmem:[#allocation7] sm:$0xff]
    %v187 = vld [vmem:[#allocation7 + $0x8] sm:$0xff]
    %v188 = vld [vmem:[#allocation7 + $0x10] sm:$0xff]
    %v189 = vld [vmem:[#allocation7 + $0x18] sm:$0xff]
    %v190 = vld [vmem:[#allocation8] sm:$0xff]
    %v191 = vld [vmem:[#allocation8 + $0x8] sm:$0xff]
    %v192 = vld [vmem:[#allocation8 + $0x10] sm:$0xff]
    %v193 = vld [vmem:[#allocation8 + $0x18] sm:$0xff]
    %v194 = vld [vmem:[#allocation8 + $0x20] sm:$0xff]
    %v195 = vld [vmem:[#allocation8 + $0x28] sm:$0xff]
    %v196 = vld [vmem:[#allocation8 + $0x30] sm:$0xff]
    %v197 = vld [vmem:[#allocation8 + $0x38] sm:$0xff]
    %v198 = vld [vmem:[#allocation11] sm:$0xff]
    %v199 = vld [vmem:[#allocation11 + $0x8] sm:$0xff]
    %v200 = vld [vmem:[#allocation11 + $0x10] sm:$0xff]
    %v201 = vld [vmem:[#allocation11 + $0x18] sm:$0xff]
    %v202 = vld [vmem:[#allocation13] sm:$0xff]
    %v203 = vld [vmem:[#allocation13 + $0x8] sm:$0xff]
    %v204 = vld [vmem:[#allocation13 + $0x10] sm:$0xff]
    %v205 = vld [vmem:[#allocation13 + $0x18] sm:$0xff]
    %v206 = vld [vmem:[#allocation13 + $0x20] sm:$0xff]
    %v207 = vld [vmem:[#allocation13 + $0x28] sm:$0xff]
    %v208 = vld [vmem:[#allocation13 + $0x30] sm:$0xff]
    %v209 = vld [vmem:[#allocation13 + $0x38] sm:$0xff]
    %v210 = vld [vmem:[#allocation14] sm:$0xff]
    %v211 = vld [vmem:[#allocation14 + $0x8] sm:$0xff]
    %v212 = vld [vmem:[#allocation14 + $0x10] sm:$0xff]
    %v213 = vld [vmem:[#allocation14 + $0x18] sm:$0xff]
    %v214 = vld [vmem:[#allocation14 + $0x20] sm:$0xff]
    %v215 = vld [vmem:[#allocation14 + $0x28] sm:$0xff]
    %v216 = vld [vmem:[%s5] sm:$0x1]
    %v218 = vperm.slane %v216, 0
    %v220 = vld [vmem:[%s10] sm:$0x1]
    %v222 = vperm.slane %v220, 0
    %v224 = vld [vmem:[%s12] sm:$0x1]
    %v226 = vperm.slane %v224, 0
    %v228 = vld [vmem:[#allocation5] sm:$0xff]
    %v229 = vld [vmem:[#allocation5 + $0x8] sm:$0xff]
    %vm230 = vcmask 130048
    %v232 = vsel %vm230, %v170, 0
    %v235 = vsel %vm230, %v171, 0
    %v238 = vsel %vm230, %v172, 0
    %v241 = vsel %vm230, %v173, 0
    %v244 = vsel %vm230, %v174, 0
    %v247 = vsel %vm230, %v175, 0
    %v250 = vsel %vm230, %v176, 0
    %v253 = vsel %vm230, %v177, 0
    %v256 = vsel %vm230, %v178, 0
    %v259 = vsel %vm230, %v179, 0
    %v262 = vsel %vm230, %v180, 0
    %v265 = vsel %vm230, %v181, 0
    %v268 = vsel %vm230, %v182, 0
    %v271 = vsel %vm230, %v183, 0
    %v274 = vsel %vm230, %v184, 0
    %v277 = vsel %vm230, %v185, 0
    %279 = vmatpush.msra.mxu0 0.0
    %280 = vmatpush.msra.mxu0 0.0
    %281 = vmatpush.msra.mxu0 0.0
    %282 = vmatpush.msra.mxu0 0.0
    %283 = vmatpush.msra.mxu0 0.0
    %284 = vmatpush.msra.mxu0 0.0
    %285 = vmatpush.msra.mxu0 0.0
    %286 = vmatpush.msra.mxu0 0.0
    %287 = vmatpush.msra.mxu0 0.0
    %288 = vmatpush.msra.mxu0 0.0
    %289 = vmatpush.msra.mxu0 0.0
    %290 = vmatpush.msra.mxu0 0.0
    %291 = vmatpush.msra.mxu0 0.0
    %292 = vmatpush.msra.mxu0 0.0
    %293 = vmatpush.msra.mxu0 %v229
    %294 = vmatpush.msra.mxu0 %v228
    %295 = vmatmul.f32.gmra.mxu0 %v232
    %v296 = vpop.f32.mrf.mxu0
    %v297 = vadd.f32 0.0, %v296
    %298 = vmatmul.f32.gmra.mxu0 %v235
    %v299 = vpop.f32.mrf.mxu0
    %v300 = vadd.f32 0.0, %v299
    %301 = vmatmul.f32.gmra.mxu0 %v238
    %v302 = vpop.f32.mrf.mxu0
    %v303 = vadd.f32 0.0, %v302
    %304 = vmatmul.f32.gmra.mxu0 %v241
    %v305 = vpop.f32.mrf.mxu0
    %v306 = vadd.f32 0.0, %v305
    %307 = vmatmul.f32.gmra.mxu0 %v244
    %v308 = vpop.f32.mrf.mxu0
    %v309 = vadd.f32 0.0, %v308
    %310 = vmatmul.f32.gmra.mxu0 %v247
    %v311 = vpop.f32.mrf.mxu0
    %v312 = vadd.f32 0.0, %v311
    %313 = vmatmul.f32.gmra.mxu0 %v250
    %v314 = vpop.f32.mrf.mxu0
    %v315 = vadd.f32 0.0, %v314
    %316 = vmatmul.f32.gmra.mxu0 %v253
    %v317 = vpop.f32.mrf.mxu0
    %v318 = vadd.f32 0.0, %v317
    %319 = vmatmul.f32.gmra.mxu0 %v256
    %v320 = vpop.f32.mrf.mxu0
    %v321 = vadd.f32 0.0, %v320
    %322 = vmatmul.f32.gmra.mxu0 %v259
    %v323 = vpop.f32.mrf.mxu0
    %v324 = vadd.f32 0.0, %v323
    %325 = vmatmul.f32.gmra.mxu0 %v262
    %v326 = vpop.f32.mrf.mxu0
    %v327 = vadd.f32 0.0, %v326
    %328 = vmatmul.f32.gmra.mxu0 %v265
    %v329 = vpop.f32.mrf.mxu0
    %v330 = vadd.f32 0.0, %v329
    %331 = vmatmul.f32.gmra.mxu0 %v268
    %v332 = vpop.f32.mrf.mxu0
    %v333 = vadd.f32 0.0, %v332
    %334 = vmatmul.f32.gmra.mxu0 %v271
    %v335 = vpop.f32.mrf.mxu0
    %v336 = vadd.f32 0.0, %v335
    %337 = vmatmul.f32.gmra.mxu0 %v274
    %v338 = vpop.f32.mrf.mxu0
    %v339 = vadd.f32 0.0, %v338
    %340 = vmatmul.f32.gmra.mxu0 %v277
    %v341 = vpop.f32.mrf.mxu0
    %v342 = vadd.f32 0.0, %v341
    %343 = vdwg.mxu0
    %v344 = vld [vmem:[%s3] sm:$0x1]
    %v346 = vperm.slane %v344, 0
    %v348 = vadd.f32 %v297, %v346
    %v349 = vadd.f32 %v300, %v346
    %v350 = vadd.f32 %v303, %v346
    %v351 = vadd.f32 %v306, %v346
    %v352 = vadd.f32 %v309, %v346
    %v353 = vadd.f32 %v312, %v346
    %v354 = vadd.f32 %v315, %v346
    %v355 = vadd.f32 %v318, %v346
    %v356 = vadd.f32 %v321, %v346
    %v357 = vadd.f32 %v324, %v346
    %v358 = vadd.f32 %v327, %v346
    %v359 = vadd.f32 %v330, %v346
    %v360 = vadd.f32 %v333, %v346
    %v361 = vadd.f32 %v336, %v346
    %v362 = vadd.f32 %v339, %v346
    %v363 = vadd.f32 %v342, %v346
    %vm364 = vcmask 261120
    %v366 = vsel %vm364, 0.0, 0
    %368 = vmatpush.msra.mxu0 0.0
    %369 = vmatpush.msra.mxu0 0.0
    %370 = vmatpush.msra.mxu0 0.0
    %371 = vmatpush.msra.mxu0 0.0
    %372 = vmatpush.msra.mxu0 0.0
    %373 = vmatpush.msra.mxu0 0.0
    %374 = vmatpush.msra.mxu0 0.0
    %375 = vmatpush.msra.mxu0 0.0
    %376 = vmatpush.msra.mxu0 0.0
    %377 = vmatpush.msra.mxu0 0.0
    %378 = vmatpush.msra.mxu0 0.0
    %379 = vmatpush.msra.mxu0 0.0
    %380 = vmatpush.msra.mxu0 %v189
    %381 = vmatpush.msra.mxu0 %v188
    %382 = vmatpush.msra.mxu0 %v187
    %383 = vmatpush.msra.mxu0 %v186
    %384 = vmatmul.f32.gmra.mxu0 %v366
    %v385 = vpop.f32.mrf.mxu0
    %v386 = vadd.f32 0.0, %v385
    %387 = vmatmul.f32.gmra.mxu0 %v366
    %v388 = vpop.f32.mrf.mxu0
    %v389 = vadd.f32 0.0, %v388
    %390 = vdwg.mxu0
    %v391 = vadd.f32 %v348, %v386
    %v392 = vadd.f32 %v349, %v389
    %v393 = vxor.u32 %v391, 2147483648
    %v394 = vxor.u32 %v392, 2147483648
    %v395 = vmul.f32 %v393, 1.442695
    %v396 = vpow.pop %v395
    %v397 = vmul.f32 %v394, 1.442695
    %v398 = vpow.pop %v397
    %v399 = vadd.f32 %v396, 1.0
    %v400 = vadd.f32 %v398, 1.0
    %v401 = vrcp.pop %v399
    %v402 = vmul.f32 %v399, %v401
    %v403 = vsub.f32 1.0, %v402
    %v404 = vmul.f32 %v401, %v403
    %v405 = vadd.f32 %v401, %v404
    %vm406 = vweird.f32 %v399
    %vm407 = vweird.f32 %v401
    %vm408 = vmor %vm406, %vm407
    %v409 = vsel %vm408, %v401, %v405
    %v410 = vand.u32 2147483647, %v399
    %vm411 = vcmp.eq.f32.partialorder %v410, 8.507059e+37
    %v412 = vand.u32 %v399, 2147483648
    %v413 = vor.u32 1.1754944e-38, %v412
    %v414 = vsel %vm411, %v413, %v409
    %v415 = vmul.f32 1.0, %v414
    %v416 = vrcp.pop %v400
    %v417 = vmul.f32 %v400, %v416
    %v418 = vsub.f32 1.0, %v417
    %v419 = vmul.f32 %v416, %v418
    %v420 = vadd.f32 %v416, %v419
    %vm421 = vweird.f32 %v400
    %vm422 = vweird.f32 %v416
    %vm423 = vmor %vm421, %vm422
    %v424 = vsel %vm423, %v416, %v420
    %v425 = vand.u32 2147483647, %v400
    %vm426 = vcmp.eq.f32.partialorder %v425, 8.507059e+37
    %v427 = vand.u32 %v400, 2147483648
    %v428 = vor.u32 1.1754944e-38, %v427
    %v429 = vsel %vm426, %v428, %v424
    %v430 = vmul.f32 1.0, %v429
    %v431 = vmul.f32 %v415, 2.0
    %v432 = vmul.f32 %v430, 2.0
    %v433 = vsub.f32 %v431, 1.0
    %v434 = vsub.f32 %v432, 1.0
    %v435 = vmul.f32 %v415, 0.0
    %v436 = vmul.f32 %v430, 0.0
    %439 = vrot.lane.b32.xlu0 %v433, 64
    %v440 = vpop.permute.xlu0 %439
    %441 = vrot.lane.b32.xlu0 %v434, 64
    %v442 = vpop.permute.xlu0 %441
    %v445 = vmul.f32 %v415, %v440
    %v446 = vmul.f32 %v430, %v442
    %449 = vrot.lane.b32.xlu0 %v445, 32
    %v450 = vpop.permute.xlu0 %449
    %451 = vrot.lane.b32.xlu0 %v446, 32
    %v452 = vpop.permute.xlu0 %451
    %v455 = vadd.f32 %v435, %v450
    %v456 = vadd.f32 %v436, %v452
    %v457 = vtanh.pop %v455
    %v458 = vtanh.pop %v456
    %461 = vrot.lane.b32.xlu0 %v457, 64
    %v462 = vpop.permute.xlu0 %461
    %463 = vrot.lane.b32.xlu0 %v458, 64
    %v464 = vpop.permute.xlu0 %463
    %v467 = vmul.f32 %v415, %v462
    %v468 = vmul.f32 %v430, %v464
    %471 = vrot.lane.b32.xlu0 %v467, 32
    %v472 = vpop.permute.xlu0 %471
    %473 = vrot.lane.b32.xlu0 %v468, 32
    %v474 = vpop.permute.xlu0 %473
    %v477 = vsel %vm364, %v472, 0.0
    %v478 = vsel %vm364, %v474, 0.0
    %vm479 = vcmask 523264
    %v481 = vsel %vm479, %v477, 0
    %v484 = vsel %vm479, %v478, 0
    %486 = vmatpush.msra.mxu0 0.0
    %487 = vmatpush.msra.mxu0 0.0
    %488 = vmatpush.msra.mxu0 0.0
    %489 = vmatpush.msra.mxu0 0.0
    %490 = vmatpush.msra.mxu0 0.0
    %491 = vmatpush.msra.mxu0 0.0
    %492 = vmatpush.msra.mxu0 0.0
    %493 = vmatpush.msra.mxu0 0.0
    %494 = vmatpush.msra.mxu0 %v197
    %495 = vmatpush.msra.mxu0 %v196
    %496 = vmatpush.msra.mxu0 %v195
    %497 = vmatpush.msra.mxu0 %v194
    %498 = vmatpush.msra.mxu0 %v193
    %499 = vmatpush.msra.mxu0 %v192
    %500 = vmatpush.msra.mxu0 %v191
    %501 = vmatpush.msra.mxu0 %v190
    %502 = vmatmul.f32.gmra.mxu0 %v481
    %v503 = vpop.f32.mrf.mxu0
    %v504 = vadd.f32 %v218, %v503
    %505 = vmatmul.f32.gmra.mxu0 %v484
    %v506 = vpop.f32.mrf.mxu0
    %v507 = vadd.f32 %v218, %v506
    %508 = vdwg.mxu0
    %v509 = vxor.u32 %v504, 2147483648
    %v510 = vxor.u32 %v507, 2147483648
    %v511 = vmul.f32 %v509, 1.442695
    %v512 = vpow.pop %v511
    %v513 = vmul.f32 %v510, 1.442695
    %v514 = vpow.pop %v513
    %v515 = vadd.f32 %v512, 1.0
    %v516 = vadd.f32 %v514, 1.0
    %v517 = vrcp.pop %v515
    %v518 = vmul.f32 %v515, %v517
    %v519 = vsub.f32 1.0, %v518
    %v520 = vmul.f32 %v517, %v519
    %v521 = vadd.f32 %v517, %v520
    %vm522 = vweird.f32 %v515
    %vm523 = vweird.f32 %v517
    %vm524 = vmor %vm522, %vm523
    %v525 = vsel %vm524, %v517, %v521
    %v526 = vand.u32 2147483647, %v515
    %vm527 = vcmp.eq.f32.partialorder %v526, 8.507059e+37
    %v528 = vand.u32 %v515, 2147483648
    %v529 = vor.u32 1.1754944e-38, %v528
    %v530 = vsel %vm527, %v529, %v525
    %v531 = vmul.f32 1.0, %v530
    %v532 = vrcp.pop %v516
    %v533 = vmul.f32 %v516, %v532
    %v534 = vsub.f32 1.0, %v533
    %v535 = vmul.f32 %v532, %v534
    %v536 = vadd.f32 %v532, %v535
    %vm537 = vweird.f32 %v516
    %vm538 = vweird.f32 %v532
    %vm539 = vmor %vm537, %vm538
    %v540 = vsel %vm539, %v532, %v536
    %v541 = vand.u32 2147483647, %v516
    %vm542 = vcmp.eq.f32.partialorder %v541, 8.507059e+37
    %v543 = vand.u32 %v516, 2147483648
    %v544 = vor.u32 1.1754944e-38, %v543
    %v545 = vsel %vm542, %v544, %v540
    %v546 = vmul.f32 1.0, %v545
    %v547 = vmul.f32 %v531, 2.0
    %v548 = vmul.f32 %v546, 2.0
    %v549 = vsub.f32 %v547, 1.0
    %v550 = vsub.f32 %v548, 1.0
    %v551 = vmul.f32 %v531, 0.0
    %v552 = vmul.f32 %v546, 0.0
    %555 = vrot.lane.b32.xlu0 %v549, 64
    %v556 = vpop.permute.xlu0 %555
    %557 = vrot.lane.b32.xlu0 %v550, 64
    %v558 = vpop.permute.xlu0 %557
    %v561 = vmul.f32 %v531, %v556
    %v562 = vmul.f32 %v546, %v558
    %565 = vrot.lane.b32.xlu0 %v561, 32
    %v566 = vpop.permute.xlu0 %565
    %567 = vrot.lane.b32.xlu0 %v562, 32
    %v568 = vpop.permute.xlu0 %567
    %v571 = vadd.f32 %v551, %v566
    %v572 = vadd.f32 %v552, %v568
    %v573 = vtanh.pop %v571
    %v574 = vtanh.pop %v572
    %577 = vrot.lane.b32.xlu0 %v573, 64
    %v578 = vpop.permute.xlu0 %577
    %579 = vrot.lane.b32.xlu0 %v574, 64
    %v580 = vpop.permute.xlu0 %579
    %v583 = vmul.f32 %v531, %v578
    %v584 = vmul.f32 %v546, %v580
    %v585 = vsel %vm364, %v472, 0
    %v587 = vsel %vm364, %v474, 0
    %589 = vmatpush.msra.mxu0 0.0
    %590 = vmatpush.msra.mxu0 0.0
    %591 = vmatpush.msra.mxu0 0.0
    %592 = vmatpush.msra.mxu0 0.0
    %593 = vmatpush.msra.mxu0 0.0
    %594 = vmatpush.msra.mxu0 0.0
    %595 = vmatpush.msra.mxu0 0.0
    %596 = vmatpush.msra.mxu0 0.0
    %597 = vmatpush.msra.mxu0 0.0
    %598 = vmatpush.msra.mxu0 0.0
    %599 = vmatpush.msra.mxu0 0.0
    %600 = vmatpush.msra.mxu0 0.0
    %601 = vmatpush.msra.mxu0 %v189
    %602 = vmatpush.msra.mxu0 %v188
    %603 = vmatpush.msra.mxu0 %v187
    %604 = vmatpush.msra.mxu0 %v186
    %605 = vmatmul.f32.gmra.mxu0 %v585
    %v606 = vpop.f32.mrf.mxu0
    %v607 = vadd.f32 0.0, %v606
    %608 = vmatmul.f32.gmra.mxu0 %v587
    %v609 = vpop.f32.mrf.mxu0
    %v610 = vadd.f32 0.0, %v609
    %611 = vdwg.mxu0
    %v612 = vadd.f32 %v350, %v607
    %v613 = vadd.f32 %v351, %v610
    %v614 = vxor.u32 %v612, 2147483648
    %v615 = vxor.u32 %v613, 2147483648
    %v616 = vmul.f32 %v614, 1.442695
    %v617 = vpow.pop %v616
    %v618 = vmul.f32 %v615, 1.442695
    %v619 = vpow.pop %v618
    %v620 = vadd.f32 %v617, 1.0
    %v621 = vadd.f32 %v619, 1.0
    %v622 = vrcp.pop %v620
    %v623 = vmul.f32 %v620, %v622
    %v624 = vsub.f32 1.0, %v623
    %v625 = vmul.f32 %v622, %v624
    %v626 = vadd.f32 %v622, %v625
    %vm627 = vweird.f32 %v620
    %vm628 = vweird.f32 %v622
    %vm629 = vmor %vm627, %vm628
    %v630 = vsel %vm629, %v622, %v626
    %v631 = vand.u32 2147483647, %v620
    %vm632 = vcmp.eq.f32.partialorder %v631, 8.507059e+37
    %v633 = vand.u32 %v620, 2147483648
    %v634 = vor.u32 1.1754944e-38, %v633
    %v635 = vsel %vm632, %v634, %v630
    %v636 = vmul.f32 1.0, %v635
    %v637 = vrcp.pop %v621
    %v638 = vmul.f32 %v621, %v637
    %v639 = vsub.f32 1.0, %v638
    %v640 = vmul.f32 %v637, %v639
    %v641 = vadd.f32 %v637, %v640
    %vm642 = vweird.f32 %v621
    %vm643 = vweird.f32 %v637
    %vm644 = vmor %vm642, %vm643
    %v645 = vsel %vm644, %v637, %v641
    %v646 = vand.u32 2147483647, %v621
    %vm647 = vcmp.eq.f32.partialorder %v646, 8.507059e+37
    %v648 = vand.u32 %v621, 2147483648
    %v649 = vor.u32 1.1754944e-38, %v648
    %v650 = vsel %vm647, %v649, %v645
    %v651 = vmul.f32 1.0, %v650
    %v652 = vmul.f32 %v636, 2.0
    %v653 = vmul.f32 %v651, 2.0
    %v654 = vsub.f32 %v652, 1.0
    %v655 = vsub.f32 %v653, 1.0
    %v656 = vmul.f32 %v636, %v455
    %v657 = vmul.f32 %v651, %v456
    %660 = vrot.lane.b32.xlu0 %v654, 64
    %v661 = vpop.permute.xlu0 %660
    %662 = vrot.lane.b32.xlu0 %v655, 64
    %v663 = vpop.permute.xlu0 %662
    %v666 = vmul.f32 %v636, %v661
    %v667 = vmul.f32 %v651, %v663
    %670 = vrot.lane.b32.xlu0 %v666, 32
    %v671 = vpop.permute.xlu0 %670
    %672 = vrot.lane.b32.xlu0 %v667, 32
    %v673 = vpop.permute.xlu0 %672
    %v676 = vadd.f32 %v656, %v671
    %v677 = vadd.f32 %v657, %v673
    %v678 = vtanh.pop %v676
    %v679 = vtanh.pop %v677
    %682 = vrot.lane.b32.xlu0 %v678, 64
    %v683 = vpop.permute.xlu0 %682
    %684 = vrot.lane.b32.xlu0 %v679, 64
    %v685 = vpop.permute.xlu0 %684
    %v688 = vmul.f32 %v636, %v683
    %v689 = vmul.f32 %v651, %v685
    %692 = vrot.lane.b32.xlu0 %v688, 32
    %v693 = vpop.permute.xlu0 %692
    %694 = vrot.lane.b32.xlu0 %v689, 32
    %v695 = vpop.permute.xlu0 %694
    %700 = vrot.lane.b32.xlu0 %v583, 64
    %v701 = vpop.permute.xlu0 %700
    %702 = vrot.lane.b32.xlu0 %v584, 64
    %v703 = vpop.permute.xlu0 %702
    %v706 = vsel %vm364, %v693, %v701
    %v707 = vsel %vm364, %v695, %v703
    %v709 = vsel %vm479, %v706, 0
    %v712 = vsel %vm479, %v707, 0
    %714 = vmatpush.msra.mxu0 0.0
    %715 = vmatpush.msra.mxu0 0.0
    %716 = vmatpush.msra.mxu0 0.0
    %717 = vmatpush.msra.mxu0 0.0
    %718 = vmatpush.msra.mxu0 0.0
    %719 = vmatpush.msra.mxu0 0.0
    %720 = vmatpush.msra.mxu0 0.0
    %721 = vmatpush.msra.mxu0 0.0
    %722 = vmatpush.msra.mxu0 %v197
    %723 = vmatpush.msra.mxu0 %v196
    %724 = vmatpush.msra.mxu0 %v195
    %725 = vmatpush.msra.mxu0 %v194
    %726 = vmatpush.msra.mxu0 %v193
    %727 = vmatpush.msra.mxu0 %v192
    %728 = vmatpush.msra.mxu0 %v191
    %729 = vmatpush.msra.mxu0 %v190
    %730 = vmatmul.f32.gmra.mxu0 %v709
    %v731 = vpop.f32.mrf.mxu0
    %v732 = vadd.f32 %v218, %v731
    %733 = vmatmul.f32.gmra.mxu0 %v712
    %v734 = vpop.f32.mrf.mxu0
    %v735 = vadd.f32 %v218, %v734
    %736 = vdwg.mxu0
    %v737 = vxor.u32 %v732, 2147483648
    %v738 = vxor.u32 %v735, 2147483648
    %v739 = vmul.f32 %v737, 1.442695
    %v740 = vpow.pop %v739
    %v741 = vmul.f32 %v738, 1.442695
    %v742 = vpow.pop %v741
    %v743 = vadd.f32 %v740, 1.0
    %v744 = vadd.f32 %v742, 1.0
    %v745 = vrcp.pop %v743
    %v746 = vmul.f32 %v743, %v745
    %v747 = vsub.f32 1.0, %v746
    %v748 = vmul.f32 %v745, %v747
    %v749 = vadd.f32 %v745, %v748
    %vm750 = vweird.f32 %v743
    %vm751 = vweird.f32 %v745
    %vm752 = vmor %vm750, %vm751
    %v753 = vsel %vm752, %v745, %v749
    %v754 = vand.u32 2147483647, %v743
    %vm755 = vcmp.eq.f32.partialorder %v754, 8.507059e+37
    %v756 = vand.u32 %v743, 2147483648
    %v757 = vor.u32 1.1754944e-38, %v756
    %v758 = vsel %vm755, %v757, %v753
    %v759 = vmul.f32 1.0, %v758
    %v760 = vrcp.pop %v744
    %v761 = vmul.f32 %v744, %v760
    %v762 = vsub.f32 1.0, %v761
    %v763 = vmul.f32 %v760, %v762
    %v764 = vadd.f32 %v760, %v763
    %vm765 = vweird.f32 %v744
    %vm766 = vweird.f32 %v760
    %vm767 = vmor %vm765, %vm766
    %v768 = vsel %vm767, %v760, %v764
    %v769 = vand.u32 2147483647, %v744
    %vm770 = vcmp.eq.f32.partialorder %v769, 8.507059e+37
    %v771 = vand.u32 %v744, 2147483648
    %v772 = vor.u32 1.1754944e-38, %v771
    %v773 = vsel %vm770, %v772, %v768
    %v774 = vmul.f32 1.0, %v773
    %v775 = vmul.f32 %v759, 2.0
    %v776 = vmul.f32 %v774, 2.0
    %v777 = vsub.f32 %v775, 1.0
    %v778 = vsub.f32 %v776, 1.0
    %v779 = vmul.f32 %v759, %v571
    %v780 = vmul.f32 %v774, %v572
    %783 = vrot.lane.b32.xlu0 %v777, 64
    %v784 = vpop.permute.xlu0 %783
    %785 = vrot.lane.b32.xlu0 %v778, 64
    %v786 = vpop.permute.xlu0 %785
    %v789 = vmul.f32 %v759, %v784
    %v790 = vmul.f32 %v774, %v786
    %793 = vrot.lane.b32.xlu0 %v789, 32
    %v794 = vpop.permute.xlu0 %793
    %795 = vrot.lane.b32.xlu0 %v790, 32
    %v796 = vpop.permute.xlu0 %795
    %v799 = vadd.f32 %v779, %v794
    %v800 = vadd.f32 %v780, %v796
    %v801 = vtanh.pop %v799
    %v802 = vtanh.pop %v800
    %805 = vrot.lane.b32.xlu0 %v801, 64
    %v806 = vpop.permute.xlu0 %805
    %807 = vrot.lane.b32.xlu0 %v802, 64
    %v808 = vpop.permute.xlu0 %807
    %v811 = vmul.f32 %v759, %v806
    %v812 = vmul.f32 %v774, %v808
    %v813 = vsel %vm364, %v693, 0
    %v815 = vsel %vm364, %v695, 0
    %817 = vmatpush.msra.mxu0 0.0
    %818 = vmatpush.msra.mxu0 0.0
    %819 = vmatpush.msra.mxu0 0.0
    %820 = vmatpush.msra.mxu0 0.0
    %821 = vmatpush.msra.mxu0 0.0
    %822 = vmatpush.msra.mxu0 0.0
    %823 = vmatpush.msra.mxu0 0.0
    %824 = vmatpush.msra.mxu0 0.0
    %825 = vmatpush.msra.mxu0 0.0
    %826 = vmatpush.msra.mxu0 0.0
    %827 = vmatpush.msra.mxu0 0.0
    %828 = vmatpush.msra.mxu0 0.0
    %829 = vmatpush.msra.mxu0 %v189
    %830 = vmatpush.msra.mxu0 %v188
    %831 = vmatpush.msra.mxu0 %v187
    %832 = vmatpush.msra.mxu0 %v186
    %833 = vmatmul.f32.gmra.mxu0 %v813
    %v834 = vpop.f32.mrf.mxu0
    %v835 = vadd.f32 0.0, %v834
    %836 = vmatmul.f32.gmra.mxu0 %v815
    %v837 = vpop.f32.mrf.mxu0
    %v838 = vadd.f32 0.0, %v837
    %839 = vdwg.mxu0
    %v840 = vadd.f32 %v352, %v835
    %v841 = vadd.f32 %v353, %v838
    %v842 = vxor.u32 %v840, 2147483648
    %v843 = vxor.u32 %v841, 2147483648
    %v844 = vmul.f32 %v842, 1.442695
    %v845 = vpow.pop %v844
    %v846 = vmul.f32 %v843, 1.442695
    %v847 = vpow.pop %v846
    %v848 = vadd.f32 %v845, 1.0
    %v849 = vadd.f32 %v847, 1.0
    %v850 = vrcp.pop %v848
    %v851 = vmul.f32 %v848, %v850
    %v852 = vsub.f32 1.0, %v851
    %v853 = vmul.f32 %v850, %v852
    %v854 = vadd.f32 %v850, %v853
    %vm855 = vweird.f32 %v848
    %vm856 = vweird.f32 %v850
    %vm857 = vmor %vm855, %vm856
    %v858 = vsel %vm857, %v850, %v854
    %v859 = vand.u32 2147483647, %v848
    %vm860 = vcmp.eq.f32.partialorder %v859, 8.507059e+37
    %v861 = vand.u32 %v848, 2147483648
    %v862 = vor.u32 1.1754944e-38, %v861
    %v863 = vsel %vm860, %v862, %v858
    %v864 = vmul.f32 1.0, %v863
    %v865 = vrcp.pop %v849
    %v866 = vmul.f32 %v849, %v865
    %v867 = vsub.f32 1.0, %v866
    %v868 = vmul.f32 %v865, %v867
    %v869 = vadd.f32 %v865, %v868
    %vm870 = vweird.f32 %v849
    %vm871 = vweird.f32 %v865
    %vm872 = vmor %vm870, %vm871
    %v873 = vsel %vm872, %v865, %v869
    %v874 = vand.u32 2147483647, %v849
    %vm875 = vcmp.eq.f32.partialorder %v874, 8.507059e+37
    %v876 = vand.u32 %v849, 2147483648
    %v877 = vor.u32 1.1754944e-38, %v876
    %v878 = vsel %vm875, %v877, %v873
    %v879 = vmul.f32 1.0, %v878
    %v880 = vmul.f32 %v864, 2.0
    %v881 = vmul.f32 %v879, 2.0
    %v882 = vsub.f32 %v880, 1.0
    %v883 = vsub.f32 %v881, 1.0
    %v884 = vmul.f32 %v864, %v676
    %v885 = vmul.f32 %v879, %v677
    %888 = vrot.lane.b32.xlu0 %v882, 64
    %v889 = vpop.permute.xlu0 %888
    %890 = vrot.lane.b32.xlu0 %v883, 64
    %v891 = vpop.permute.xlu0 %890
    %v894 = vmul.f32 %v864, %v889
    %v895 = vmul.f32 %v879, %v891
    %898 = vrot.lane.b32.xlu0 %v894, 32
    %v899 = vpop.permute.xlu0 %898
    %900 = vrot.lane.b32.xlu0 %v895, 32
    %v901 = vpop.permute.xlu0 %900
    %v904 = vadd.f32 %v884, %v899
    %v905 = vadd.f32 %v885, %v901
    %v906 = vtanh.pop %v904
    %v907 = vtanh.pop %v905
    %910 = vrot.lane.b32.xlu0 %v906, 64
    %v911 = vpop.permute.xlu0 %910
    %912 = vrot.lane.b32.xlu0 %v907, 64
    %v913 = vpop.permute.xlu0 %912
    %v916 = vmul.f32 %v864, %v911
    %v917 = vmul.f32 %v879, %v913
    %920 = vrot.lane.b32.xlu0 %v916, 32
    %v921 = vpop.permute.xlu0 %920
    %922 = vrot.lane.b32.xlu0 %v917, 32
    %v923 = vpop.permute.xlu0 %922
    %928 = vrot.lane.b32.xlu0 %v811, 64
    %v929 = vpop.permute.xlu0 %928
    %930 = vrot.lane.b32.xlu0 %v812, 64
    %v931 = vpop.permute.xlu0 %930
    %v934 = vsel %vm364, %v921, %v929
    %v935 = vsel %vm364, %v923, %v931
    %v937 = vsel %vm479, %v934, 0
    %v940 = vsel %vm479, %v935, 0
    %942 = vmatpush.msra.mxu0 0.0
    %943 = vmatpush.msra.mxu0 0.0
    %944 = vmatpush.msra.mxu0 0.0
    %945 = vmatpush.msra.mxu0 0.0
    %946 = vmatpush.msra.mxu0 0.0
    %947 = vmatpush.msra.mxu0 0.0
    %948 = vmatpush.msra.mxu0 0.0
    %949 = vmatpush.msra.mxu0 0.0
    %950 = vmatpush.msra.mxu0 %v197
    %951 = vmatpush.msra.mxu0 %v196
    %952 = vmatpush.msra.mxu0 %v195
    %953 = vmatpush.msra.mxu0 %v194
    %954 = vmatpush.msra.mxu0 %v193
    %955 = vmatpush.msra.mxu0 %v192
    %956 = vmatpush.msra.mxu0 %v191
    %957 = vmatpush.msra.mxu0 %v190
    %958 = vmatmul.f32.gmra.mxu0 %v937
    %v959 = vpop.f32.mrf.mxu0
    %v960 = vadd.f32 %v218, %v959
    %961 = vmatmul.f32.gmra.mxu0 %v940
    %v962 = vpop.f32.mrf.mxu0
    %v963 = vadd.f32 %v218, %v962
    %964 = vdwg.mxu0
    %v965 = vxor.u32 %v960, 2147483648
    %v966 = vxor.u32 %v963, 2147483648
    %v967 = vmul.f32 %v965, 1.442695
    %v968 = vpow.pop %v967
    %v969 = vmul.f32 %v966, 1.442695
    %v970 = vpow.pop %v969
    %v971 = vadd.f32 %v968, 1.0
    %v972 = vadd.f32 %v970, 1.0
    %v973 = vrcp.pop %v971
    %v974 = vmul.f32 %v971, %v973
    %v975 = vsub.f32 1.0, %v974
    %v976 = vmul.f32 %v973, %v975
    %v977 = vadd.f32 %v973, %v976
    %vm978 = vweird.f32 %v971
    %vm979 = vweird.f32 %v973
    %vm980 = vmor %vm978, %vm979
    %v981 = vsel %vm980, %v973, %v977
    %v982 = vand.u32 2147483647, %v971
    %vm983 = vcmp.eq.f32.partialorder %v982, 8.507059e+37
    %v984 = vand.u32 %v971, 2147483648
    %v985 = vor.u32 1.1754944e-38, %v984
    %v986 = vsel %vm983, %v985, %v981
    %v987 = vmul.f32 1.0, %v986
    %v988 = vrcp.pop %v972
    %v989 = vmul.f32 %v972, %v988
    %v990 = vsub.f32 1.0, %v989
    %v991 = vmul.f32 %v988, %v990
    %v992 = vadd.f32 %v988, %v991
    %vm993 = vweird.f32 %v972
    %vm994 = vweird.f32 %v988
    %vm995 = vmor %vm993, %vm994
    %v996 = vsel %vm995, %v988, %v992
    %v997 = vand.u32 2147483647, %v972
    %vm998 = vcmp.eq.f32.partialorder %v997, 8.507059e+37
    %v999 = vand.u32 %v972, 2147483648
    %v1000 = vor.u32 1.1754944e-38, %v999
    %v1001 = vsel %vm998, %v1000, %v996
    %v1002 = vmul.f32 1.0, %v1001
    %v1003 = vmul.f32 %v987, 2.0
    %v1004 = vmul.f32 %v1002, 2.0
    %v1005 = vsub.f32 %v1003, 1.0
    %v1006 = vsub.f32 %v1004, 1.0
    %v1007 = vmul.f32 %v987, %v799
    %v1008 = vmul.f32 %v1002, %v800
    %1011 = vrot.lane.b32.xlu0 %v1005, 64
    %v1012 = vpop.permute.xlu0 %1011
    %1013 = vrot.lane.b32.xlu0 %v1006, 64
    %v1014 = vpop.permute.xlu0 %1013
    %v1017 = vmul.f32 %v987, %v1012
    %v1018 = vmul.f32 %v1002, %v1014
    %1021 = vrot.lane.b32.xlu0 %v1017, 32
    %v1022 = vpop.permute.xlu0 %1021
    %1023 = vrot.lane.b32.xlu0 %v1018, 32
    %v1024 = vpop.permute.xlu0 %1023
    %v1027 = vadd.f32 %v1007, %v1022
    %v1028 = vadd.f32 %v1008, %v1024
    %v1029 = vtanh.pop %v1027
    %v1030 = vtanh.pop %v1028
    %1033 = vrot.lane.b32.xlu0 %v1029, 64
    %v1034 = vpop.permute.xlu0 %1033
    %1035 = vrot.lane.b32.xlu0 %v1030, 64
    %v1036 = vpop.permute.xlu0 %1035
    %v1039 = vmul.f32 %v987, %v1034
    %v1040 = vmul.f32 %v1002, %v1036
    %v1041 = vsel %vm364, %v921, 0
    %v1043 = vsel %vm364, %v923, 0
    %1045 = vmatpush.msra.mxu0 0.0
    %1046 = vmatpush.msra.mxu0 0.0
    %1047 = vmatpush.msra.mxu0 0.0
    %1048 = vmatpush.msra.mxu0 0.0
    %1049 = vmatpush.msra.mxu0 0.0
    %1050 = vmatpush.msra.mxu0 0.0
    %1051 = vmatpush.msra.mxu0 0.0
    %1052 = vmatpush.msra.mxu0 0.0
    %1053 = vmatpush.msra.mxu0 0.0
    %1054 = vmatpush.msra.mxu0 0.0
    %1055 = vmatpush.msra.mxu0 0.0
    %1056 = vmatpush.msra.mxu0 0.0
    %1057 = vmatpush.msra.mxu0 %v189
    %1058 = vmatpush.msra.mxu0 %v188
    %1059 = vmatpush.msra.mxu0 %v187
    %1060 = vmatpush.msra.mxu0 %v186
    %1061 = vmatmul.f32.gmra.mxu0 %v1041
    %v1062 = vpop.f32.mrf.mxu0
    %v1063 = vadd.f32 0.0, %v1062
    %1064 = vmatmul.f32.gmra.mxu0 %v1043
    %v1065 = vpop.f32.mrf.mxu0
    %v1066 = vadd.f32 0.0, %v1065
    %1067 = vdwg.mxu0
    %v1068 = vadd.f32 %v354, %v1063
    %v1069 = vadd.f32 %v355, %v1066
    %v1070 = vxor.u32 %v1068, 2147483648
    %v1071 = vxor.u32 %v1069, 2147483648
    %v1072 = vmul.f32 %v1070, 1.442695
    %v1073 = vpow.pop %v1072
    %v1074 = vmul.f32 %v1071, 1.442695
    %v1075 = vpow.pop %v1074
    %v1076 = vadd.f32 %v1073, 1.0
    %v1077 = vadd.f32 %v1075, 1.0
    %v1078 = vrcp.pop %v1076
    %v1079 = vmul.f32 %v1076, %v1078
    %v1080 = vsub.f32 1.0, %v1079
    %v1081 = vmul.f32 %v1078, %v1080
    %v1082 = vadd.f32 %v1078, %v1081
    %vm1083 = vweird.f32 %v1076
    %vm1084 = vweird.f32 %v1078
    %vm1085 = vmor %vm1083, %vm1084
    %v1086 = vsel %vm1085, %v1078, %v1082
    %v1087 = vand.u32 2147483647, %v1076
    %vm1088 = vcmp.eq.f32.partialorder %v1087, 8.507059e+37
    %v1089 = vand.u32 %v1076, 2147483648
    %v1090 = vor.u32 1.1754944e-38, %v1089
    %v1091 = vsel %vm1088, %v1090, %v1086
    %v1092 = vmul.f32 1.0, %v1091
    %v1093 = vrcp.pop %v1077
    %v1094 = vmul.f32 %v1077, %v1093
    %v1095 = vsub.f32 1.0, %v1094
    %v1096 = vmul.f32 %v1093, %v1095
    %v1097 = vadd.f32 %v1093, %v1096
    %vm1098 = vweird.f32 %v1077
    %vm1099 = vweird.f32 %v1093
    %vm1100 = vmor %vm1098, %vm1099
    %v1101 = vsel %vm1100, %v1093, %v1097
    %v1102 = vand.u32 2147483647, %v1077
    %vm1103 = vcmp.eq.f32.partialorder %v1102, 8.507059e+37
    %v1104 = vand.u32 %v1077, 2147483648
    %v1105 = vor.u32 1.1754944e-38, %v1104
    %v1106 = vsel %vm1103, %v1105, %v1101
    %v1107 = vmul.f32 1.0, %v1106
    %v1108 = vmul.f32 %v1092, 2.0
    %v1109 = vmul.f32 %v1107, 2.0
    %v1110 = vsub.f32 %v1108, 1.0
    %v1111 = vsub.f32 %v1109, 1.0
    %v1112 = vmul.f32 %v1092, %v904
    %v1113 = vmul.f32 %v1107, %v905
    %1116 = vrot.lane.b32.xlu0 %v1110, 64
    %v1117 = vpop.permute.xlu0 %1116
    %1118 = vrot.lane.b32.xlu0 %v1111, 64
    %v1119 = vpop.permute.xlu0 %1118
    %v1122 = vmul.f32 %v1092, %v1117
    %v1123 = vmul.f32 %v1107, %v1119
    %1126 = vrot.lane.b32.xlu0 %v1122, 32
    %v1127 = vpop.permute.xlu0 %1126
    %1128 = vrot.lane.b32.xlu0 %v1123, 32
    %v1129 = vpop.permute.xlu0 %1128
    %v1132 = vadd.f32 %v1112, %v1127
    %v1133 = vadd.f32 %v1113, %v1129
    %v1134 = vtanh.pop %v1132
    %v1135 = vtanh.pop %v1133
    %1138 = vrot.lane.b32.xlu0 %v1134, 64
    %v1139 = vpop.permute.xlu0 %1138
    %1140 = vrot.lane.b32.xlu0 %v1135, 64
    %v1141 = vpop.permute.xlu0 %1140
    %v1144 = vmul.f32 %v1092, %v1139
    %v1145 = vmul.f32 %v1107, %v1141
    %1148 = vrot.lane.b32.xlu0 %v1144, 32
    %v1149 = vpop.permute.xlu0 %1148
    %1150 = vrot.lane.b32.xlu0 %v1145, 32
    %v1151 = vpop.permute.xlu0 %1150
    %1156 = vrot.lane.b32.xlu0 %v1039, 64
    %v1157 = vpop.permute.xlu0 %1156
    %1158 = vrot.lane.b32.xlu0 %v1040, 64
    %v1159 = vpop.permute.xlu0 %1158
    %v1162 = vsel %vm364, %v1149, %v1157
    %v1163 = vsel %vm364, %v1151, %v1159
    %v1165 = vsel %vm479, %v1162, 0
    %v1168 = vsel %vm479, %v1163, 0
    %1170 = vmatpush.msra.mxu0 0.0
    %1171 = vmatpush.msra.mxu0 0.0
    %1172 = vmatpush.msra.mxu0 0.0
    %1173 = vmatpush.msra.mxu0 0.0
    %1174 = vmatpush.msra.mxu0 0.0
    %1175 = vmatpush.msra.mxu0 0.0
    %1176 = vmatpush.msra.mxu0 0.0
    %1177 = vmatpush.msra.mxu0 0.0
    %1178 = vmatpush.msra.mxu0 %v197
    %1179 = vmatpush.msra.mxu0 %v196
    %1180 = vmatpush.msra.mxu0 %v195
    %1181 = vmatpush.msra.mxu0 %v194
    %1182 = vmatpush.msra.mxu0 %v193
    %1183 = vmatpush.msra.mxu0 %v192
    %1184 = vmatpush.msra.mxu0 %v191
    %1185 = vmatpush.msra.mxu0 %v190
    %1186 = vmatmul.f32.gmra.mxu0 %v1165
    %v1187 = vpop.f32.mrf.mxu0
    %v1188 = vadd.f32 %v218, %v1187
    %1189 = vmatmul.f32.gmra.mxu0 %v1168
    %v1190 = vpop.f32.mrf.mxu0
    %v1191 = vadd.f32 %v218, %v1190
    %1192 = vdwg.mxu0
    %v1193 = vxor.u32 %v1188, 2147483648
    %v1194 = vxor.u32 %v1191, 2147483648
    %v1195 = vmul.f32 %v1193, 1.442695
    %v1196 = vpow.pop %v1195
    %v1197 = vmul.f32 %v1194, 1.442695
    %v1198 = vpow.pop %v1197
    %v1199 = vadd.f32 %v1196, 1.0
    %v1200 = vadd.f32 %v1198, 1.0
    %v1201 = vrcp.pop %v1199
    %v1202 = vmul.f32 %v1199, %v1201
    %v1203 = vsub.f32 1.0, %v1202
    %v1204 = vmul.f32 %v1201, %v1203
    %v1205 = vadd.f32 %v1201, %v1204
    %vm1206 = vweird.f32 %v1199
    %vm1207 = vweird.f32 %v1201
    %vm1208 = vmor %vm1206, %vm1207
    %v1209 = vsel %vm1208, %v1201, %v1205
    %v1210 = vand.u32 2147483647, %v1199
    %vm1211 = vcmp.eq.f32.partialorder %v1210, 8.507059e+37
    %v1212 = vand.u32 %v1199, 2147483648
    %v1213 = vor.u32 1.1754944e-38, %v1212
    %v1214 = vsel %vm1211, %v1213, %v1209
    %v1215 = vmul.f32 1.0, %v1214
    %v1216 = vrcp.pop %v1200
    %v1217 = vmul.f32 %v1200, %v1216
    %v1218 = vsub.f32 1.0, %v1217
    %v1219 = vmul.f32 %v1216, %v1218
    %v1220 = vadd.f32 %v1216, %v1219
    %vm1221 = vweird.f32 %v1200
    %vm1222 = vweird.f32 %v1216
    %vm1223 = vmor %vm1221, %vm1222
    %v1224 = vsel %vm1223, %v1216, %v1220
    %v1225 = vand.u32 2147483647, %v1200
    %vm1226 = vcmp.eq.f32.partialorder %v1225, 8.507059e+37
    %v1227 = vand.u32 %v1200, 2147483648
    %v1228 = vor.u32 1.1754944e-38, %v1227
    %v1229 = vsel %vm1226, %v1228, %v1224
    %v1230 = vmul.f32 1.0, %v1229
    %v1231 = vmul.f32 %v1215, 2.0
    %v1232 = vmul.f32 %v1230, 2.0
    %v1233 = vsub.f32 %v1231, 1.0
    %v1234 = vsub.f32 %v1232, 1.0
    %v1235 = vmul.f32 %v1215, %v1027
    %v1236 = vmul.f32 %v1230, %v1028
    %1239 = vrot.lane.b32.xlu0 %v1233, 64
    %v1240 = vpop.permute.xlu0 %1239
    %1241 = vrot.lane.b32.xlu0 %v1234, 64
    %v1242 = vpop.permute.xlu0 %1241
    %v1245 = vmul.f32 %v1215, %v1240
    %v1246 = vmul.f32 %v1230, %v1242
    %1249 = vrot.lane.b32.xlu0 %v1245, 32
    %v1250 = vpop.permute.xlu0 %1249
    %1251 = vrot.lane.b32.xlu0 %v1246, 32
    %v1252 = vpop.permute.xlu0 %1251
    %v1255 = vadd.f32 %v1235, %v1250
    %v1256 = vadd.f32 %v1236, %v1252
    %v1257 = vtanh.pop %v1255
    %v1258 = vtanh.pop %v1256
    %1261 = vrot.lane.b32.xlu0 %v1257, 64
    %v1262 = vpop.permute.xlu0 %1261
    %1263 = vrot.lane.b32.xlu0 %v1258, 64
    %v1264 = vpop.permute.xlu0 %1263
    %v1267 = vmul.f32 %v1215, %v1262
    %v1268 = vmul.f32 %v1230, %v1264
    %v1269 = vsel %vm364, %v1149, 0
    %v1271 = vsel %vm364, %v1151, 0
    %1273 = vmatpush.msra.mxu0 0.0
    %1274 = vmatpush.msra.mxu0 0.0
    %1275 = vmatpush.msra.mxu0 0.0
    %1276 = vmatpush.msra.mxu0 0.0
    %1277 = vmatpush.msra.mxu0 0.0
    %1278 = vmatpush.msra.mxu0 0.0
    %1279 = vmatpush.msra.mxu0 0.0
    %1280 = vmatpush.msra.mxu0 0.0
    %1281 = vmatpush.msra.mxu0 0.0
    %1282 = vmatpush.msra.mxu0 0.0
    %1283 = vmatpush.msra.mxu0 0.0
    %1284 = vmatpush.msra.mxu0 0.0
    %1285 = vmatpush.msra.mxu0 %v189
    %1286 = vmatpush.msra.mxu0 %v188
    %1287 = vmatpush.msra.mxu0 %v187
    %1288 = vmatpush.msra.mxu0 %v186
    %1289 = vmatmul.f32.gmra.mxu0 %v1269
    %v1290 = vpop.f32.mrf.mxu0
    %v1291 = vadd.f32 0.0, %v1290
    %1292 = vmatmul.f32.gmra.mxu0 %v1271
    %v1293 = vpop.f32.mrf.mxu0
    %v1294 = vadd.f32 0.0, %v1293
    %1295 = vdwg.mxu0
    %v1296 = vadd.f32 %v356, %v1291
    %v1297 = vadd.f32 %v357, %v1294
    %v1298 = vxor.u32 %v1296, 2147483648
    %v1299 = vxor.u32 %v1297, 2147483648
    %v1300 = vmul.f32 %v1298, 1.442695
    %v1301 = vpow.pop %v1300
    %v1302 = vmul.f32 %v1299, 1.442695
    %v1303 = vpow.pop %v1302
    %v1304 = vadd.f32 %v1301, 1.0
    %v1305 = vadd.f32 %v1303, 1.0
    %v1306 = vrcp.pop %v1304
    %v1307 = vmul.f32 %v1304, %v1306
    %v1308 = vsub.f32 1.0, %v1307
    %v1309 = vmul.f32 %v1306, %v1308
    %v1310 = vadd.f32 %v1306, %v1309
    %vm1311 = vweird.f32 %v1304
    %vm1312 = vweird.f32 %v1306
    %vm1313 = vmor %vm1311, %vm1312
    %v1314 = vsel %vm1313, %v1306, %v1310
    %v1315 = vand.u32 2147483647, %v1304
    %vm1316 = vcmp.eq.f32.partialorder %v1315, 8.507059e+37
    %v1317 = vand.u32 %v1304, 2147483648
    %v1318 = vor.u32 1.1754944e-38, %v1317
    %v1319 = vsel %vm1316, %v1318, %v1314
    %v1320 = vmul.f32 1.0, %v1319
    %v1321 = vrcp.pop %v1305
    %v1322 = vmul.f32 %v1305, %v1321
    %v1323 = vsub.f32 1.0, %v1322
    %v1324 = vmul.f32 %v1321, %v1323
    %v1325 = vadd.f32 %v1321, %v1324
    %vm1326 = vweird.f32 %v1305
    %vm1327 = vweird.f32 %v1321
    %vm1328 = vmor %vm1326, %vm1327
    %v1329 = vsel %vm1328, %v1321, %v1325
    %v1330 = vand.u32 2147483647, %v1305
    %vm1331 = vcmp.eq.f32.partialorder %v1330, 8.507059e+37
    %v1332 = vand.u32 %v1305, 2147483648
    %v1333 = vor.u32 1.1754944e-38, %v1332
    %v1334 = vsel %vm1331, %v1333, %v1329
    %v1335 = vmul.f32 1.0, %v1334
    %v1336 = vmul.f32 %v1320, 2.0
    %v1337 = vmul.f32 %v1335, 2.0
    %v1338 = vsub.f32 %v1336, 1.0
    %v1339 = vsub.f32 %v1337, 1.0
    %v1340 = vmul.f32 %v1320, %v1132
    %v1341 = vmul.f32 %v1335, %v1133
    %1344 = vrot.lane.b32.xlu0 %v1338, 64
    %v1345 = vpop.permute.xlu0 %1344
    %1346 = vrot.lane.b32.xlu0 %v1339, 64
    %v1347 = vpop.permute.xlu0 %1346
    %v1350 = vmul.f32 %v1320, %v1345
    %v1351 = vmul.f32 %v1335, %v1347
    %1354 = vrot.lane.b32.xlu0 %v1350, 32
    %v1355 = vpop.permute.xlu0 %1354
    %1356 = vrot.lane.b32.xlu0 %v1351, 32
    %v1357 = vpop.permute.xlu0 %1356
    %v1360 = vadd.f32 %v1340, %v1355
    %v1361 = vadd.f32 %v1341, %v1357
    %v1362 = vtanh.pop %v1360
    %v1363 = vtanh.pop %v1361
    %1366 = vrot.lane.b32.xlu0 %v1362, 64
    %v1367 = vpop.permute.xlu0 %1366
    %1368 = vrot.lane.b32.xlu0 %v1363, 64
    %v1369 = vpop.permute.xlu0 %1368
    %v1372 = vmul.f32 %v1320, %v1367
    %v1373 = vmul.f32 %v1335, %v1369
    %1376 = vrot.lane.b32.xlu0 %v1372, 32
    %v1377 = vpop.permute.xlu0 %1376
    %1378 = vrot.lane.b32.xlu0 %v1373, 32
    %v1379 = vpop.permute.xlu0 %1378
    %1384 = vrot.lane.b32.xlu0 %v1267, 64
    %v1385 = vpop.permute.xlu0 %1384
    %1386 = vrot.lane.b32.xlu0 %v1268, 64
    %v1387 = vpop.permute.xlu0 %1386
    %v1390 = vsel %vm364, %v1377, %v1385
    %v1391 = vsel %vm364, %v1379, %v1387
    %v1393 = vsel %vm479, %v1390, 0
    %v1396 = vsel %vm479, %v1391, 0
    %1398 = vmatpush.msra.mxu0 0.0
    %1399 = vmatpush.msra.mxu0 0.0
    %1400 = vmatpush.msra.mxu0 0.0
    %1401 = vmatpush.msra.mxu0 0.0
    %1402 = vmatpush.msra.mxu0 0.0
    %1403 = vmatpush.msra.mxu0 0.0
    %1404 = vmatpush.msra.mxu0 0.0
    %1405 = vmatpush.msra.mxu0 0.0
    %1406 = vmatpush.msra.mxu0 %v197
    %1407 = vmatpush.msra.mxu0 %v196
    %1408 = vmatpush.msra.mxu0 %v195
    %1409 = vmatpush.msra.mxu0 %v194
    %1410 = vmatpush.msra.mxu0 %v193
    %1411 = vmatpush.msra.mxu0 %v192
    %1412 = vmatpush.msra.mxu0 %v191
    %1413 = vmatpush.msra.mxu0 %v190
    %1414 = vmatmul.f32.gmra.mxu0 %v1393
    %v1415 = vpop.f32.mrf.mxu0
    %v1416 = vadd.f32 %v218, %v1415
    %1417 = vmatmul.f32.gmra.mxu0 %v1396
    %v1418 = vpop.f32.mrf.mxu0
    %v1419 = vadd.f32 %v218, %v1418
    %1420 = vdwg.mxu0
    %v1421 = vxor.u32 %v1416, 2147483648
    %v1422 = vxor.u32 %v1419, 2147483648
    %v1423 = vmul.f32 %v1421, 1.442695
    %v1424 = vpow.pop %v1423
    %v1425 = vmul.f32 %v1422, 1.442695
    %v1426 = vpow.pop %v1425
    %v1427 = vadd.f32 %v1424, 1.0
    %v1428 = vadd.f32 %v1426, 1.0
    %v1429 = vrcp.pop %v1427
    %v1430 = vmul.f32 %v1427, %v1429
    %v1431 = vsub.f32 1.0, %v1430
    %v1432 = vmul.f32 %v1429, %v1431
    %v1433 = vadd.f32 %v1429, %v1432
    %vm1434 = vweird.f32 %v1427
    %vm1435 = vweird.f32 %v1429
    %vm1436 = vmor %vm1434, %vm1435
    %v1437 = vsel %vm1436, %v1429, %v1433
    %v1438 = vand.u32 2147483647, %v1427
    %vm1439 = vcmp.eq.f32.partialorder %v1438, 8.507059e+37
    %v1440 = vand.u32 %v1427, 2147483648
    %v1441 = vor.u32 1.1754944e-38, %v1440
    %v1442 = vsel %vm1439, %v1441, %v1437
    %v1443 = vmul.f32 1.0, %v1442
    %v1444 = vrcp.pop %v1428
    %v1445 = vmul.f32 %v1428, %v1444
    %v1446 = vsub.f32 1.0, %v1445
    %v1447 = vmul.f32 %v1444, %v1446
    %v1448 = vadd.f32 %v1444, %v1447
    %vm1449 = vweird.f32 %v1428
    %vm1450 = vweird.f32 %v1444
    %vm1451 = vmor %vm1449, %vm1450
    %v1452 = vsel %vm1451, %v1444, %v1448
    %v1453 = vand.u32 2147483647, %v1428
    %vm1454 = vcmp.eq.f32.partialorder %v1453, 8.507059e+37
    %v1455 = vand.u32 %v1428, 2147483648
    %v1456 = vor.u32 1.1754944e-38, %v1455
    %v1457 = vsel %vm1454, %v1456, %v1452
    %v1458 = vmul.f32 1.0, %v1457
    %v1459 = vmul.f32 %v1443, 2.0
    %v1460 = vmul.f32 %v1458, 2.0
    %v1461 = vsub.f32 %v1459, 1.0
    %v1462 = vsub.f32 %v1460, 1.0
    %v1463 = vmul.f32 %v1443, %v1255
    %v1464 = vmul.f32 %v1458, %v1256
    %1467 = vrot.lane.b32.xlu0 %v1461, 64
    %v1468 = vpop.permute.xlu0 %1467
    %1469 = vrot.lane.b32.xlu0 %v1462, 64
    %v1470 = vpop.permute.xlu0 %1469
    %v1473 = vmul.f32 %v1443, %v1468
    %v1474 = vmul.f32 %v1458, %v1470
    %1477 = vrot.lane.b32.xlu0 %v1473, 32
    %v1478 = vpop.permute.xlu0 %1477
    %1479 = vrot.lane.b32.xlu0 %v1474, 32
    %v1480 = vpop.permute.xlu0 %1479
    %v1483 = vadd.f32 %v1463, %v1478
    %v1484 = vadd.f32 %v1464, %v1480
    %v1485 = vtanh.pop %v1483
    %v1486 = vtanh.pop %v1484
    %1489 = vrot.lane.b32.xlu0 %v1485, 64
    %v1490 = vpop.permute.xlu0 %1489
    %1491 = vrot.lane.b32.xlu0 %v1486, 64
    %v1492 = vpop.permute.xlu0 %1491
    %v1495 = vmul.f32 %v1443, %v1490
    %v1496 = vmul.f32 %v1458, %v1492
    %v1497 = vsel %vm364, %v1377, 0
    %v1499 = vsel %vm364, %v1379, 0
    %1501 = vmatpush.msra.mxu0 0.0
    %1502 = vmatpush.msra.mxu0 0.0
    %1503 = vmatpush.msra.mxu0 0.0
    %1504 = vmatpush.msra.mxu0 0.0
    %1505 = vmatpush.msra.mxu0 0.0
    %1506 = vmatpush.msra.mxu0 0.0
    %1507 = vmatpush.msra.mxu0 0.0
    %1508 = vmatpush.msra.mxu0 0.0
    %1509 = vmatpush.msra.mxu0 0.0
    %1510 = vmatpush.msra.mxu0 0.0
    %1511 = vmatpush.msra.mxu0 0.0
    %1512 = vmatpush.msra.mxu0 0.0
    %1513 = vmatpush.msra.mxu0 %v189
    %1514 = vmatpush.msra.mxu0 %v188
    %1515 = vmatpush.msra.mxu0 %v187
    %1516 = vmatpush.msra.mxu0 %v186
    %1517 = vmatmul.f32.gmra.mxu0 %v1497
    %v1518 = vpop.f32.mrf.mxu0
    %v1519 = vadd.f32 0.0, %v1518
    %1520 = vmatmul.f32.gmra.mxu0 %v1499
    %v1521 = vpop.f32.mrf.mxu0
    %v1522 = vadd.f32 0.0, %v1521
    %1523 = vdwg.mxu0
    %v1524 = vadd.f32 %v358, %v1519
    %v1525 = vadd.f32 %v359, %v1522
    %v1526 = vxor.u32 %v1524, 2147483648
    %v1527 = vxor.u32 %v1525, 2147483648
    %v1528 = vmul.f32 %v1526, 1.442695
    %v1529 = vpow.pop %v1528
    %v1530 = vmul.f32 %v1527, 1.442695
    %v1531 = vpow.pop %v1530
    %v1532 = vadd.f32 %v1529, 1.0
    %v1533 = vadd.f32 %v1531, 1.0
    %v1534 = vrcp.pop %v1532
    %v1535 = vmul.f32 %v1532, %v1534
    %v1536 = vsub.f32 1.0, %v1535
    %v1537 = vmul.f32 %v1534, %v1536
    %v1538 = vadd.f32 %v1534, %v1537
    %vm1539 = vweird.f32 %v1532
    %vm1540 = vweird.f32 %v1534
    %vm1541 = vmor %vm1539, %vm1540
    %v1542 = vsel %vm1541, %v1534, %v1538
    %v1543 = vand.u32 2147483647, %v1532
    %vm1544 = vcmp.eq.f32.partialorder %v1543, 8.507059e+37
    %v1545 = vand.u32 %v1532, 2147483648
    %v1546 = vor.u32 1.1754944e-38, %v1545
    %v1547 = vsel %vm1544, %v1546, %v1542
    %v1548 = vmul.f32 1.0, %v1547
    %v1549 = vrcp.pop %v1533
    %v1550 = vmul.f32 %v1533, %v1549
    %v1551 = vsub.f32 1.0, %v1550
    %v1552 = vmul.f32 %v1549, %v1551
    %v1553 = vadd.f32 %v1549, %v1552
    %vm1554 = vweird.f32 %v1533
    %vm1555 = vweird.f32 %v1549
    %vm1556 = vmor %vm1554, %vm1555
    %v1557 = vsel %vm1556, %v1549, %v1553
    %v1558 = vand.u32 2147483647, %v1533
    %vm1559 = vcmp.eq.f32.partialorder %v1558, 8.507059e+37
    %v1560 = vand.u32 %v1533, 2147483648
    %v1561 = vor.u32 1.1754944e-38, %v1560
    %v1562 = vsel %vm1559, %v1561, %v1557
    %v1563 = vmul.f32 1.0, %v1562
    %v1564 = vmul.f32 %v1548, 2.0
    %v1565 = vmul.f32 %v1563, 2.0
    %v1566 = vsub.f32 %v1564, 1.0
    %v1567 = vsub.f32 %v1565, 1.0
    %v1568 = vmul.f32 %v1548, %v1360
    %v1569 = vmul.f32 %v1563, %v1361
    %1572 = vrot.lane.b32.xlu0 %v1566, 64
    %v1573 = vpop.permute.xlu0 %1572
    %1574 = vrot.lane.b32.xlu0 %v1567, 64
    %v1575 = vpop.permute.xlu0 %1574
    %v1578 = vmul.f32 %v1548, %v1573
    %v1579 = vmul.f32 %v1563, %v1575
    %1582 = vrot.lane.b32.xlu0 %v1578, 32
    %v1583 = vpop.permute.xlu0 %1582
    %1584 = vrot.lane.b32.xlu0 %v1579, 32
    %v1585 = vpop.permute.xlu0 %1584
    %v1588 = vadd.f32 %v1568, %v1583
    %v1589 = vadd.f32 %v1569, %v1585
    %v1590 = vtanh.pop %v1588
    %v1591 = vtanh.pop %v1589
    %1594 = vrot.lane.b32.xlu0 %v1590, 64
    %v1595 = vpop.permute.xlu0 %1594
    %1596 = vrot.lane.b32.xlu0 %v1591, 64
    %v1597 = vpop.permute.xlu0 %1596
    %v1600 = vmul.f32 %v1548, %v1595
    %v1601 = vmul.f32 %v1563, %v1597
    %1604 = vrot.lane.b32.xlu0 %v1600, 32
    %v1605 = vpop.permute.xlu0 %1604
    %1606 = vrot.lane.b32.xlu0 %v1601, 32
    %v1607 = vpop.permute.xlu0 %1606
    %1612 = vrot.lane.b32.xlu0 %v1495, 64
    %v1613 = vpop.permute.xlu0 %1612
    %1614 = vrot.lane.b32.xlu0 %v1496, 64
    %v1615 = vpop.permute.xlu0 %1614
    %v1618 = vsel %vm364, %v1605, %v1613
    %v1619 = vsel %vm364, %v1607, %v1615
    %v1621 = vsel %vm479, %v1618, 0
    %v1624 = vsel %vm479, %v1619, 0
    %1626 = vmatpush.msra.mxu0 0.0
    %1627 = vmatpush.msra.mxu0 0.0
    %1628 = vmatpush.msra.mxu0 0.0
    %1629 = vmatpush.msra.mxu0 0.0
    %1630 = vmatpush.msra.mxu0 0.0
    %1631 = vmatpush.msra.mxu0 0.0
    %1632 = vmatpush.msra.mxu0 0.0
    %1633 = vmatpush.msra.mxu0 0.0
    %1634 = vmatpush.msra.mxu0 %v197
    %1635 = vmatpush.msra.mxu0 %v196
    %1636 = vmatpush.msra.mxu0 %v195
    %1637 = vmatpush.msra.mxu0 %v194
    %1638 = vmatpush.msra.mxu0 %v193
    %1639 = vmatpush.msra.mxu0 %v192
    %1640 = vmatpush.msra.mxu0 %v191
    %1641 = vmatpush.msra.mxu0 %v190
    %1642 = vmatmul.f32.gmra.mxu0 %v1621
    %v1643 = vpop.f32.mrf.mxu0
    %v1644 = vadd.f32 %v218, %v1643
    %1645 = vmatmul.f32.gmra.mxu0 %v1624
    %v1646 = vpop.f32.mrf.mxu0
    %v1647 = vadd.f32 %v218, %v1646
    %1648 = vdwg.mxu0
    %v1649 = vxor.u32 %v1644, 2147483648
    %v1650 = vxor.u32 %v1647, 2147483648
    %v1651 = vmul.f32 %v1649, 1.442695
    %v1652 = vpow.pop %v1651
    %v1653 = vmul.f32 %v1650, 1.442695
    %v1654 = vpow.pop %v1653
    %v1655 = vadd.f32 %v1652, 1.0
    %v1656 = vadd.f32 %v1654, 1.0
    %v1657 = vrcp.pop %v1655
    %v1658 = vmul.f32 %v1655, %v1657
    %v1659 = vsub.f32 1.0, %v1658
    %v1660 = vmul.f32 %v1657, %v1659
    %v1661 = vadd.f32 %v1657, %v1660
    %vm1662 = vweird.f32 %v1655
    %vm1663 = vweird.f32 %v1657
    %vm1664 = vmor %vm1662, %vm1663
    %v1665 = vsel %vm1664, %v1657, %v1661
    %v1666 = vand.u32 2147483647, %v1655
    %vm1667 = vcmp.eq.f32.partialorder %v1666, 8.507059e+37
    %v1668 = vand.u32 %v1655, 2147483648
    %v1669 = vor.u32 1.1754944e-38, %v1668
    %v1670 = vsel %vm1667, %v1669, %v1665
    %v1671 = vmul.f32 1.0, %v1670
    %v1672 = vrcp.pop %v1656
    %v1673 = vmul.f32 %v1656, %v1672
    %v1674 = vsub.f32 1.0, %v1673
    %v1675 = vmul.f32 %v1672, %v1674
    %v1676 = vadd.f32 %v1672, %v1675
    %vm1677 = vweird.f32 %v1656
    %vm1678 = vweird.f32 %v1672
    %vm1679 = vmor %vm1677, %vm1678
    %v1680 = vsel %vm1679, %v1672, %v1676
    %v1681 = vand.u32 2147483647, %v1656
    %vm1682 = vcmp.eq.f32.partialorder %v1681, 8.507059e+37
    %v1683 = vand.u32 %v1656, 2147483648
    %v1684 = vor.u32 1.1754944e-38, %v1683
    %v1685 = vsel %vm1682, %v1684, %v1680
    %v1686 = vmul.f32 1.0, %v1685
    %v1687 = vmul.f32 %v1671, 2.0
    %v1688 = vmul.f32 %v1686, 2.0
    %v1689 = vsub.f32 %v1687, 1.0
    %v1690 = vsub.f32 %v1688, 1.0
    %v1691 = vmul.f32 %v1671, %v1483
    %v1692 = vmul.f32 %v1686, %v1484
    %1695 = vrot.lane.b32.xlu0 %v1689, 64
    %v1696 = vpop.permute.xlu0 %1695
    %1697 = vrot.lane.b32.xlu0 %v1690, 64
    %v1698 = vpop.permute.xlu0 %1697
    %v1701 = vmul.f32 %v1671, %v1696
    %v1702 = vmul.f32 %v1686, %v1698
    %1705 = vrot.lane.b32.xlu0 %v1701, 32
    %v1706 = vpop.permute.xlu0 %1705
    %1707 = vrot.lane.b32.xlu0 %v1702, 32
    %v1708 = vpop.permute.xlu0 %1707
    %v1711 = vadd.f32 %v1691, %v1706
    %v1712 = vadd.f32 %v1692, %v1708
    %v1713 = vtanh.pop %v1711
    %v1714 = vtanh.pop %v1712
    %1717 = vrot.lane.b32.xlu0 %v1713, 64
    %v1718 = vpop.permute.xlu0 %1717
    %1719 = vrot.lane.b32.xlu0 %v1714, 64
    %v1720 = vpop.permute.xlu0 %1719
    %v1723 = vmul.f32 %v1671, %v1718
    %v1724 = vmul.f32 %v1686, %v1720
    %v1725 = vsel %vm364, %v1605, 0
    %v1727 = vsel %vm364, %v1607, 0
    %1729 = vmatpush.msra.mxu0 0.0
    %1730 = vmatpush.msra.mxu0 0.0
    %1731 = vmatpush.msra.mxu0 0.0
    %1732 = vmatpush.msra.mxu0 0.0
    %1733 = vmatpush.msra.mxu0 0.0
    %1734 = vmatpush.msra.mxu0 0.0
    %1735 = vmatpush.msra.mxu0 0.0
    %1736 = vmatpush.msra.mxu0 0.0
    %1737 = vmatpush.msra.mxu0 0.0
    %1738 = vmatpush.msra.mxu0 0.0
    %1739 = vmatpush.msra.mxu0 0.0
    %1740 = vmatpush.msra.mxu0 0.0
    %1741 = vmatpush.msra.mxu0 %v189
    %1742 = vmatpush.msra.mxu0 %v188
    %1743 = vmatpush.msra.mxu0 %v187
    %1744 = vmatpush.msra.mxu0 %v186
    %1745 = vmatmul.f32.gmra.mxu0 %v1725
    %v1746 = vpop.f32.mrf.mxu0
    %v1747 = vadd.f32 0.0, %v1746
    %1748 = vmatmul.f32.gmra.mxu0 %v1727
    %v1749 = vpop.f32.mrf.mxu0
    %v1750 = vadd.f32 0.0, %v1749
    %1751 = vdwg.mxu0
    %v1752 = vadd.f32 %v360, %v1747
    %v1753 = vadd.f32 %v361, %v1750
    %v1754 = vxor.u32 %v1752, 2147483648
    %v1755 = vxor.u32 %v1753, 2147483648
    %v1756 = vmul.f32 %v1754, 1.442695
    %v1757 = vpow.pop %v1756
    %v1758 = vmul.f32 %v1755, 1.442695
    %v1759 = vpow.pop %v1758
    %v1760 = vadd.f32 %v1757, 1.0
    %v1761 = vadd.f32 %v1759, 1.0
    %v1762 = vrcp.pop %v1760
    %v1763 = vmul.f32 %v1760, %v1762
    %v1764 = vsub.f32 1.0, %v1763
    %v1765 = vmul.f32 %v1762, %v1764
    %v1766 = vadd.f32 %v1762, %v1765
    %vm1767 = vweird.f32 %v1760
    %vm1768 = vweird.f32 %v1762
    %vm1769 = vmor %vm1767, %vm1768
    %v1770 = vsel %vm1769, %v1762, %v1766
    %v1771 = vand.u32 2147483647, %v1760
    %vm1772 = vcmp.eq.f32.partialorder %v1771, 8.507059e+37
    %v1773 = vand.u32 %v1760, 2147483648
    %v1774 = vor.u32 1.1754944e-38, %v1773
    %v1775 = vsel %vm1772, %v1774, %v1770
    %v1776 = vmul.f32 1.0, %v1775
    %v1777 = vrcp.pop %v1761
    %v1778 = vmul.f32 %v1761, %v1777
    %v1779 = vsub.f32 1.0, %v1778
    %v1780 = vmul.f32 %v1777, %v1779
    %v1781 = vadd.f32 %v1777, %v1780
    %vm1782 = vweird.f32 %v1761
    %vm1783 = vweird.f32 %v1777
    %vm1784 = vmor %vm1782, %vm1783
    %v1785 = vsel %vm1784, %v1777, %v1781
    %v1786 = vand.u32 2147483647, %v1761
    %vm1787 = vcmp.eq.f32.partialorder %v1786, 8.507059e+37
    %v1788 = vand.u32 %v1761, 2147483648
    %v1789 = vor.u32 1.1754944e-38, %v1788
    %v1790 = vsel %vm1787, %v1789, %v1785
    %v1791 = vmul.f32 1.0, %v1790
    %v1792 = vmul.f32 %v1776, 2.0
    %v1793 = vmul.f32 %v1791, 2.0
    %v1794 = vsub.f32 %v1792, 1.0
    %v1795 = vsub.f32 %v1793, 1.0
    %v1796 = vmul.f32 %v1776, %v1588
    %v1797 = vmul.f32 %v1791, %v1589
    %1800 = vrot.lane.b32.xlu0 %v1794, 64
    %v1801 = vpop.permute.xlu0 %1800
    %1802 = vrot.lane.b32.xlu0 %v1795, 64
    %v1803 = vpop.permute.xlu0 %1802
    %v1806 = vmul.f32 %v1776, %v1801
    %v1807 = vmul.f32 %v1791, %v1803
    %1810 = vrot.lane.b32.xlu0 %v1806, 32
    %v1811 = vpop.permute.xlu0 %1810
    %1812 = vrot.lane.b32.xlu0 %v1807, 32
    %v1813 = vpop.permute.xlu0 %1812
    %v1816 = vadd.f32 %v1796, %v1811
    %v1817 = vadd.f32 %v1797, %v1813
    %v1818 = vtanh.pop %v1816
    %v1819 = vtanh.pop %v1817
    %1822 = vrot.lane.b32.xlu0 %v1818, 64
    %v1823 = vpop.permute.xlu0 %1822
    %1824 = vrot.lane.b32.xlu0 %v1819, 64
    %v1825 = vpop.permute.xlu0 %1824
    %v1828 = vmul.f32 %v1776, %v1823
    %v1829 = vmul.f32 %v1791, %v1825
    %1832 = vrot.lane.b32.xlu0 %v1828, 32
    %v1833 = vpop.permute.xlu0 %1832
    %1834 = vrot.lane.b32.xlu0 %v1829, 32
    %v1835 = vpop.permute.xlu0 %1834
    %1840 = vrot.lane.b32.xlu0 %v1723, 64
    %v1841 = vpop.permute.xlu0 %1840
    %1842 = vrot.lane.b32.xlu0 %v1724, 64
    %v1843 = vpop.permute.xlu0 %1842
    %v1846 = vsel %vm364, %v1833, %v1841
    %v1847 = vsel %vm364, %v1835, %v1843
    %v1849 = vsel %vm479, %v1846, 0
    %v1852 = vsel %vm479, %v1847, 0
    %1854 = vmatpush.msra.mxu0 0.0
    %1855 = vmatpush.msra.mxu0 0.0
    %1856 = vmatpush.msra.mxu0 0.0
    %1857 = vmatpush.msra.mxu0 0.0
    %1858 = vmatpush.msra.mxu0 0.0
    %1859 = vmatpush.msra.mxu0 0.0
    %1860 = vmatpush.msra.mxu0 0.0
    %1861 = vmatpush.msra.mxu0 0.0
    %1862 = vmatpush.msra.mxu0 %v197
    %1863 = vmatpush.msra.mxu0 %v196
    %1864 = vmatpush.msra.mxu0 %v195
    %1865 = vmatpush.msra.mxu0 %v194
    %1866 = vmatpush.msra.mxu0 %v193
    %1867 = vmatpush.msra.mxu0 %v192
    %1868 = vmatpush.msra.mxu0 %v191
    %1869 = vmatpush.msra.mxu0 %v190
    %1870 = vmatmul.f32.gmra.mxu0 %v1849
    %v1871 = vpop.f32.mrf.mxu0
    %v1872 = vadd.f32 %v218, %v1871
    %1873 = vmatmul.f32.gmra.mxu0 %v1852
    %v1874 = vpop.f32.mrf.mxu0
    %v1875 = vadd.f32 %v218, %v1874
    %1876 = vdwg.mxu0
    %v1877 = vxor.u32 %v1872, 2147483648
    %v1878 = vxor.u32 %v1875, 2147483648
    %v1879 = vmul.f32 %v1877, 1.442695
    %v1880 = vpow.pop %v1879
    %v1881 = vmul.f32 %v1878, 1.442695
    %v1882 = vpow.pop %v1881
    %v1883 = vadd.f32 %v1880, 1.0
    %v1884 = vadd.f32 %v1882, 1.0
    %v1885 = vrcp.pop %v1883
    %v1886 = vmul.f32 %v1883, %v1885
    %v1887 = vsub.f32 1.0, %v1886
    %v1888 = vmul.f32 %v1885, %v1887
    %v1889 = vadd.f32 %v1885, %v1888
    %vm1890 = vweird.f32 %v1883
    %vm1891 = vweird.f32 %v1885
    %vm1892 = vmor %vm1890, %vm1891
    %v1893 = vsel %vm1892, %v1885, %v1889
    %v1894 = vand.u32 2147483647, %v1883
    %vm1895 = vcmp.eq.f32.partialorder %v1894, 8.507059e+37
    %v1896 = vand.u32 %v1883, 2147483648
    %v1897 = vor.u32 1.1754944e-38, %v1896
    %v1898 = vsel %vm1895, %v1897, %v1893
    %v1899 = vmul.f32 1.0, %v1898
    %v1900 = vrcp.pop %v1884
    %v1901 = vmul.f32 %v1884, %v1900
    %v1902 = vsub.f32 1.0, %v1901
    %v1903 = vmul.f32 %v1900, %v1902
    %v1904 = vadd.f32 %v1900, %v1903
    %vm1905 = vweird.f32 %v1884
    %vm1906 = vweird.f32 %v1900
    %vm1907 = vmor %vm1905, %vm1906
    %v1908 = vsel %vm1907, %v1900, %v1904
    %v1909 = vand.u32 2147483647, %v1884
    %vm1910 = vcmp.eq.f32.partialorder %v1909, 8.507059e+37
    %v1911 = vand.u32 %v1884, 2147483648
    %v1912 = vor.u32 1.1754944e-38, %v1911
    %v1913 = vsel %vm1910, %v1912, %v1908
    %v1914 = vmul.f32 1.0, %v1913
    %v1915 = vmul.f32 %v1899, 2.0
    %v1916 = vmul.f32 %v1914, 2.0
    %v1917 = vsub.f32 %v1915, 1.0
    %v1918 = vsub.f32 %v1916, 1.0
    %v1919 = vmul.f32 %v1899, %v1711
    %v1920 = vmul.f32 %v1914, %v1712
    %1923 = vrot.lane.b32.xlu0 %v1917, 64
    %v1924 = vpop.permute.xlu0 %1923
    %1925 = vrot.lane.b32.xlu0 %v1918, 64
    %v1926 = vpop.permute.xlu0 %1925
    %v1929 = vmul.f32 %v1899, %v1924
    %v1930 = vmul.f32 %v1914, %v1926
    %1933 = vrot.lane.b32.xlu0 %v1929, 32
    %v1934 = vpop.permute.xlu0 %1933
    %1935 = vrot.lane.b32.xlu0 %v1930, 32
    %v1936 = vpop.permute.xlu0 %1935
    %v1939 = vadd.f32 %v1919, %v1934
    %v1940 = vadd.f32 %v1920, %v1936
    %v1941 = vtanh.pop %v1939
    %v1942 = vtanh.pop %v1940
    %1945 = vrot.lane.b32.xlu0 %v1941, 64
    %v1946 = vpop.permute.xlu0 %1945
    %1947 = vrot.lane.b32.xlu0 %v1942, 64
    %v1948 = vpop.permute.xlu0 %1947
    %v1951 = vmul.f32 %v1899, %v1946
    %v1952 = vmul.f32 %v1914, %v1948
    %v1953 = vsel %vm364, %v1833, 0
    %v1955 = vsel %vm364, %v1835, 0
    %1957 = vmatpush.msra.mxu0 0.0
    %1958 = vmatpush.msra.mxu0 0.0
    %1959 = vmatpush.msra.mxu0 0.0
    %1960 = vmatpush.msra.mxu0 0.0
    %1961 = vmatpush.msra.mxu0 0.0
    %1962 = vmatpush.msra.mxu0 0.0
    %1963 = vmatpush.msra.mxu0 0.0
    %1964 = vmatpush.msra.mxu0 0.0
    %1965 = vmatpush.msra.mxu0 0.0
    %1966 = vmatpush.msra.mxu0 0.0
    %1967 = vmatpush.msra.mxu0 0.0
    %1968 = vmatpush.msra.mxu0 0.0
    %1969 = vmatpush.msra.mxu0 %v189
    %1970 = vmatpush.msra.mxu0 %v188
    %1971 = vmatpush.msra.mxu0 %v187
    %1972 = vmatpush.msra.mxu0 %v186
    %1973 = vmatmul.f32.gmra.mxu0 %v1953
    %v1974 = vpop.f32.mrf.mxu0
    %v1975 = vadd.f32 0.0, %v1974
    %1976 = vmatmul.f32.gmra.mxu0 %v1955
    %v1977 = vpop.f32.mrf.mxu0
    %v1978 = vadd.f32 0.0, %v1977
    %1979 = vdwg.mxu0
    %v1980 = vadd.f32 %v362, %v1975
    %v1981 = vadd.f32 %v363, %v1978
    %v1982 = vxor.u32 %v1980, 2147483648
    %v1983 = vxor.u32 %v1981, 2147483648
    %v1984 = vmul.f32 %v1982, 1.442695
    %v1985 = vpow.pop %v1984
    %v1986 = vmul.f32 %v1983, 1.442695
    %v1987 = vpow.pop %v1986
    %v1988 = vadd.f32 %v1985, 1.0
    %v1989 = vadd.f32 %v1987, 1.0
    %v1990 = vrcp.pop %v1988
    %v1991 = vmul.f32 %v1988, %v1990
    %v1992 = vsub.f32 1.0, %v1991
    %v1993 = vmul.f32 %v1990, %v1992
    %v1994 = vadd.f32 %v1990, %v1993
    %vm1995 = vweird.f32 %v1988
    %vm1996 = vweird.f32 %v1990
    %vm1997 = vmor %vm1995, %vm1996
    %v1998 = vsel %vm1997, %v1990, %v1994
    %v1999 = vand.u32 2147483647, %v1988
    %vm2000 = vcmp.eq.f32.partialorder %v1999, 8.507059e+37
    %v2001 = vand.u32 %v1988, 2147483648
    %v2002 = vor.u32 1.1754944e-38, %v2001
    %v2003 = vsel %vm2000, %v2002, %v1998
    %v2004 = vmul.f32 1.0, %v2003
    %v2005 = vrcp.pop %v1989
    %v2006 = vmul.f32 %v1989, %v2005
    %v2007 = vsub.f32 1.0, %v2006
    %v2008 = vmul.f32 %v2005, %v2007
    %v2009 = vadd.f32 %v2005, %v2008
    %vm2010 = vweird.f32 %v1989
    %vm2011 = vweird.f32 %v2005
    %vm2012 = vmor %vm2010, %vm2011
    %v2013 = vsel %vm2012, %v2005, %v2009
    %v2014 = vand.u32 2147483647, %v1989
    %vm2015 = vcmp.eq.f32.partialorder %v2014, 8.507059e+37
    %v2016 = vand.u32 %v1989, 2147483648
    %v2017 = vor.u32 1.1754944e-38, %v2016
    %v2018 = vsel %vm2015, %v2017, %v2013
    %v2019 = vmul.f32 1.0, %v2018
    %v2020 = vmul.f32 %v2004, 2.0
    %v2021 = vmul.f32 %v2019, 2.0
    %v2022 = vsub.f32 %v2020, 1.0
    %v2023 = vsub.f32 %v2021, 1.0
    %v2024 = vmul.f32 %v2004, %v1816
    %v2025 = vmul.f32 %v2019, %v1817
    %2028 = vrot.lane.b32.xlu0 %v2022, 64
    %v2029 = vpop.permute.xlu0 %2028
    %2030 = vrot.lane.b32.xlu0 %v2023, 64
    %v2031 = vpop.permute.xlu0 %2030
    %v2034 = vmul.f32 %v2004, %v2029
    %v2035 = vmul.f32 %v2019, %v2031
    %2038 = vrot.lane.b32.xlu0 %v2034, 32
    %v2039 = vpop.permute.xlu0 %2038
    %2040 = vrot.lane.b32.xlu0 %v2035, 32
    %v2041 = vpop.permute.xlu0 %2040
    %v2044 = vadd.f32 %v2024, %v2039
    %v2045 = vadd.f32 %v2025, %v2041
    %v2046 = vtanh.pop %v2044
    %v2047 = vtanh.pop %v2045
    %2050 = vrot.lane.b32.xlu0 %v2046, 64
    %v2051 = vpop.permute.xlu0 %2050
    %2052 = vrot.lane.b32.xlu0 %v2047, 64
    %v2053 = vpop.permute.xlu0 %2052
    %v2056 = vmul.f32 %v2004, %v2051
    %v2057 = vmul.f32 %v2019, %v2053
    %2060 = vrot.lane.b32.xlu0 %v2056, 32
    %v2061 = vpop.permute.xlu0 %2060
    %2062 = vrot.lane.b32.xlu0 %v2057, 32
    %v2063 = vpop.permute.xlu0 %2062
    %2068 = vrot.lane.b32.xlu0 %v1951, 64
    %v2069 = vpop.permute.xlu0 %2068
    %2070 = vrot.lane.b32.xlu0 %v1952, 64
    %v2071 = vpop.permute.xlu0 %2070
    %v2074 = vsel %vm364, %v2061, %v2069
    %v2075 = vsel %vm364, %v2063, %v2071
    %v2077 = vsel %vm479, %v2074, 0
    %v2080 = vsel %vm479, %v2075, 0
    %2082 = vmatpush.msra.mxu0 0.0
    %2083 = vmatpush.msra.mxu0 0.0
    %2084 = vmatpush.msra.mxu0 0.0
    %2085 = vmatpush.msra.mxu0 0.0
    %2086 = vmatpush.msra.mxu0 0.0
    %2087 = vmatpush.msra.mxu0 0.0
    %2088 = vmatpush.msra.mxu0 0.0
    %2089 = vmatpush.msra.mxu0 0.0
    %2090 = vmatpush.msra.mxu0 %v197
    %2091 = vmatpush.msra.mxu0 %v196
    %2092 = vmatpush.msra.mxu0 %v195
    %2093 = vmatpush.msra.mxu0 %v194
    %2094 = vmatpush.msra.mxu0 %v193
    %2095 = vmatpush.msra.mxu0 %v192
    %2096 = vmatpush.msra.mxu0 %v191
    %2097 = vmatpush.msra.mxu0 %v190
    %2098 = vmatmul.f32.gmra.mxu0 %v2077
    %v2099 = vpop.f32.mrf.mxu0
    %v2100 = vadd.f32 %v218, %v2099
    %2101 = vmatmul.f32.gmra.mxu0 %v2080
    %v2102 = vpop.f32.mrf.mxu0
    %v2103 = vadd.f32 %v218, %v2102
    %2104 = vdwg.mxu0
    %v2105 = vxor.u32 %v2100, 2147483648
    %v2106 = vxor.u32 %v2103, 2147483648
    %v2107 = vmul.f32 %v2105, 1.442695
    %v2108 = vpow.pop %v2107
    %v2109 = vmul.f32 %v2106, 1.442695
    %v2110 = vpow.pop %v2109
    %v2111 = vadd.f32 %v2108, 1.0
    %v2112 = vadd.f32 %v2110, 1.0
    %v2113 = vrcp.pop %v2111
    %v2114 = vmul.f32 %v2111, %v2113
    %v2115 = vsub.f32 1.0, %v2114
    %v2116 = vmul.f32 %v2113, %v2115
    %v2117 = vadd.f32 %v2113, %v2116
    %vm2118 = vweird.f32 %v2111
    %vm2119 = vweird.f32 %v2113
    %vm2120 = vmor %vm2118, %vm2119
    %v2121 = vsel %vm2120, %v2113, %v2117
    %v2122 = vand.u32 2147483647, %v2111
    %vm2123 = vcmp.eq.f32.partialorder %v2122, 8.507059e+37
    %v2124 = vand.u32 %v2111, 2147483648
    %v2125 = vor.u32 1.1754944e-38, %v2124
    %v2126 = vsel %vm2123, %v2125, %v2121
    %v2127 = vmul.f32 1.0, %v2126
    %v2128 = vrcp.pop %v2112
    %v2129 = vmul.f32 %v2112, %v2128
    %v2130 = vsub.f32 1.0, %v2129
    %v2131 = vmul.f32 %v2128, %v2130
    %v2132 = vadd.f32 %v2128, %v2131
    %vm2133 = vweird.f32 %v2112
    %vm2134 = vweird.f32 %v2128
    %vm2135 = vmor %vm2133, %vm2134
    %v2136 = vsel %vm2135, %v2128, %v2132
    %v2137 = vand.u32 2147483647, %v2112
    %vm2138 = vcmp.eq.f32.partialorder %v2137, 8.507059e+37
    %v2139 = vand.u32 %v2112, 2147483648
    %v2140 = vor.u32 1.1754944e-38, %v2139
    %v2141 = vsel %vm2138, %v2140, %v2136
    %v2142 = vmul.f32 1.0, %v2141
    %v2143 = vmul.f32 %v2127, 2.0
    %v2144 = vmul.f32 %v2142, 2.0
    %v2145 = vsub.f32 %v2143, 1.0
    %v2146 = vsub.f32 %v2144, 1.0
    %v2147 = vmul.f32 %v2127, %v1939
    %v2148 = vmul.f32 %v2142, %v1940
    %2151 = vrot.lane.b32.xlu0 %v2145, 64
    %v2152 = vpop.permute.xlu0 %2151
    %2153 = vrot.lane.b32.xlu0 %v2146, 64
    %v2154 = vpop.permute.xlu0 %2153
    %v2157 = vmul.f32 %v2127, %v2152
    %v2158 = vmul.f32 %v2142, %v2154
    %2161 = vrot.lane.b32.xlu0 %v2157, 32
    %v2162 = vpop.permute.xlu0 %2161
    %2163 = vrot.lane.b32.xlu0 %v2158, 32
    %v2164 = vpop.permute.xlu0 %2163
    %v2167 = vadd.f32 %v2147, %v2162
    %v2168 = vadd.f32 %v2148, %v2164
    %v2169 = vtanh.pop %v2167
    %v2170 = vtanh.pop %v2168
    %2173 = vrot.lane.b32.xlu0 %v2169, 64
    %v2174 = vpop.permute.xlu0 %2173
    %2175 = vrot.lane.b32.xlu0 %v2170, 64
    %v2176 = vpop.permute.xlu0 %2175
    %v2179 = vmul.f32 %v2127, %v2174
    %v2180 = vmul.f32 %v2142, %v2176
    %v2181 = vld [vmem:[#allocation10] sm:$0xff]
    %v2182 = vld [vmem:[#allocation10 + $0x8] sm:$0xff]
    %2183 = vmatpush.msra.mxu0 0.0
    %2184 = vmatpush.msra.mxu0 0.0
    %2185 = vmatpush.msra.mxu0 0.0
    %2186 = vmatpush.msra.mxu0 0.0
    %2187 = vmatpush.msra.mxu0 0.0
    %2188 = vmatpush.msra.mxu0 0.0
    %2189 = vmatpush.msra.mxu0 0.0
    %2190 = vmatpush.msra.mxu0 0.0
    %2191 = vmatpush.msra.mxu0 0.0
    %2192 = vmatpush.msra.mxu0 0.0
    %2193 = vmatpush.msra.mxu0 0.0
    %2194 = vmatpush.msra.mxu0 0.0
    %2195 = vmatpush.msra.mxu0 0.0
    %2196 = vmatpush.msra.mxu0 0.0
    %2197 = vmatpush.msra.mxu0 %v2182
    %2198 = vmatpush.msra.mxu0 %v2181
    %2199 = vmatmul.f32.gmra.mxu0 %v232
    %v2200 = vpop.f32.mrf.mxu0
    %v2201 = vadd.f32 0.0, %v2200
    %2202 = vmatmul.f32.gmra.mxu0 %v235
    %v2203 = vpop.f32.mrf.mxu0
    %v2204 = vadd.f32 0.0, %v2203
    %2205 = vmatmul.f32.gmra.mxu0 %v238
    %v2206 = vpop.f32.mrf.mxu0
    %v2207 = vadd.f32 0.0, %v2206
    %2208 = vmatmul.f32.gmra.mxu0 %v241
    %v2209 = vpop.f32.mrf.mxu0
    %v2210 = vadd.f32 0.0, %v2209
    %2211 = vmatmul.f32.gmra.mxu0 %v244
    %v2212 = vpop.f32.mrf.mxu0
    %v2213 = vadd.f32 0.0, %v2212
    %2214 = vmatmul.f32.gmra.mxu0 %v247
    %v2215 = vpop.f32.mrf.mxu0
    %v2216 = vadd.f32 0.0, %v2215
    %2217 = vmatmul.f32.gmra.mxu0 %v250
    %v2218 = vpop.f32.mrf.mxu0
    %v2219 = vadd.f32 0.0, %v2218
    %2220 = vmatmul.f32.gmra.mxu0 %v253
    %v2221 = vpop.f32.mrf.mxu0
    %v2222 = vadd.f32 0.0, %v2221
    %2223 = vmatmul.f32.gmra.mxu0 %v256
    %v2224 = vpop.f32.mrf.mxu0
    %v2225 = vadd.f32 0.0, %v2224
    %2226 = vmatmul.f32.gmra.mxu0 %v259
    %v2227 = vpop.f32.mrf.mxu0
    %v2228 = vadd.f32 0.0, %v2227
    %2229 = vmatmul.f32.gmra.mxu0 %v262
    %v2230 = vpop.f32.mrf.mxu0
    %v2231 = vadd.f32 0.0, %v2230
    %2232 = vmatmul.f32.gmra.mxu0 %v265
    %v2233 = vpop.f32.mrf.mxu0
    %v2234 = vadd.f32 0.0, %v2233
    %2235 = vmatmul.f32.gmra.mxu0 %v268
    %v2236 = vpop.f32.mrf.mxu0
    %v2237 = vadd.f32 0.0, %v2236
    %2238 = vmatmul.f32.gmra.mxu0 %v271
    %v2239 = vpop.f32.mrf.mxu0
    %v2240 = vadd.f32 0.0, %v2239
    %2241 = vmatmul.f32.gmra.mxu0 %v274
    %v2242 = vpop.f32.mrf.mxu0
    %v2243 = vadd.f32 0.0, %v2242
    %2244 = vmatmul.f32.gmra.mxu0 %v277
    %v2245 = vpop.f32.mrf.mxu0
    %v2246 = vadd.f32 0.0, %v2245
    %2247 = vdwg.mxu0
    %v2248 = vld [vmem:[%s8] sm:$0x1]
    %v2250 = vperm.slane %v2248, 0
    %v2252 = vadd.f32 %v2201, %v2250
    %v2253 = vadd.f32 %v2204, %v2250
    %v2254 = vadd.f32 %v2207, %v2250
    %v2255 = vadd.f32 %v2210, %v2250
    %v2256 = vadd.f32 %v2213, %v2250
    %v2257 = vadd.f32 %v2216, %v2250
    %v2258 = vadd.f32 %v2219, %v2250
    %v2259 = vadd.f32 %v2222, %v2250
    %v2260 = vadd.f32 %v2225, %v2250
    %v2261 = vadd.f32 %v2228, %v2250
    %v2262 = vadd.f32 %v2231, %v2250
    %v2263 = vadd.f32 %v2234, %v2250
    %v2264 = vadd.f32 %v2237, %v2250
    %v2265 = vadd.f32 %v2240, %v2250
    %v2266 = vadd.f32 %v2243, %v2250
    %v2267 = vadd.f32 %v2246, %v2250
    %2270 = vrot.lane.b32.xlu0 %v2179, 32
    %v2271 = vpop.permute.xlu0 %2270
    %2272 = vrot.lane.b32.xlu0 %v2180, 32
    %v2273 = vpop.permute.xlu0 %2272
    %v2274 = vsel %vm364, %v2271, 0
    %v2276 = vsel %vm364, %v2273, 0
    %2278 = vmatpush.msra.mxu0 0.0
    %2279 = vmatpush.msra.mxu0 0.0
    %2280 = vmatpush.msra.mxu0 0.0
    %2281 = vmatpush.msra.mxu0 0.0
    %2282 = vmatpush.msra.mxu0 0.0
    %2283 = vmatpush.msra.mxu0 0.0
    %2284 = vmatpush.msra.mxu0 0.0
    %2285 = vmatpush.msra.mxu0 0.0
    %2286 = vmatpush.msra.mxu0 0.0
    %2287 = vmatpush.msra.mxu0 0.0
    %2288 = vmatpush.msra.mxu0 0.0
    %2289 = vmatpush.msra.mxu0 0.0
    %2290 = vmatpush.msra.mxu0 %v201
    %2291 = vmatpush.msra.mxu0 %v200
    %2292 = vmatpush.msra.mxu0 %v199
    %2293 = vmatpush.msra.mxu0 %v198
    %2294 = vmatmul.f32.gmra.mxu0 %v2274
    %v2295 = vpop.f32.mrf.mxu0
    %v2296 = vadd.f32 0.0, %v2295
    %2297 = vmatmul.f32.gmra.mxu0 %v2276
    %v2298 = vpop.f32.mrf.mxu0
    %v2299 = vadd.f32 0.0, %v2298
    %2300 = vdwg.mxu0
    %v2301 = vadd.f32 %v2266, %v2296
    %v2302 = vadd.f32 %v2267, %v2299
    %v2303 = vxor.u32 %v2301, 2147483648
    %v2304 = vxor.u32 %v2302, 2147483648
    %v2305 = vmul.f32 %v2303, 1.442695
    %v2306 = vpow.pop %v2305
    %v2307 = vmul.f32 %v2304, 1.442695
    %v2308 = vpow.pop %v2307
    %v2309 = vadd.f32 %v2306, 1.0
    %v2310 = vadd.f32 %v2308, 1.0
    %v2311 = vrcp.pop %v2309
    %v2312 = vmul.f32 %v2309, %v2311
    %v2313 = vsub.f32 1.0, %v2312
    %v2314 = vmul.f32 %v2311, %v2313
    %v2315 = vadd.f32 %v2311, %v2314
    %vm2316 = vweird.f32 %v2309
    %vm2317 = vweird.f32 %v2311
    %vm2318 = vmor %vm2316, %vm2317
    %v2319 = vsel %vm2318, %v2311, %v2315
    %v2320 = vand.u32 2147483647, %v2309
    %vm2321 = vcmp.eq.f32.partialorder %v2320, 8.507059e+37
    %v2322 = vand.u32 %v2309, 2147483648
    %v2323 = vor.u32 1.1754944e-38, %v2322
    %v2324 = vsel %vm2321, %v2323, %v2319
    %v2325 = vmul.f32 1.0, %v2324
    %v2326 = vrcp.pop %v2310
    %v2327 = vmul.f32 %v2310, %v2326
    %v2328 = vsub.f32 1.0, %v2327
    %v2329 = vmul.f32 %v2326, %v2328
    %v2330 = vadd.f32 %v2326, %v2329
    %vm2331 = vweird.f32 %v2310
    %vm2332 = vweird.f32 %v2326
    %vm2333 = vmor %vm2331, %vm2332
    %v2334 = vsel %vm2333, %v2326, %v2330
    %v2335 = vand.u32 2147483647, %v2310
    %vm2336 = vcmp.eq.f32.partialorder %v2335, 8.507059e+37
    %v2337 = vand.u32 %v2310, 2147483648
    %v2338 = vor.u32 1.1754944e-38, %v2337
    %v2339 = vsel %vm2336, %v2338, %v2334
    %v2340 = vmul.f32 1.0, %v2339
    %v2341 = vmul.f32 %v2325, 2.0
    %v2342 = vmul.f32 %v2340, 2.0
    %v2343 = vsub.f32 %v2341, 1.0
    %v2344 = vsub.f32 %v2342, 1.0
    %v2345 = vmul.f32 %v2325, %v2167
    %v2346 = vmul.f32 %v2340, %v2168
    %2349 = vrot.lane.b32.xlu0 %v2343, 64
    %v2350 = vpop.permute.xlu0 %2349
    %2351 = vrot.lane.b32.xlu0 %v2344, 64
    %v2352 = vpop.permute.xlu0 %2351
    %v2355 = vmul.f32 %v2325, %v2350
    %v2356 = vmul.f32 %v2340, %v2352
    %2359 = vrot.lane.b32.xlu0 %v2355, 32
    %v2360 = vpop.permute.xlu0 %2359
    %2361 = vrot.lane.b32.xlu0 %v2356, 32
    %v2362 = vpop.permute.xlu0 %2361
    %v2365 = vadd.f32 %v2345, %v2360
    %v2366 = vadd.f32 %v2346, %v2362
    %v2367 = vtanh.pop %v2365
    %v2368 = vtanh.pop %v2366
    %2371 = vrot.lane.b32.xlu0 %v2367, 64
    %v2372 = vpop.permute.xlu0 %2371
    %2373 = vrot.lane.b32.xlu0 %v2368, 64
    %v2374 = vpop.permute.xlu0 %2373
    %v2377 = vmul.f32 %v2325, %v2372
    %v2378 = vmul.f32 %v2340, %v2374
    %2381 = vrot.lane.b32.xlu0 %v2377, 32
    %v2382 = vpop.permute.xlu0 %2381
    %2383 = vrot.lane.b32.xlu0 %v2378, 32
    %v2384 = vpop.permute.xlu0 %2383
    %v2387 = vsel %vm364, %v2382, 0.0
    %v2388 = vsel %vm364, %v2384, 0.0
    %v2390 = vsel %vm479, %v2387, 0
    %v2393 = vsel %vm479, %v2388, 0
    %2395 = vmatpush.msra.mxu0 0.0
    %2396 = vmatpush.msra.mxu0 0.0
    %2397 = vmatpush.msra.mxu0 0.0
    %2398 = vmatpush.msra.mxu0 0.0
    %2399 = vmatpush.msra.mxu0 0.0
    %2400 = vmatpush.msra.mxu0 0.0
    %2401 = vmatpush.msra.mxu0 0.0
    %2402 = vmatpush.msra.mxu0 0.0
    %2403 = vmatpush.msra.mxu0 %v209
    %2404 = vmatpush.msra.mxu0 %v208
    %2405 = vmatpush.msra.mxu0 %v207
    %2406 = vmatpush.msra.mxu0 %v206
    %2407 = vmatpush.msra.mxu0 %v205
    %2408 = vmatpush.msra.mxu0 %v204
    %2409 = vmatpush.msra.mxu0 %v203
    %2410 = vmatpush.msra.mxu0 %v202
    %2411 = vmatmul.f32.gmra.mxu0 %v2390
    %v2412 = vpop.f32.mrf.mxu0
    %v2413 = vadd.f32 %v222, %v2412
    %2414 = vmatmul.f32.gmra.mxu0 %v2393
    %v2415 = vpop.f32.mrf.mxu0
    %v2416 = vadd.f32 %v222, %v2415
    %2417 = vdwg.mxu0
    %v2418 = vxor.u32 %v2413, 2147483648
    %v2419 = vxor.u32 %v2416, 2147483648
    %v2420 = vmul.f32 %v2418, 1.442695
    %v2421 = vpow.pop %v2420
    %v2422 = vmul.f32 %v2419, 1.442695
    %v2423 = vpow.pop %v2422
    %v2424 = vadd.f32 %v2421, 1.0
    %v2425 = vadd.f32 %v2423, 1.0
    %v2426 = vrcp.pop %v2424
    %v2427 = vmul.f32 %v2424, %v2426
    %v2428 = vsub.f32 1.0, %v2427
    %v2429 = vmul.f32 %v2426, %v2428
    %v2430 = vadd.f32 %v2426, %v2429
    %vm2431 = vweird.f32 %v2424
    %vm2432 = vweird.f32 %v2426
    %vm2433 = vmor %vm2431, %vm2432
    %v2434 = vsel %vm2433, %v2426, %v2430
    %v2435 = vand.u32 2147483647, %v2424
    %vm2436 = vcmp.eq.f32.partialorder %v2435, 8.507059e+37
    %v2437 = vand.u32 %v2424, 2147483648
    %v2438 = vor.u32 1.1754944e-38, %v2437
    %v2439 = vsel %vm2436, %v2438, %v2434
    %v2440 = vmul.f32 1.0, %v2439
    %v2441 = vrcp.pop %v2425
    %v2442 = vmul.f32 %v2425, %v2441
    %v2443 = vsub.f32 1.0, %v2442
    %v2444 = vmul.f32 %v2441, %v2443
    %v2445 = vadd.f32 %v2441, %v2444
    %vm2446 = vweird.f32 %v2425
    %vm2447 = vweird.f32 %v2441
    %vm2448 = vmor %vm2446, %vm2447
    %v2449 = vsel %vm2448, %v2441, %v2445
    %v2450 = vand.u32 2147483647, %v2425
    %vm2451 = vcmp.eq.f32.partialorder %v2450, 8.507059e+37
    %v2452 = vand.u32 %v2425, 2147483648
    %v2453 = vor.u32 1.1754944e-38, %v2452
    %v2454 = vsel %vm2451, %v2453, %v2449
    %v2455 = vmul.f32 1.0, %v2454
    %v2456 = vmul.f32 %v2440, 2.0
    %v2457 = vmul.f32 %v2455, 2.0
    %v2458 = vsub.f32 %v2456, 1.0
    %v2459 = vsub.f32 %v2457, 1.0
    %v2460 = vmul.f32 %v2440, 0.0
    %v2461 = vmul.f32 %v2455, 0.0
    %2464 = vrot.lane.b32.xlu0 %v2458, 64
    %v2465 = vpop.permute.xlu0 %2464
    %2466 = vrot.lane.b32.xlu0 %v2459, 64
    %v2467 = vpop.permute.xlu0 %2466
    %v2470 = vmul.f32 %v2440, %v2465
    %v2471 = vmul.f32 %v2455, %v2467
    %2474 = vrot.lane.b32.xlu0 %v2470, 32
    %v2475 = vpop.permute.xlu0 %2474
    %2476 = vrot.lane.b32.xlu0 %v2471, 32
    %v2477 = vpop.permute.xlu0 %2476
    %v2480 = vadd.f32 %v2460, %v2475
    %v2481 = vadd.f32 %v2461, %v2477
    %v2482 = vtanh.pop %v2480
    %v2483 = vtanh.pop %v2481
    %2486 = vrot.lane.b32.xlu0 %v2482, 64
    %v2487 = vpop.permute.xlu0 %2486
    %2488 = vrot.lane.b32.xlu0 %v2483, 64
    %v2489 = vpop.permute.xlu0 %2488
    %v2492 = vmul.f32 %v2440, %v2487
    %v2493 = vmul.f32 %v2455, %v2489
    %2496 = vrot.lane.b32.xlu0 %v2492, 32
    %v2497 = vpop.permute.xlu0 %2496
    %2498 = vrot.lane.b32.xlu0 %v2493, 32
    %v2499 = vpop.permute.xlu0 %2498
    %v2502 = vsel %vm364, %v2497, 0.0
    %v2503 = vsel %vm364, %v2499, 0.0
    %vm2504 = vcmask 392192
    %v2506 = vsel %vm2504, %v2502, 0
    %v2509 = vsel %vm2504, %v2503, 0
    %2511 = vmatpush.msra.mxu0 0.0
    %2512 = vmatpush.msra.mxu0 0.0
    %2513 = vmatpush.msra.mxu0 0.0
    %2514 = vmatpush.msra.mxu0 0.0
    %2515 = vmatpush.msra.mxu0 0.0
    %2516 = vmatpush.msra.mxu0 0.0
    %2517 = vmatpush.msra.mxu0 0.0
    %2518 = vmatpush.msra.mxu0 0.0
    %2519 = vmatpush.msra.mxu0 0.0
    %2520 = vmatpush.msra.mxu0 0.0
    %2521 = vmatpush.msra.mxu0 %v215
    %2522 = vmatpush.msra.mxu0 %v214
    %2523 = vmatpush.msra.mxu0 %v213
    %2524 = vmatpush.msra.mxu0 %v212
    %2525 = vmatpush.msra.mxu0 %v211
    %2526 = vmatpush.msra.mxu0 %v210
    %2527 = vmatmul.f32.gmra.mxu0 %v2506
    %v2528 = vpop.f32.mrf.mxu0
    %v2529 = vadd.f32 %v226, %v2528
    %2530 = vmatmul.f32.gmra.mxu0 %v2509
    %v2531 = vpop.f32.mrf.mxu0
    %v2532 = vadd.f32 %v226, %v2531
    %2533 = vdwg.mxu0
    %v2534 = vxor.u32 %v2529, 2147483648
    %v2535 = vxor.u32 %v2532, 2147483648
    %v2536 = vmul.f32 %v2534, 1.442695
    %v2537 = vpow.pop %v2536
    %v2538 = vmul.f32 %v2535, 1.442695
    %v2539 = vpow.pop %v2538
    %v2540 = vadd.f32 %v2537, 1.0
    %v2541 = vadd.f32 %v2539, 1.0
    %v2542 = vrcp.pop %v2540
    %v2543 = vmul.f32 %v2540, %v2542
    %v2544 = vsub.f32 1.0, %v2543
    %v2545 = vmul.f32 %v2542, %v2544
    %v2546 = vadd.f32 %v2542, %v2545
    %vm2547 = vweird.f32 %v2540
    %vm2548 = vweird.f32 %v2542
    %vm2549 = vmor %vm2547, %vm2548
    %v2550 = vsel %vm2549, %v2542, %v2546
    %v2551 = vand.u32 2147483647, %v2540
    %vm2552 = vcmp.eq.f32.partialorder %v2551, 8.507059e+37
    %v2553 = vand.u32 %v2540, 2147483648
    %v2554 = vor.u32 1.1754944e-38, %v2553
    %v2555 = vsel %vm2552, %v2554, %v2550
    %v2556 = vmul.f32 1.0, %v2555
    %v2557 = vrcp.pop %v2541
    %v2558 = vmul.f32 %v2541, %v2557
    %v2559 = vsub.f32 1.0, %v2558
    %v2560 = vmul.f32 %v2557, %v2559
    %v2561 = vadd.f32 %v2557, %v2560
    %vm2562 = vweird.f32 %v2541
    %vm2563 = vweird.f32 %v2557
    %vm2564 = vmor %vm2562, %vm2563
    %v2565 = vsel %vm2564, %v2557, %v2561
    %v2566 = vand.u32 2147483647, %v2541
    %vm2567 = vcmp.eq.f32.partialorder %v2566, 8.507059e+37
    %v2568 = vand.u32 %v2541, 2147483648
    %v2569 = vor.u32 1.1754944e-38, %v2568
    %v2570 = vsel %vm2567, %v2569, %v2565
    %v2571 = vmul.f32 1.0, %v2570
    %v2572 = vmul.f32 %v2556, 2.0
    %v2573 = vmul.f32 %v2571, 2.0
    %v2574 = vsub.f32 %v2572, 1.0
    %v2575 = vsub.f32 %v2573, 1.0
    %v2576 = vmul.f32 %v2556, 0.0
    %v2577 = vmul.f32 %v2571, 0.0
    %2580 = vrot.lane.b32.xlu0 %v2574, 96
    %v2581 = vpop.permute.xlu0 %2580
    %2582 = vrot.lane.b32.xlu0 %v2575, 96
    %v2583 = vpop.permute.xlu0 %2582
    %v2586 = vmul.f32 %v2556, %v2581
    %v2587 = vmul.f32 %v2571, %v2583
    %2590 = vrot.lane.b32.xlu0 %v2586, 16
    %v2591 = vpop.permute.xlu0 %2590
    %2592 = vrot.lane.b32.xlu0 %v2587, 16
    %v2593 = vpop.permute.xlu0 %2592
    %v2596 = vadd.f32 %v2576, %v2591
    %v2597 = vadd.f32 %v2577, %v2593
    %v2598 = vtanh.pop %v2596
    %v2599 = vtanh.pop %v2597
    %2602 = vrot.lane.b32.xlu0 %v2598, 32
    %v2603 = vpop.permute.xlu0 %2602
    %2604 = vrot.lane.b32.xlu0 %v2599, 32
    %v2605 = vpop.permute.xlu0 %2604
    %v2608 = vmul.f32 %v2556, %v2603
    %v2609 = vmul.f32 %v2571, %v2605
    %v2610 = vsel %vm364, %v2382, 0
    %v2612 = vsel %vm364, %v2384, 0
    %2614 = vmatpush.msra.mxu0 0.0
    %2615 = vmatpush.msra.mxu0 0.0
    %2616 = vmatpush.msra.mxu0 0.0
    %2617 = vmatpush.msra.mxu0 0.0
    %2618 = vmatpush.msra.mxu0 0.0
    %2619 = vmatpush.msra.mxu0 0.0
    %2620 = vmatpush.msra.mxu0 0.0
    %2621 = vmatpush.msra.mxu0 0.0
    %2622 = vmatpush.msra.mxu0 0.0
    %2623 = vmatpush.msra.mxu0 0.0
    %2624 = vmatpush.msra.mxu0 0.0
    %2625 = vmatpush.msra.mxu0 0.0
    %2626 = vmatpush.msra.mxu0 %v201
    %2627 = vmatpush.msra.mxu0 %v200
    %2628 = vmatpush.msra.mxu0 %v199
    %2629 = vmatpush.msra.mxu0 %v198
    %2630 = vmatmul.f32.gmra.mxu0 %v2610
    %v2631 = vpop.f32.mrf.mxu0
    %v2632 = vadd.f32 0.0, %v2631
    %2633 = vmatmul.f32.gmra.mxu0 %v2612
    %v2634 = vpop.f32.mrf.mxu0
    %v2635 = vadd.f32 0.0, %v2634
    %2636 = vdwg.mxu0
    %v2637 = vadd.f32 %v2264, %v2632
    %v2638 = vadd.f32 %v2265, %v2635
    %v2639 = vxor.u32 %v2637, 2147483648
    %v2640 = vxor.u32 %v2638, 2147483648
    %v2641 = vmul.f32 %v2639, 1.442695
    %v2642 = vpow.pop %v2641
    %v2643 = vmul.f32 %v2640, 1.442695
    %v2644 = vpow.pop %v2643
    %v2645 = vadd.f32 %v2642, 1.0
    %v2646 = vadd.f32 %v2644, 1.0
    %v2647 = vrcp.pop %v2645
    %v2648 = vmul.f32 %v2645, %v2647
    %v2649 = vsub.f32 1.0, %v2648
    %v2650 = vmul.f32 %v2647, %v2649
    %v2651 = vadd.f32 %v2647, %v2650
    %vm2652 = vweird.f32 %v2645
    %vm2653 = vweird.f32 %v2647
    %vm2654 = vmor %vm2652, %vm2653
    %v2655 = vsel %vm2654, %v2647, %v2651
    %v2656 = vand.u32 2147483647, %v2645
    %vm2657 = vcmp.eq.f32.partialorder %v2656, 8.507059e+37
    %v2658 = vand.u32 %v2645, 2147483648
    %v2659 = vor.u32 1.1754944e-38, %v2658
    %v2660 = vsel %vm2657, %v2659, %v2655
    %v2661 = vmul.f32 1.0, %v2660
    %v2662 = vrcp.pop %v2646
    %v2663 = vmul.f32 %v2646, %v2662
    %v2664 = vsub.f32 1.0, %v2663
    %v2665 = vmul.f32 %v2662, %v2664
    %v2666 = vadd.f32 %v2662, %v2665
    %vm2667 = vweird.f32 %v2646
    %vm2668 = vweird.f32 %v2662
    %vm2669 = vmor %vm2667, %vm2668
    %v2670 = vsel %vm2669, %v2662, %v2666
    %v2671 = vand.u32 2147483647, %v2646
    %vm2672 = vcmp.eq.f32.partialorder %v2671, 8.507059e+37
    %v2673 = vand.u32 %v2646, 2147483648
    %v2674 = vor.u32 1.1754944e-38, %v2673
    %v2675 = vsel %vm2672, %v2674, %v2670
    %v2676 = vmul.f32 1.0, %v2675
    %v2677 = vmul.f32 %v2661, 2.0
    %v2678 = vmul.f32 %v2676, 2.0
    %v2679 = vsub.f32 %v2677, 1.0
    %v2680 = vsub.f32 %v2678, 1.0
    %v2681 = vmul.f32 %v2661, %v2365
    %v2682 = vmul.f32 %v2676, %v2366
    %2685 = vrot.lane.b32.xlu0 %v2679, 64
    %v2686 = vpop.permute.xlu0 %2685
    %2687 = vrot.lane.b32.xlu0 %v2680, 64
    %v2688 = vpop.permute.xlu0 %2687
    %v2691 = vmul.f32 %v2661, %v2686
    %v2692 = vmul.f32 %v2676, %v2688
    %2695 = vrot.lane.b32.xlu0 %v2691, 32
    %v2696 = vpop.permute.xlu0 %2695
    %2697 = vrot.lane.b32.xlu0 %v2692, 32
    %v2698 = vpop.permute.xlu0 %2697
    %v2701 = vadd.f32 %v2681, %v2696
    %v2702 = vadd.f32 %v2682, %v2698
    %v2703 = vtanh.pop %v2701
    %v2704 = vtanh.pop %v2702
    %2707 = vrot.lane.b32.xlu0 %v2703, 64
    %v2708 = vpop.permute.xlu0 %2707
    %2709 = vrot.lane.b32.xlu0 %v2704, 64
    %v2710 = vpop.permute.xlu0 %2709
    %v2713 = vmul.f32 %v2661, %v2708
    %v2714 = vmul.f32 %v2676, %v2710
    %2717 = vrot.lane.b32.xlu0 %v2713, 32
    %v2718 = vpop.permute.xlu0 %2717
    %2719 = vrot.lane.b32.xlu0 %v2714, 32
    %v2720 = vpop.permute.xlu0 %2719
    %2723 = vrot.lane.b32.xlu0 %v2492, 64
    %v2724 = vpop.permute.xlu0 %2723
    %2725 = vrot.lane.b32.xlu0 %v2493, 64
    %v2726 = vpop.permute.xlu0 %2725
    %v2729 = vsel %vm364, %v2718, %v2724
    %v2730 = vsel %vm364, %v2720, %v2726
    %v2732 = vsel %vm479, %v2729, 0
    %v2735 = vsel %vm479, %v2730, 0
    %2737 = vmatpush.msra.mxu0 0.0
    %2738 = vmatpush.msra.mxu0 0.0
    %2739 = vmatpush.msra.mxu0 0.0
    %2740 = vmatpush.msra.mxu0 0.0
    %2741 = vmatpush.msra.mxu0 0.0
    %2742 = vmatpush.msra.mxu0 0.0
    %2743 = vmatpush.msra.mxu0 0.0
    %2744 = vmatpush.msra.mxu0 0.0
    %2745 = vmatpush.msra.mxu0 %v209
    %2746 = vmatpush.msra.mxu0 %v208
    %2747 = vmatpush.msra.mxu0 %v207
    %2748 = vmatpush.msra.mxu0 %v206
    %2749 = vmatpush.msra.mxu0 %v205
    %2750 = vmatpush.msra.mxu0 %v204
    %2751 = vmatpush.msra.mxu0 %v203
    %2752 = vmatpush.msra.mxu0 %v202
    %2753 = vmatmul.f32.gmra.mxu0 %v2732
    %v2754 = vpop.f32.mrf.mxu0
    %v2755 = vadd.f32 %v222, %v2754
    %2756 = vmatmul.f32.gmra.mxu0 %v2735
    %v2757 = vpop.f32.mrf.mxu0
    %v2758 = vadd.f32 %v222, %v2757
    %2759 = vdwg.mxu0
    %v2760 = vxor.u32 %v2755, 2147483648
    %v2761 = vxor.u32 %v2758, 2147483648
    %v2762 = vmul.f32 %v2760, 1.442695
    %v2763 = vpow.pop %v2762
    %v2764 = vmul.f32 %v2761, 1.442695
    %v2765 = vpow.pop %v2764
    %v2766 = vadd.f32 %v2763, 1.0
    %v2767 = vadd.f32 %v2765, 1.0
    %v2768 = vrcp.pop %v2766
    %v2769 = vmul.f32 %v2766, %v2768
    %v2770 = vsub.f32 1.0, %v2769
    %v2771 = vmul.f32 %v2768, %v2770
    %v2772 = vadd.f32 %v2768, %v2771
    %vm2773 = vweird.f32 %v2766
    %vm2774 = vweird.f32 %v2768
    %vm2775 = vmor %vm2773, %vm2774
    %v2776 = vsel %vm2775, %v2768, %v2772
    %v2777 = vand.u32 2147483647, %v2766
    %vm2778 = vcmp.eq.f32.partialorder %v2777, 8.507059e+37
    %v2779 = vand.u32 %v2766, 2147483648
    %v2780 = vor.u32 1.1754944e-38, %v2779
    %v2781 = vsel %vm2778, %v2780, %v2776
    %v2782 = vmul.f32 1.0, %v2781
    %v2783 = vrcp.pop %v2767
    %v2784 = vmul.f32 %v2767, %v2783
    %v2785 = vsub.f32 1.0, %v2784
    %v2786 = vmul.f32 %v2783, %v2785
    %v2787 = vadd.f32 %v2783, %v2786
    %vm2788 = vweird.f32 %v2767
    %vm2789 = vweird.f32 %v2783
    %vm2790 = vmor %vm2788, %vm2789
    %v2791 = vsel %vm2790, %v2783, %v2787
    %v2792 = vand.u32 2147483647, %v2767
    %vm2793 = vcmp.eq.f32.partialorder %v2792, 8.507059e+37
    %v2794 = vand.u32 %v2767, 2147483648
    %v2795 = vor.u32 1.1754944e-38, %v2794
    %v2796 = vsel %vm2793, %v2795, %v2791
    %v2797 = vmul.f32 1.0, %v2796
    %v2798 = vmul.f32 %v2782, 2.0
    %v2799 = vmul.f32 %v2797, 2.0
    %v2800 = vsub.f32 %v2798, 1.0
    %v2801 = vsub.f32 %v2799, 1.0
    %v2802 = vmul.f32 %v2782, %v2480
    %v2803 = vmul.f32 %v2797, %v2481
    %2806 = vrot.lane.b32.xlu0 %v2800, 64
    %v2807 = vpop.permute.xlu0 %2806
    %2808 = vrot.lane.b32.xlu0 %v2801, 64
    %v2809 = vpop.permute.xlu0 %2808
    %v2812 = vmul.f32 %v2782, %v2807
    %v2813 = vmul.f32 %v2797, %v2809
    %2816 = vrot.lane.b32.xlu0 %v2812, 32
    %v2817 = vpop.permute.xlu0 %2816
    %2818 = vrot.lane.b32.xlu0 %v2813, 32
    %v2819 = vpop.permute.xlu0 %2818
    %v2822 = vadd.f32 %v2802, %v2817
    %v2823 = vadd.f32 %v2803, %v2819
    %v2824 = vtanh.pop %v2822
    %v2825 = vtanh.pop %v2823
    %2828 = vrot.lane.b32.xlu0 %v2824, 64
    %v2829 = vpop.permute.xlu0 %2828
    %2830 = vrot.lane.b32.xlu0 %v2825, 64
    %v2831 = vpop.permute.xlu0 %2830
    %v2834 = vmul.f32 %v2782, %v2829
    %v2835 = vmul.f32 %v2797, %v2831
    %2838 = vrot.lane.b32.xlu0 %v2834, 32
    %v2839 = vpop.permute.xlu0 %2838
    %2840 = vrot.lane.b32.xlu0 %v2835, 32
    %v2841 = vpop.permute.xlu0 %2840
    %2846 = vrot.lane.b32.xlu0 %v2608, 112
    %v2847 = vpop.permute.xlu0 %2846
    %2848 = vrot.lane.b32.xlu0 %v2609, 112
    %v2849 = vpop.permute.xlu0 %2848
    %v2852 = vsel %vm364, %v2839, %v2847
    %v2853 = vsel %vm364, %v2841, %v2849
    %v2855 = vsel %vm2504, %v2852, 0
    %v2858 = vsel %vm2504, %v2853, 0
    %2860 = vmatpush.msra.mxu0 0.0
    %2861 = vmatpush.msra.mxu0 0.0
    %2862 = vmatpush.msra.mxu0 0.0
    %2863 = vmatpush.msra.mxu0 0.0
    %2864 = vmatpush.msra.mxu0 0.0
    %2865 = vmatpush.msra.mxu0 0.0
    %2866 = vmatpush.msra.mxu0 0.0
    %2867 = vmatpush.msra.mxu0 0.0
    %2868 = vmatpush.msra.mxu0 0.0
    %2869 = vmatpush.msra.mxu0 0.0
    %2870 = vmatpush.msra.mxu0 %v215
    %2871 = vmatpush.msra.mxu0 %v214
    %2872 = vmatpush.msra.mxu0 %v213
    %2873 = vmatpush.msra.mxu0 %v212
    %2874 = vmatpush.msra.mxu0 %v211
    %2875 = vmatpush.msra.mxu0 %v210
    %2876 = vmatmul.f32.gmra.mxu0 %v2855
    %v2877 = vpop.f32.mrf.mxu0
    %v2878 = vadd.f32 %v226, %v2877
    %2879 = vmatmul.f32.gmra.mxu0 %v2858
    %v2880 = vpop.f32.mrf.mxu0
    %v2881 = vadd.f32 %v226, %v2880
    %2882 = vdwg.mxu0
    %v2883 = vxor.u32 %v2878, 2147483648
    %v2884 = vxor.u32 %v2881, 2147483648
    %v2885 = vmul.f32 %v2883, 1.442695
    %v2886 = vpow.pop %v2885
    %v2887 = vmul.f32 %v2884, 1.442695
    %v2888 = vpow.pop %v2887
    %v2889 = vadd.f32 %v2886, 1.0
    %v2890 = vadd.f32 %v2888, 1.0
    %v2891 = vrcp.pop %v2889
    %v2892 = vmul.f32 %v2889, %v2891
    %v2893 = vsub.f32 1.0, %v2892
    %v2894 = vmul.f32 %v2891, %v2893
    %v2895 = vadd.f32 %v2891, %v2894
    %vm2896 = vweird.f32 %v2889
    %vm2897 = vweird.f32 %v2891
    %vm2898 = vmor %vm2896, %vm2897
    %v2899 = vsel %vm2898, %v2891, %v2895
    %v2900 = vand.u32 2147483647, %v2889
    %vm2901 = vcmp.eq.f32.partialorder %v2900, 8.507059e+37
    %v2902 = vand.u32 %v2889, 2147483648
    %v2903 = vor.u32 1.1754944e-38, %v2902
    %v2904 = vsel %vm2901, %v2903, %v2899
    %v2905 = vmul.f32 1.0, %v2904
    %v2906 = vrcp.pop %v2890
    %v2907 = vmul.f32 %v2890, %v2906
    %v2908 = vsub.f32 1.0, %v2907
    %v2909 = vmul.f32 %v2906, %v2908
    %v2910 = vadd.f32 %v2906, %v2909
    %vm2911 = vweird.f32 %v2890
    %vm2912 = vweird.f32 %v2906
    %vm2913 = vmor %vm2911, %vm2912
    %v2914 = vsel %vm2913, %v2906, %v2910
    %v2915 = vand.u32 2147483647, %v2890
    %vm2916 = vcmp.eq.f32.partialorder %v2915, 8.507059e+37
    %v2917 = vand.u32 %v2890, 2147483648
    %v2918 = vor.u32 1.1754944e-38, %v2917
    %v2919 = vsel %vm2916, %v2918, %v2914
    %v2920 = vmul.f32 1.0, %v2919
    %v2921 = vmul.f32 %v2905, 2.0
    %v2922 = vmul.f32 %v2920, 2.0
    %v2923 = vsub.f32 %v2921, 1.0
    %v2924 = vsub.f32 %v2922, 1.0
    %v2925 = vmul.f32 %v2905, %v2596
    %v2926 = vmul.f32 %v2920, %v2597
    %2929 = vrot.lane.b32.xlu0 %v2923, 96
    %v2930 = vpop.permute.xlu0 %2929
    %2931 = vrot.lane.b32.xlu0 %v2924, 96
    %v2932 = vpop.permute.xlu0 %2931
    %v2935 = vmul.f32 %v2905, %v2930
    %v2936 = vmul.f32 %v2920, %v2932
    %2939 = vrot.lane.b32.xlu0 %v2935, 16
    %v2940 = vpop.permute.xlu0 %2939
    %2941 = vrot.lane.b32.xlu0 %v2936, 16
    %v2942 = vpop.permute.xlu0 %2941
    %v2945 = vadd.f32 %v2925, %v2940
    %v2946 = vadd.f32 %v2926, %v2942
    %v2947 = vtanh.pop %v2945
    %v2948 = vtanh.pop %v2946
    %2951 = vrot.lane.b32.xlu0 %v2947, 32
    %v2952 = vpop.permute.xlu0 %2951
    %2953 = vrot.lane.b32.xlu0 %v2948, 32
    %v2954 = vpop.permute.xlu0 %2953
    %v2957 = vmul.f32 %v2905, %v2952
    %v2958 = vmul.f32 %v2920, %v2954
    %v2959 = vsel %vm364, %v2718, 0
    %v2961 = vsel %vm364, %v2720, 0
    %2963 = vmatpush.msra.mxu0 0.0
    %2964 = vmatpush.msra.mxu0 0.0
    %2965 = vmatpush.msra.mxu0 0.0
    %2966 = vmatpush.msra.mxu0 0.0
    %2967 = vmatpush.msra.mxu0 0.0
    %2968 = vmatpush.msra.mxu0 0.0
    %2969 = vmatpush.msra.mxu0 0.0
    %2970 = vmatpush.msra.mxu0 0.0
    %2971 = vmatpush.msra.mxu0 0.0
    %2972 = vmatpush.msra.mxu0 0.0
    %2973 = vmatpush.msra.mxu0 0.0
    %2974 = vmatpush.msra.mxu0 0.0
    %2975 = vmatpush.msra.mxu0 %v201
    %2976 = vmatpush.msra.mxu0 %v200
    %2977 = vmatpush.msra.mxu0 %v199
    %2978 = vmatpush.msra.mxu0 %v198
    %2979 = vmatmul.f32.gmra.mxu0 %v2959
    %v2980 = vpop.f32.mrf.mxu0
    %v2981 = vadd.f32 0.0, %v2980
    %2982 = vmatmul.f32.gmra.mxu0 %v2961
    %v2983 = vpop.f32.mrf.mxu0
    %v2984 = vadd.f32 0.0, %v2983
    %2985 = vdwg.mxu0
    %v2986 = vadd.f32 %v2262, %v2981
    %v2987 = vadd.f32 %v2263, %v2984
    %v2988 = vxor.u32 %v2986, 2147483648
    %v2989 = vxor.u32 %v2987, 2147483648
    %v2990 = vmul.f32 %v2988, 1.442695
    %v2991 = vpow.pop %v2990
    %v2992 = vmul.f32 %v2989, 1.442695
    %v2993 = vpow.pop %v2992
    %v2994 = vadd.f32 %v2991, 1.0
    %v2995 = vadd.f32 %v2993, 1.0
    %v2996 = vrcp.pop %v2994
    %v2997 = vmul.f32 %v2994, %v2996
    %v2998 = vsub.f32 1.0, %v2997
    %v2999 = vmul.f32 %v2996, %v2998
    %v3000 = vadd.f32 %v2996, %v2999
    %vm3001 = vweird.f32 %v2994
    %vm3002 = vweird.f32 %v2996
    %vm3003 = vmor %vm3001, %vm3002
    %v3004 = vsel %vm3003, %v2996, %v3000
    %v3005 = vand.u32 2147483647, %v2994
    %vm3006 = vcmp.eq.f32.partialorder %v3005, 8.507059e+37
    %v3007 = vand.u32 %v2994, 2147483648
    %v3008 = vor.u32 1.1754944e-38, %v3007
    %v3009 = vsel %vm3006, %v3008, %v3004
    %v3010 = vmul.f32 1.0, %v3009
    %v3011 = vrcp.pop %v2995
    %v3012 = vmul.f32 %v2995, %v3011
    %v3013 = vsub.f32 1.0, %v3012
    %v3014 = vmul.f32 %v3011, %v3013
    %v3015 = vadd.f32 %v3011, %v3014
    %vm3016 = vweird.f32 %v2995
    %vm3017 = vweird.f32 %v3011
    %vm3018 = vmor %vm3016, %vm3017
    %v3019 = vsel %vm3018, %v3011, %v3015
    %v3020 = vand.u32 2147483647, %v2995
    %vm3021 = vcmp.eq.f32.partialorder %v3020, 8.507059e+37
    %v3022 = vand.u32 %v2995, 2147483648
    %v3023 = vor.u32 1.1754944e-38, %v3022
    %v3024 = vsel %vm3021, %v3023, %v3019
    %v3025 = vmul.f32 1.0, %v3024
    %v3026 = vmul.f32 %v3010, 2.0
    %v3027 = vmul.f32 %v3025, 2.0
    %v3028 = vsub.f32 %v3026, 1.0
    %v3029 = vsub.f32 %v3027, 1.0
    %v3030 = vmul.f32 %v3010, %v2701
    %v3031 = vmul.f32 %v3025, %v2702
    %3034 = vrot.lane.b32.xlu0 %v3028, 64
    %v3035 = vpop.permute.xlu0 %3034
    %3036 = vrot.lane.b32.xlu0 %v3029, 64
    %v3037 = vpop.permute.xlu0 %3036
    %v3040 = vmul.f32 %v3010, %v3035
    %v3041 = vmul.f32 %v3025, %v3037
    %3044 = vrot.lane.b32.xlu0 %v3040, 32
    %v3045 = vpop.permute.xlu0 %3044
    %3046 = vrot.lane.b32.xlu0 %v3041, 32
    %v3047 = vpop.permute.xlu0 %3046
    %v3050 = vadd.f32 %v3030, %v3045
    %v3051 = vadd.f32 %v3031, %v3047
    %v3052 = vtanh.pop %v3050
    %v3053 = vtanh.pop %v3051
    %3056 = vrot.lane.b32.xlu0 %v3052, 64
    %v3057 = vpop.permute.xlu0 %3056
    %3058 = vrot.lane.b32.xlu0 %v3053, 64
    %v3059 = vpop.permute.xlu0 %3058
    %v3062 = vmul.f32 %v3010, %v3057
    %v3063 = vmul.f32 %v3025, %v3059
    %3066 = vrot.lane.b32.xlu0 %v3062, 32
    %v3067 = vpop.permute.xlu0 %3066
    %3068 = vrot.lane.b32.xlu0 %v3063, 32
    %v3069 = vpop.permute.xlu0 %3068
    %3072 = vrot.lane.b32.xlu0 %v2834, 64
    %v3073 = vpop.permute.xlu0 %3072
    %3074 = vrot.lane.b32.xlu0 %v2835, 64
    %v3075 = vpop.permute.xlu0 %3074
    %v3078 = vsel %vm364, %v3067, %v3073
    %v3079 = vsel %vm364, %v3069, %v3075
    %v3081 = vsel %vm479, %v3078, 0
    %v3084 = vsel %vm479, %v3079, 0
    %3086 = vmatpush.msra.mxu0 0.0
    %3087 = vmatpush.msra.mxu0 0.0
    %3088 = vmatpush.msra.mxu0 0.0
    %3089 = vmatpush.msra.mxu0 0.0
    %3090 = vmatpush.msra.mxu0 0.0
    %3091 = vmatpush.msra.mxu0 0.0
    %3092 = vmatpush.msra.mxu0 0.0
    %3093 = vmatpush.msra.mxu0 0.0
    %3094 = vmatpush.msra.mxu0 %v209
    %3095 = vmatpush.msra.mxu0 %v208
    %3096 = vmatpush.msra.mxu0 %v207
    %3097 = vmatpush.msra.mxu0 %v206
    %3098 = vmatpush.msra.mxu0 %v205
    %3099 = vmatpush.msra.mxu0 %v204
    %3100 = vmatpush.msra.mxu0 %v203
    %3101 = vmatpush.msra.mxu0 %v202
    %3102 = vmatmul.f32.gmra.mxu0 %v3081
    %v3103 = vpop.f32.mrf.mxu0
    %v3104 = vadd.f32 %v222, %v3103
    %3105 = vmatmul.f32.gmra.mxu0 %v3084
    %v3106 = vpop.f32.mrf.mxu0
    %v3107 = vadd.f32 %v222, %v3106
    %3108 = vdwg.mxu0
    %v3109 = vxor.u32 %v3104, 2147483648
    %v3110 = vxor.u32 %v3107, 2147483648
    %v3111 = vmul.f32 %v3109, 1.442695
    %v3112 = vpow.pop %v3111
    %v3113 = vmul.f32 %v3110, 1.442695
    %v3114 = vpow.pop %v3113
    %v3115 = vadd.f32 %v3112, 1.0
    %v3116 = vadd.f32 %v3114, 1.0
    %v3117 = vrcp.pop %v3115
    %v3118 = vmul.f32 %v3115, %v3117
    %v3119 = vsub.f32 1.0, %v3118
    %v3120 = vmul.f32 %v3117, %v3119
    %v3121 = vadd.f32 %v3117, %v3120
    %vm3122 = vweird.f32 %v3115
    %vm3123 = vweird.f32 %v3117
    %vm3124 = vmor %vm3122, %vm3123
    %v3125 = vsel %vm3124, %v3117, %v3121
    %v3126 = vand.u32 2147483647, %v3115
    %vm3127 = vcmp.eq.f32.partialorder %v3126, 8.507059e+37
    %v3128 = vand.u32 %v3115, 2147483648
    %v3129 = vor.u32 1.1754944e-38, %v3128
    %v3130 = vsel %vm3127, %v3129, %v3125
    %v3131 = vmul.f32 1.0, %v3130
    %v3132 = vrcp.pop %v3116
    %v3133 = vmul.f32 %v3116, %v3132
    %v3134 = vsub.f32 1.0, %v3133
    %v3135 = vmul.f32 %v3132, %v3134
    %v3136 = vadd.f32 %v3132, %v3135
    %vm3137 = vweird.f32 %v3116
    %vm3138 = vweird.f32 %v3132
    %vm3139 = vmor %vm3137, %vm3138
    %v3140 = vsel %vm3139, %v3132, %v3136
    %v3141 = vand.u32 2147483647, %v3116
    %vm3142 = vcmp.eq.f32.partialorder %v3141, 8.507059e+37
    %v3143 = vand.u32 %v3116, 2147483648
    %v3144 = vor.u32 1.1754944e-38, %v3143
    %v3145 = vsel %vm3142, %v3144, %v3140
    %v3146 = vmul.f32 1.0, %v3145
    %v3147 = vmul.f32 %v3131, 2.0
    %v3148 = vmul.f32 %v3146, 2.0
    %v3149 = vsub.f32 %v3147, 1.0
    %v3150 = vsub.f32 %v3148, 1.0
    %v3151 = vmul.f32 %v3131, %v2822
    %v3152 = vmul.f32 %v3146, %v2823
    %3155 = vrot.lane.b32.xlu0 %v3149, 64
    %v3156 = vpop.permute.xlu0 %3155
    %3157 = vrot.lane.b32.xlu0 %v3150, 64
    %v3158 = vpop.permute.xlu0 %3157
    %v3161 = vmul.f32 %v3131, %v3156
    %v3162 = vmul.f32 %v3146, %v3158
    %3165 = vrot.lane.b32.xlu0 %v3161, 32
    %v3166 = vpop.permute.xlu0 %3165
    %3167 = vrot.lane.b32.xlu0 %v3162, 32
    %v3168 = vpop.permute.xlu0 %3167
    %v3171 = vadd.f32 %v3151, %v3166
    %v3172 = vadd.f32 %v3152, %v3168
    %v3173 = vtanh.pop %v3171
    %v3174 = vtanh.pop %v3172
    %3177 = vrot.lane.b32.xlu0 %v3173, 64
    %v3178 = vpop.permute.xlu0 %3177
    %3179 = vrot.lane.b32.xlu0 %v3174, 64
    %v3180 = vpop.permute.xlu0 %3179
    %v3183 = vmul.f32 %v3131, %v3178
    %v3184 = vmul.f32 %v3146, %v3180
    %3187 = vrot.lane.b32.xlu0 %v3183, 32
    %v3188 = vpop.permute.xlu0 %3187
    %3189 = vrot.lane.b32.xlu0 %v3184, 32
    %v3190 = vpop.permute.xlu0 %3189
    %3195 = vrot.lane.b32.xlu0 %v2957, 112
    %v3196 = vpop.permute.xlu0 %3195
    %3197 = vrot.lane.b32.xlu0 %v2958, 112
    %v3198 = vpop.permute.xlu0 %3197
    %v3201 = vsel %vm364, %v3188, %v3196
    %v3202 = vsel %vm364, %v3190, %v3198
    %v3204 = vsel %vm2504, %v3201, 0
    %v3207 = vsel %vm2504, %v3202, 0
    %3209 = vmatpush.msra.mxu0 0.0
    %3210 = vmatpush.msra.mxu0 0.0
    %3211 = vmatpush.msra.mxu0 0.0
    %3212 = vmatpush.msra.mxu0 0.0
    %3213 = vmatpush.msra.mxu0 0.0
    %3214 = vmatpush.msra.mxu0 0.0
    %3215 = vmatpush.msra.mxu0 0.0
    %3216 = vmatpush.msra.mxu0 0.0
    %3217 = vmatpush.msra.mxu0 0.0
    %3218 = vmatpush.msra.mxu0 0.0
    %3219 = vmatpush.msra.mxu0 %v215
    %3220 = vmatpush.msra.mxu0 %v214
    %3221 = vmatpush.msra.mxu0 %v213
    %3222 = vmatpush.msra.mxu0 %v212
    %3223 = vmatpush.msra.mxu0 %v211
    %3224 = vmatpush.msra.mxu0 %v210
    %3225 = vmatmul.f32.gmra.mxu0 %v3204
    %v3226 = vpop.f32.mrf.mxu0
    %v3227 = vadd.f32 %v226, %v3226
    %3228 = vmatmul.f32.gmra.mxu0 %v3207
    %v3229 = vpop.f32.mrf.mxu0
    %v3230 = vadd.f32 %v226, %v3229
    %3231 = vdwg.mxu0
    %v3232 = vxor.u32 %v3227, 2147483648
    %v3233 = vxor.u32 %v3230, 2147483648
    %v3234 = vmul.f32 %v3232, 1.442695
    %v3235 = vpow.pop %v3234
    %v3236 = vmul.f32 %v3233, 1.442695
    %v3237 = vpow.pop %v3236
    %v3238 = vadd.f32 %v3235, 1.0
    %v3239 = vadd.f32 %v3237, 1.0
    %v3240 = vrcp.pop %v3238
    %v3241 = vmul.f32 %v3238, %v3240
    %v3242 = vsub.f32 1.0, %v3241
    %v3243 = vmul.f32 %v3240, %v3242
    %v3244 = vadd.f32 %v3240, %v3243
    %vm3245 = vweird.f32 %v3238
    %vm3246 = vweird.f32 %v3240
    %vm3247 = vmor %vm3245, %vm3246
    %v3248 = vsel %vm3247, %v3240, %v3244
    %v3249 = vand.u32 2147483647, %v3238
    %vm3250 = vcmp.eq.f32.partialorder %v3249, 8.507059e+37
    %v3251 = vand.u32 %v3238, 2147483648
    %v3252 = vor.u32 1.1754944e-38, %v3251
    %v3253 = vsel %vm3250, %v3252, %v3248
    %v3254 = vmul.f32 1.0, %v3253
    %v3255 = vrcp.pop %v3239
    %v3256 = vmul.f32 %v3239, %v3255
    %v3257 = vsub.f32 1.0, %v3256
    %v3258 = vmul.f32 %v3255, %v3257
    %v3259 = vadd.f32 %v3255, %v3258
    %vm3260 = vweird.f32 %v3239
    %vm3261 = vweird.f32 %v3255
    %vm3262 = vmor %vm3260, %vm3261
    %v3263 = vsel %vm3262, %v3255, %v3259
    %v3264 = vand.u32 2147483647, %v3239
    %vm3265 = vcmp.eq.f32.partialorder %v3264, 8.507059e+37
    %v3266 = vand.u32 %v3239, 2147483648
    %v3267 = vor.u32 1.1754944e-38, %v3266
    %v3268 = vsel %vm3265, %v3267, %v3263
    %v3269 = vmul.f32 1.0, %v3268
    %v3270 = vmul.f32 %v3254, 2.0
    %v3271 = vmul.f32 %v3269, 2.0
    %v3272 = vsub.f32 %v3270, 1.0
    %v3273 = vsub.f32 %v3271, 1.0
    %v3274 = vmul.f32 %v3254, %v2945
    %v3275 = vmul.f32 %v3269, %v2946
    %3278 = vrot.lane.b32.xlu0 %v3272, 96
    %v3279 = vpop.permute.xlu0 %3278
    %3280 = vrot.lane.b32.xlu0 %v3273, 96
    %v3281 = vpop.permute.xlu0 %3280
    %v3284 = vmul.f32 %v3254, %v3279
    %v3285 = vmul.f32 %v3269, %v3281
    %3288 = vrot.lane.b32.xlu0 %v3284, 16
    %v3289 = vpop.permute.xlu0 %3288
    %3290 = vrot.lane.b32.xlu0 %v3285, 16
    %v3291 = vpop.permute.xlu0 %3290
    %v3294 = vadd.f32 %v3274, %v3289
    %v3295 = vadd.f32 %v3275, %v3291
    %v3296 = vtanh.pop %v3294
    %v3297 = vtanh.pop %v3295
    %3300 = vrot.lane.b32.xlu0 %v3296, 32
    %v3301 = vpop.permute.xlu0 %3300
    %3302 = vrot.lane.b32.xlu0 %v3297, 32
    %v3303 = vpop.permute.xlu0 %3302
    %v3306 = vmul.f32 %v3254, %v3301
    %v3307 = vmul.f32 %v3269, %v3303
    %v3308 = vsel %vm364, %v3067, 0
    %v3310 = vsel %vm364, %v3069, 0
    %3312 = vmatpush.msra.mxu0 0.0
    %3313 = vmatpush.msra.mxu0 0.0
    %3314 = vmatpush.msra.mxu0 0.0
    %3315 = vmatpush.msra.mxu0 0.0
    %3316 = vmatpush.msra.mxu0 0.0
    %3317 = vmatpush.msra.mxu0 0.0
    %3318 = vmatpush.msra.mxu0 0.0
    %3319 = vmatpush.msra.mxu0 0.0
    %3320 = vmatpush.msra.mxu0 0.0
    %3321 = vmatpush.msra.mxu0 0.0
    %3322 = vmatpush.msra.mxu0 0.0
    %3323 = vmatpush.msra.mxu0 0.0
    %3324 = vmatpush.msra.mxu0 %v201
    %3325 = vmatpush.msra.mxu0 %v200
    %3326 = vmatpush.msra.mxu0 %v199
    %3327 = vmatpush.msra.mxu0 %v198
    %3328 = vmatmul.f32.gmra.mxu0 %v3308
    %v3329 = vpop.f32.mrf.mxu0
    %v3330 = vadd.f32 0.0, %v3329
    %3331 = vmatmul.f32.gmra.mxu0 %v3310
    %v3332 = vpop.f32.mrf.mxu0
    %v3333 = vadd.f32 0.0, %v3332
    %3334 = vdwg.mxu0
    %v3335 = vadd.f32 %v2260, %v3330
    %v3336 = vadd.f32 %v2261, %v3333
    %v3337 = vxor.u32 %v3335, 2147483648
    %v3338 = vxor.u32 %v3336, 2147483648
    %v3339 = vmul.f32 %v3337, 1.442695
    %v3340 = vpow.pop %v3339
    %v3341 = vmul.f32 %v3338, 1.442695
    %v3342 = vpow.pop %v3341
    %v3343 = vadd.f32 %v3340, 1.0
    %v3344 = vadd.f32 %v3342, 1.0
    %v3345 = vrcp.pop %v3343
    %v3346 = vmul.f32 %v3343, %v3345
    %v3347 = vsub.f32 1.0, %v3346
    %v3348 = vmul.f32 %v3345, %v3347
    %v3349 = vadd.f32 %v3345, %v3348
    %vm3350 = vweird.f32 %v3343
    %vm3351 = vweird.f32 %v3345
    %vm3352 = vmor %vm3350, %vm3351
    %v3353 = vsel %vm3352, %v3345, %v3349
    %v3354 = vand.u32 2147483647, %v3343
    %vm3355 = vcmp.eq.f32.partialorder %v3354, 8.507059e+37
    %v3356 = vand.u32 %v3343, 2147483648
    %v3357 = vor.u32 1.1754944e-38, %v3356
    %v3358 = vsel %vm3355, %v3357, %v3353
    %v3359 = vmul.f32 1.0, %v3358
    %v3360 = vrcp.pop %v3344
    %v3361 = vmul.f32 %v3344, %v3360
    %v3362 = vsub.f32 1.0, %v3361
    %v3363 = vmul.f32 %v3360, %v3362
    %v3364 = vadd.f32 %v3360, %v3363
    %vm3365 = vweird.f32 %v3344
    %vm3366 = vweird.f32 %v3360
    %vm3367 = vmor %vm3365, %vm3366
    %v3368 = vsel %vm3367, %v3360, %v3364
    %v3369 = vand.u32 2147483647, %v3344
    %vm3370 = vcmp.eq.f32.partialorder %v3369, 8.507059e+37
    %v3371 = vand.u32 %v3344, 2147483648
    %v3372 = vor.u32 1.1754944e-38, %v3371
    %v3373 = vsel %vm3370, %v3372, %v3368
    %v3374 = vmul.f32 1.0, %v3373
    %v3375 = vmul.f32 %v3359, 2.0
    %v3376 = vmul.f32 %v3374, 2.0
    %v3377 = vsub.f32 %v3375, 1.0
    %v3378 = vsub.f32 %v3376, 1.0
    %v3379 = vmul.f32 %v3359, %v3050
    %v3380 = vmul.f32 %v3374, %v3051
    %3383 = vrot.lane.b32.xlu0 %v3377, 64
    %v3384 = vpop.permute.xlu0 %3383
    %3385 = vrot.lane.b32.xlu0 %v3378, 64
    %v3386 = vpop.permute.xlu0 %3385
    %v3389 = vmul.f32 %v3359, %v3384
    %v3390 = vmul.f32 %v3374, %v3386
    %3393 = vrot.lane.b32.xlu0 %v3389, 32
    %v3394 = vpop.permute.xlu0 %3393
    %3395 = vrot.lane.b32.xlu0 %v3390, 32
    %v3396 = vpop.permute.xlu0 %3395
    %v3399 = vadd.f32 %v3379, %v3394
    %v3400 = vadd.f32 %v3380, %v3396
    %v3401 = vtanh.pop %v3399
    %v3402 = vtanh.pop %v3400
    %3405 = vrot.lane.b32.xlu0 %v3401, 64
    %v3406 = vpop.permute.xlu0 %3405
    %3407 = vrot.lane.b32.xlu0 %v3402, 64
    %v3408 = vpop.permute.xlu0 %3407
    %v3411 = vmul.f32 %v3359, %v3406
    %v3412 = vmul.f32 %v3374, %v3408
    %3415 = vrot.lane.b32.xlu0 %v3411, 32
    %v3416 = vpop.permute.xlu0 %3415
    %3417 = vrot.lane.b32.xlu0 %v3412, 32
    %v3418 = vpop.permute.xlu0 %3417
    %3421 = vrot.lane.b32.xlu0 %v3183, 64
    %v3422 = vpop.permute.xlu0 %3421
    %3423 = vrot.lane.b32.xlu0 %v3184, 64
    %v3424 = vpop.permute.xlu0 %3423
    %v3427 = vsel %vm364, %v3416, %v3422
    %v3428 = vsel %vm364, %v3418, %v3424
    %v3430 = vsel %vm479, %v3427, 0
    %v3433 = vsel %vm479, %v3428, 0
    %3435 = vmatpush.msra.mxu0 0.0
    %3436 = vmatpush.msra.mxu0 0.0
    %3437 = vmatpush.msra.mxu0 0.0
    %3438 = vmatpush.msra.mxu0 0.0
    %3439 = vmatpush.msra.mxu0 0.0
    %3440 = vmatpush.msra.mxu0 0.0
    %3441 = vmatpush.msra.mxu0 0.0
    %3442 = vmatpush.msra.mxu0 0.0
    %3443 = vmatpush.msra.mxu0 %v209
    %3444 = vmatpush.msra.mxu0 %v208
    %3445 = vmatpush.msra.mxu0 %v207
    %3446 = vmatpush.msra.mxu0 %v206
    %3447 = vmatpush.msra.mxu0 %v205
    %3448 = vmatpush.msra.mxu0 %v204
    %3449 = vmatpush.msra.mxu0 %v203
    %3450 = vmatpush.msra.mxu0 %v202
    %3451 = vmatmul.f32.gmra.mxu0 %v3430
    %v3452 = vpop.f32.mrf.mxu0
    %v3453 = vadd.f32 %v222, %v3452
    %3454 = vmatmul.f32.gmra.mxu0 %v3433
    %v3455 = vpop.f32.mrf.mxu0
    %v3456 = vadd.f32 %v222, %v3455
    %3457 = vdwg.mxu0
    %v3458 = vxor.u32 %v3453, 2147483648
    %v3459 = vxor.u32 %v3456, 2147483648
    %v3460 = vmul.f32 %v3458, 1.442695
    %v3461 = vpow.pop %v3460
    %v3462 = vmul.f32 %v3459, 1.442695
    %v3463 = vpow.pop %v3462
    %v3464 = vadd.f32 %v3461, 1.0
    %v3465 = vadd.f32 %v3463, 1.0
    %v3466 = vrcp.pop %v3464
    %v3467 = vmul.f32 %v3464, %v3466
    %v3468 = vsub.f32 1.0, %v3467
    %v3469 = vmul.f32 %v3466, %v3468
    %v3470 = vadd.f32 %v3466, %v3469
    %vm3471 = vweird.f32 %v3464
    %vm3472 = vweird.f32 %v3466
    %vm3473 = vmor %vm3471, %vm3472
    %v3474 = vsel %vm3473, %v3466, %v3470
    %v3475 = vand.u32 2147483647, %v3464
    %vm3476 = vcmp.eq.f32.partialorder %v3475, 8.507059e+37
    %v3477 = vand.u32 %v3464, 2147483648
    %v3478 = vor.u32 1.1754944e-38, %v3477
    %v3479 = vsel %vm3476, %v3478, %v3474
    %v3480 = vmul.f32 1.0, %v3479
    %v3481 = vrcp.pop %v3465
    %v3482 = vmul.f32 %v3465, %v3481
    %v3483 = vsub.f32 1.0, %v3482
    %v3484 = vmul.f32 %v3481, %v3483
    %v3485 = vadd.f32 %v3481, %v3484
    %vm3486 = vweird.f32 %v3465
    %vm3487 = vweird.f32 %v3481
    %vm3488 = vmor %vm3486, %vm3487
    %v3489 = vsel %vm3488, %v3481, %v3485
    %v3490 = vand.u32 2147483647, %v3465
    %vm3491 = vcmp.eq.f32.partialorder %v3490, 8.507059e+37
    %v3492 = vand.u32 %v3465, 2147483648
    %v3493 = vor.u32 1.1754944e-38, %v3492
    %v3494 = vsel %vm3491, %v3493, %v3489
    %v3495 = vmul.f32 1.0, %v3494
    %v3496 = vmul.f32 %v3480, 2.0
    %v3497 = vmul.f32 %v3495, 2.0
    %v3498 = vsub.f32 %v3496, 1.0
    %v3499 = vsub.f32 %v3497, 1.0
    %v3500 = vmul.f32 %v3480, %v3171
    %v3501 = vmul.f32 %v3495, %v3172
    %3504 = vrot.lane.b32.xlu0 %v3498, 64
    %v3505 = vpop.permute.xlu0 %3504
    %3506 = vrot.lane.b32.xlu0 %v3499, 64
    %v3507 = vpop.permute.xlu0 %3506
    %v3510 = vmul.f32 %v3480, %v3505
    %v3511 = vmul.f32 %v3495, %v3507
    %3514 = vrot.lane.b32.xlu0 %v3510, 32
    %v3515 = vpop.permute.xlu0 %3514
    %3516 = vrot.lane.b32.xlu0 %v3511, 32
    %v3517 = vpop.permute.xlu0 %3516
    %v3520 = vadd.f32 %v3500, %v3515
    %v3521 = vadd.f32 %v3501, %v3517
    %v3522 = vtanh.pop %v3520
    %v3523 = vtanh.pop %v3521
    %3526 = vrot.lane.b32.xlu0 %v3522, 64
    %v3527 = vpop.permute.xlu0 %3526
    %3528 = vrot.lane.b32.xlu0 %v3523, 64
    %v3529 = vpop.permute.xlu0 %3528
    %v3532 = vmul.f32 %v3480, %v3527
    %v3533 = vmul.f32 %v3495, %v3529
    %3536 = vrot.lane.b32.xlu0 %v3532, 32
    %v3537 = vpop.permute.xlu0 %3536
    %3538 = vrot.lane.b32.xlu0 %v3533, 32
    %v3539 = vpop.permute.xlu0 %3538
    %3544 = vrot.lane.b32.xlu0 %v3306, 112
    %v3545 = vpop.permute.xlu0 %3544
    %3546 = vrot.lane.b32.xlu0 %v3307, 112
    %v3547 = vpop.permute.xlu0 %3546
    %v3550 = vsel %vm364, %v3537, %v3545
    %v3551 = vsel %vm364, %v3539, %v3547
    %v3553 = vsel %vm2504, %v3550, 0
    %v3556 = vsel %vm2504, %v3551, 0
    %3558 = vmatpush.msra.mxu0 0.0
    %3559 = vmatpush.msra.mxu0 0.0
    %3560 = vmatpush.msra.mxu0 0.0
    %3561 = vmatpush.msra.mxu0 0.0
    %3562 = vmatpush.msra.mxu0 0.0
    %3563 = vmatpush.msra.mxu0 0.0
    %3564 = vmatpush.msra.mxu0 0.0
    %3565 = vmatpush.msra.mxu0 0.0
    %3566 = vmatpush.msra.mxu0 0.0
    %3567 = vmatpush.msra.mxu0 0.0
    %3568 = vmatpush.msra.mxu0 %v215
    %3569 = vmatpush.msra.mxu0 %v214
    %3570 = vmatpush.msra.mxu0 %v213
    %3571 = vmatpush.msra.mxu0 %v212
    %3572 = vmatpush.msra.mxu0 %v211
    %3573 = vmatpush.msra.mxu0 %v210
    %3574 = vmatmul.f32.gmra.mxu0 %v3553
    %v3575 = vpop.f32.mrf.mxu0
    %v3576 = vadd.f32 %v226, %v3575
    %3577 = vmatmul.f32.gmra.mxu0 %v3556
    %v3578 = vpop.f32.mrf.mxu0
    %v3579 = vadd.f32 %v226, %v3578
    %3580 = vdwg.mxu0
    %v3581 = vxor.u32 %v3576, 2147483648
    %v3582 = vxor.u32 %v3579, 2147483648
    %v3583 = vmul.f32 %v3581, 1.442695
    %v3584 = vpow.pop %v3583
    %v3585 = vmul.f32 %v3582, 1.442695
    %v3586 = vpow.pop %v3585
    %v3587 = vadd.f32 %v3584, 1.0
    %v3588 = vadd.f32 %v3586, 1.0
    %v3589 = vrcp.pop %v3587
    %v3590 = vmul.f32 %v3587, %v3589
    %v3591 = vsub.f32 1.0, %v3590
    %v3592 = vmul.f32 %v3589, %v3591
    %v3593 = vadd.f32 %v3589, %v3592
    %vm3594 = vweird.f32 %v3587
    %vm3595 = vweird.f32 %v3589
    %vm3596 = vmor %vm3594, %vm3595
    %v3597 = vsel %vm3596, %v3589, %v3593
    %v3598 = vand.u32 2147483647, %v3587
    %vm3599 = vcmp.eq.f32.partialorder %v3598, 8.507059e+37
    %v3600 = vand.u32 %v3587, 2147483648
    %v3601 = vor.u32 1.1754944e-38, %v3600
    %v3602 = vsel %vm3599, %v3601, %v3597
    %v3603 = vmul.f32 1.0, %v3602
    %v3604 = vrcp.pop %v3588
    %v3605 = vmul.f32 %v3588, %v3604
    %v3606 = vsub.f32 1.0, %v3605
    %v3607 = vmul.f32 %v3604, %v3606
    %v3608 = vadd.f32 %v3604, %v3607
    %vm3609 = vweird.f32 %v3588
    %vm3610 = vweird.f32 %v3604
    %vm3611 = vmor %vm3609, %vm3610
    %v3612 = vsel %vm3611, %v3604, %v3608
    %v3613 = vand.u32 2147483647, %v3588
    %vm3614 = vcmp.eq.f32.partialorder %v3613, 8.507059e+37
    %v3615 = vand.u32 %v3588, 2147483648
    %v3616 = vor.u32 1.1754944e-38, %v3615
    %v3617 = vsel %vm3614, %v3616, %v3612
    %v3618 = vmul.f32 1.0, %v3617
    %v3619 = vmul.f32 %v3603, 2.0
    %v3620 = vmul.f32 %v3618, 2.0
    %v3621 = vsub.f32 %v3619, 1.0
    %v3622 = vsub.f32 %v3620, 1.0
    %v3623 = vmul.f32 %v3603, %v3294
    %v3624 = vmul.f32 %v3618, %v3295
    %3627 = vrot.lane.b32.xlu0 %v3621, 96
    %v3628 = vpop.permute.xlu0 %3627
    %3629 = vrot.lane.b32.xlu0 %v3622, 96
    %v3630 = vpop.permute.xlu0 %3629
    %v3633 = vmul.f32 %v3603, %v3628
    %v3634 = vmul.f32 %v3618, %v3630
    %3637 = vrot.lane.b32.xlu0 %v3633, 16
    %v3638 = vpop.permute.xlu0 %3637
    %3639 = vrot.lane.b32.xlu0 %v3634, 16
    %v3640 = vpop.permute.xlu0 %3639
    %v3643 = vadd.f32 %v3623, %v3638
    %v3644 = vadd.f32 %v3624, %v3640
    %v3645 = vtanh.pop %v3643
    %v3646 = vtanh.pop %v3644
    %3649 = vrot.lane.b32.xlu0 %v3645, 32
    %v3650 = vpop.permute.xlu0 %3649
    %3651 = vrot.lane.b32.xlu0 %v3646, 32
    %v3652 = vpop.permute.xlu0 %3651
    %v3655 = vmul.f32 %v3603, %v3650
    %v3656 = vmul.f32 %v3618, %v3652
    %v3657 = vsel %vm364, %v3416, 0
    %v3659 = vsel %vm364, %v3418, 0
    %3661 = vmatpush.msra.mxu0 0.0
    %3662 = vmatpush.msra.mxu0 0.0
    %3663 = vmatpush.msra.mxu0 0.0
    %3664 = vmatpush.msra.mxu0 0.0
    %3665 = vmatpush.msra.mxu0 0.0
    %3666 = vmatpush.msra.mxu0 0.0
    %3667 = vmatpush.msra.mxu0 0.0
    %3668 = vmatpush.msra.mxu0 0.0
    %3669 = vmatpush.msra.mxu0 0.0
    %3670 = vmatpush.msra.mxu0 0.0
    %3671 = vmatpush.msra.mxu0 0.0
    %3672 = vmatpush.msra.mxu0 0.0
    %3673 = vmatpush.msra.mxu0 %v201
    %3674 = vmatpush.msra.mxu0 %v200
    %3675 = vmatpush.msra.mxu0 %v199
    %3676 = vmatpush.msra.mxu0 %v198
    %3677 = vmatmul.f32.gmra.mxu0 %v3657
    %v3678 = vpop.f32.mrf.mxu0
    %v3679 = vadd.f32 0.0, %v3678
    %3680 = vmatmul.f32.gmra.mxu0 %v3659
    %v3681 = vpop.f32.mrf.mxu0
    %v3682 = vadd.f32 0.0, %v3681
    %3683 = vdwg.mxu0
    %v3684 = vadd.f32 %v2258, %v3679
    %v3685 = vadd.f32 %v2259, %v3682
    %v3686 = vxor.u32 %v3684, 2147483648
    %v3687 = vxor.u32 %v3685, 2147483648
    %v3688 = vmul.f32 %v3686, 1.442695
    %v3689 = vpow.pop %v3688
    %v3690 = vmul.f32 %v3687, 1.442695
    %v3691 = vpow.pop %v3690
    %v3692 = vadd.f32 %v3689, 1.0
    %v3693 = vadd.f32 %v3691, 1.0
    %v3694 = vrcp.pop %v3692
    %v3695 = vmul.f32 %v3692, %v3694
    %v3696 = vsub.f32 1.0, %v3695
    %v3697 = vmul.f32 %v3694, %v3696
    %v3698 = vadd.f32 %v3694, %v3697
    %vm3699 = vweird.f32 %v3692
    %vm3700 = vweird.f32 %v3694
    %vm3701 = vmor %vm3699, %vm3700
    %v3702 = vsel %vm3701, %v3694, %v3698
    %v3703 = vand.u32 2147483647, %v3692
    %vm3704 = vcmp.eq.f32.partialorder %v3703, 8.507059e+37
    %v3705 = vand.u32 %v3692, 2147483648
    %v3706 = vor.u32 1.1754944e-38, %v3705
    %v3707 = vsel %vm3704, %v3706, %v3702
    %v3708 = vmul.f32 1.0, %v3707
    %v3709 = vrcp.pop %v3693
    %v3710 = vmul.f32 %v3693, %v3709
    %v3711 = vsub.f32 1.0, %v3710
    %v3712 = vmul.f32 %v3709, %v3711
    %v3713 = vadd.f32 %v3709, %v3712
    %vm3714 = vweird.f32 %v3693
    %vm3715 = vweird.f32 %v3709
    %vm3716 = vmor %vm3714, %vm3715
    %v3717 = vsel %vm3716, %v3709, %v3713
    %v3718 = vand.u32 2147483647, %v3693
    %vm3719 = vcmp.eq.f32.partialorder %v3718, 8.507059e+37
    %v3720 = vand.u32 %v3693, 2147483648
    %v3721 = vor.u32 1.1754944e-38, %v3720
    %v3722 = vsel %vm3719, %v3721, %v3717
    %v3723 = vmul.f32 1.0, %v3722
    %v3724 = vmul.f32 %v3708, 2.0
    %v3725 = vmul.f32 %v3723, 2.0
    %v3726 = vsub.f32 %v3724, 1.0
    %v3727 = vsub.f32 %v3725, 1.0
    %v3728 = vmul.f32 %v3708, %v3399
    %v3729 = vmul.f32 %v3723, %v3400
    %3732 = vrot.lane.b32.xlu0 %v3726, 64
    %v3733 = vpop.permute.xlu0 %3732
    %3734 = vrot.lane.b32.xlu0 %v3727, 64
    %v3735 = vpop.permute.xlu0 %3734
    %v3738 = vmul.f32 %v3708, %v3733
    %v3739 = vmul.f32 %v3723, %v3735
    %3742 = vrot.lane.b32.xlu0 %v3738, 32
    %v3743 = vpop.permute.xlu0 %3742
    %3744 = vrot.lane.b32.xlu0 %v3739, 32
    %v3745 = vpop.permute.xlu0 %3744
    %v3748 = vadd.f32 %v3728, %v3743
    %v3749 = vadd.f32 %v3729, %v3745
    %v3750 = vtanh.pop %v3748
    %v3751 = vtanh.pop %v3749
    %3754 = vrot.lane.b32.xlu0 %v3750, 64
    %v3755 = vpop.permute.xlu0 %3754
    %3756 = vrot.lane.b32.xlu0 %v3751, 64
    %v3757 = vpop.permute.xlu0 %3756
    %v3760 = vmul.f32 %v3708, %v3755
    %v3761 = vmul.f32 %v3723, %v3757
    %3764 = vrot.lane.b32.xlu0 %v3760, 32
    %v3765 = vpop.permute.xlu0 %3764
    %3766 = vrot.lane.b32.xlu0 %v3761, 32
    %v3767 = vpop.permute.xlu0 %3766
    %3770 = vrot.lane.b32.xlu0 %v3532, 64
    %v3771 = vpop.permute.xlu0 %3770
    %3772 = vrot.lane.b32.xlu0 %v3533, 64
    %v3773 = vpop.permute.xlu0 %3772
    %v3776 = vsel %vm364, %v3765, %v3771
    %v3777 = vsel %vm364, %v3767, %v3773
    %v3779 = vsel %vm479, %v3776, 0
    %v3782 = vsel %vm479, %v3777, 0
    %3784 = vmatpush.msra.mxu0 0.0
    %3785 = vmatpush.msra.mxu0 0.0
    %3786 = vmatpush.msra.mxu0 0.0
    %3787 = vmatpush.msra.mxu0 0.0
    %3788 = vmatpush.msra.mxu0 0.0
    %3789 = vmatpush.msra.mxu0 0.0
    %3790 = vmatpush.msra.mxu0 0.0
    %3791 = vmatpush.msra.mxu0 0.0
    %3792 = vmatpush.msra.mxu0 %v209
    %3793 = vmatpush.msra.mxu0 %v208
    %3794 = vmatpush.msra.mxu0 %v207
    %3795 = vmatpush.msra.mxu0 %v206
    %3796 = vmatpush.msra.mxu0 %v205
    %3797 = vmatpush.msra.mxu0 %v204
    %3798 = vmatpush.msra.mxu0 %v203
    %3799 = vmatpush.msra.mxu0 %v202
    %3800 = vmatmul.f32.gmra.mxu0 %v3779
    %v3801 = vpop.f32.mrf.mxu0
    %v3802 = vadd.f32 %v222, %v3801
    %3803 = vmatmul.f32.gmra.mxu0 %v3782
    %v3804 = vpop.f32.mrf.mxu0
    %v3805 = vadd.f32 %v222, %v3804
    %3806 = vdwg.mxu0
    %v3807 = vxor.u32 %v3802, 2147483648
    %v3808 = vxor.u32 %v3805, 2147483648
    %v3809 = vmul.f32 %v3807, 1.442695
    %v3810 = vpow.pop %v3809
    %v3811 = vmul.f32 %v3808, 1.442695
    %v3812 = vpow.pop %v3811
    %v3813 = vadd.f32 %v3810, 1.0
    %v3814 = vadd.f32 %v3812, 1.0
    %v3815 = vrcp.pop %v3813
    %v3816 = vmul.f32 %v3813, %v3815
    %v3817 = vsub.f32 1.0, %v3816
    %v3818 = vmul.f32 %v3815, %v3817
    %v3819 = vadd.f32 %v3815, %v3818
    %vm3820 = vweird.f32 %v3813
    %vm3821 = vweird.f32 %v3815
    %vm3822 = vmor %vm3820, %vm3821
    %v3823 = vsel %vm3822, %v3815, %v3819
    %v3824 = vand.u32 2147483647, %v3813
    %vm3825 = vcmp.eq.f32.partialorder %v3824, 8.507059e+37
    %v3826 = vand.u32 %v3813, 2147483648
    %v3827 = vor.u32 1.1754944e-38, %v3826
    %v3828 = vsel %vm3825, %v3827, %v3823
    %v3829 = vmul.f32 1.0, %v3828
    %v3830 = vrcp.pop %v3814
    %v3831 = vmul.f32 %v3814, %v3830
    %v3832 = vsub.f32 1.0, %v3831
    %v3833 = vmul.f32 %v3830, %v3832
    %v3834 = vadd.f32 %v3830, %v3833
    %vm3835 = vweird.f32 %v3814
    %vm3836 = vweird.f32 %v3830
    %vm3837 = vmor %vm3835, %vm3836
    %v3838 = vsel %vm3837, %v3830, %v3834
    %v3839 = vand.u32 2147483647, %v3814
    %vm3840 = vcmp.eq.f32.partialorder %v3839, 8.507059e+37
    %v3841 = vand.u32 %v3814, 2147483648
    %v3842 = vor.u32 1.1754944e-38, %v3841
    %v3843 = vsel %vm3840, %v3842, %v3838
    %v3844 = vmul.f32 1.0, %v3843
    %v3845 = vmul.f32 %v3829, 2.0
    %v3846 = vmul.f32 %v3844, 2.0
    %v3847 = vsub.f32 %v3845, 1.0
    %v3848 = vsub.f32 %v3846, 1.0
    %v3849 = vmul.f32 %v3829, %v3520
    %v3850 = vmul.f32 %v3844, %v3521
    %3853 = vrot.lane.b32.xlu0 %v3847, 64
    %v3854 = vpop.permute.xlu0 %3853
    %3855 = vrot.lane.b32.xlu0 %v3848, 64
    %v3856 = vpop.permute.xlu0 %3855
    %v3859 = vmul.f32 %v3829, %v3854
    %v3860 = vmul.f32 %v3844, %v3856
    %3863 = vrot.lane.b32.xlu0 %v3859, 32
    %v3864 = vpop.permute.xlu0 %3863
    %3865 = vrot.lane.b32.xlu0 %v3860, 32
    %v3866 = vpop.permute.xlu0 %3865
    %v3869 = vadd.f32 %v3849, %v3864
    %v3870 = vadd.f32 %v3850, %v3866
    %v3871 = vtanh.pop %v3869
    %v3872 = vtanh.pop %v3870
    %3875 = vrot.lane.b32.xlu0 %v3871, 64
    %v3876 = vpop.permute.xlu0 %3875
    %3877 = vrot.lane.b32.xlu0 %v3872, 64
    %v3878 = vpop.permute.xlu0 %3877
    %v3881 = vmul.f32 %v3829, %v3876
    %v3882 = vmul.f32 %v3844, %v3878
    %3885 = vrot.lane.b32.xlu0 %v3881, 32
    %v3886 = vpop.permute.xlu0 %3885
    %3887 = vrot.lane.b32.xlu0 %v3882, 32
    %v3888 = vpop.permute.xlu0 %3887
    %3893 = vrot.lane.b32.xlu0 %v3655, 112
    %v3894 = vpop.permute.xlu0 %3893
    %3895 = vrot.lane.b32.xlu0 %v3656, 112
    %v3896 = vpop.permute.xlu0 %3895
    %v3899 = vsel %vm364, %v3886, %v3894
    %v3900 = vsel %vm364, %v3888, %v3896
    %v3902 = vsel %vm2504, %v3899, 0
    %v3905 = vsel %vm2504, %v3900, 0
    %3907 = vmatpush.msra.mxu0 0.0
    %3908 = vmatpush.msra.mxu0 0.0
    %3909 = vmatpush.msra.mxu0 0.0
    %3910 = vmatpush.msra.mxu0 0.0
    %3911 = vmatpush.msra.mxu0 0.0
    %3912 = vmatpush.msra.mxu0 0.0
    %3913 = vmatpush.msra.mxu0 0.0
    %3914 = vmatpush.msra.mxu0 0.0
    %3915 = vmatpush.msra.mxu0 0.0
    %3916 = vmatpush.msra.mxu0 0.0
    %3917 = vmatpush.msra.mxu0 %v215
    %3918 = vmatpush.msra.mxu0 %v214
    %3919 = vmatpush.msra.mxu0 %v213
    %3920 = vmatpush.msra.mxu0 %v212
    %3921 = vmatpush.msra.mxu0 %v211
    %3922 = vmatpush.msra.mxu0 %v210
    %3923 = vmatmul.f32.gmra.mxu0 %v3902
    %v3924 = vpop.f32.mrf.mxu0
    %v3925 = vadd.f32 %v226, %v3924
    %3926 = vmatmul.f32.gmra.mxu0 %v3905
    %v3927 = vpop.f32.mrf.mxu0
    %v3928 = vadd.f32 %v226, %v3927
    %3929 = vdwg.mxu0
    %v3930 = vxor.u32 %v3925, 2147483648
    %v3931 = vxor.u32 %v3928, 2147483648
    %v3932 = vmul.f32 %v3930, 1.442695
    %v3933 = vpow.pop %v3932
    %v3934 = vmul.f32 %v3931, 1.442695
    %v3935 = vpow.pop %v3934
    %v3936 = vadd.f32 %v3933, 1.0
    %v3937 = vadd.f32 %v3935, 1.0
    %v3938 = vrcp.pop %v3936
    %v3939 = vmul.f32 %v3936, %v3938
    %v3940 = vsub.f32 1.0, %v3939
    %v3941 = vmul.f32 %v3938, %v3940
    %v3942 = vadd.f32 %v3938, %v3941
    %vm3943 = vweird.f32 %v3936
    %vm3944 = vweird.f32 %v3938
    %vm3945 = vmor %vm3943, %vm3944
    %v3946 = vsel %vm3945, %v3938, %v3942
    %v3947 = vand.u32 2147483647, %v3936
    %vm3948 = vcmp.eq.f32.partialorder %v3947, 8.507059e+37
    %v3949 = vand.u32 %v3936, 2147483648
    %v3950 = vor.u32 1.1754944e-38, %v3949
    %v3951 = vsel %vm3948, %v3950, %v3946
    %v3952 = vmul.f32 1.0, %v3951
    %v3953 = vrcp.pop %v3937
    %v3954 = vmul.f32 %v3937, %v3953
    %v3955 = vsub.f32 1.0, %v3954
    %v3956 = vmul.f32 %v3953, %v3955
    %v3957 = vadd.f32 %v3953, %v3956
    %vm3958 = vweird.f32 %v3937
    %vm3959 = vweird.f32 %v3953
    %vm3960 = vmor %vm3958, %vm3959
    %v3961 = vsel %vm3960, %v3953, %v3957
    %v3962 = vand.u32 2147483647, %v3937
    %vm3963 = vcmp.eq.f32.partialorder %v3962, 8.507059e+37
    %v3964 = vand.u32 %v3937, 2147483648
    %v3965 = vor.u32 1.1754944e-38, %v3964
    %v3966 = vsel %vm3963, %v3965, %v3961
    %v3967 = vmul.f32 1.0, %v3966
    %v3968 = vmul.f32 %v3952, 2.0
    %v3969 = vmul.f32 %v3967, 2.0
    %v3970 = vsub.f32 %v3968, 1.0
    %v3971 = vsub.f32 %v3969, 1.0
    %v3972 = vmul.f32 %v3952, %v3643
    %v3973 = vmul.f32 %v3967, %v3644
    %3976 = vrot.lane.b32.xlu0 %v3970, 96
    %v3977 = vpop.permute.xlu0 %3976
    %3978 = vrot.lane.b32.xlu0 %v3971, 96
    %v3979 = vpop.permute.xlu0 %3978
    %v3982 = vmul.f32 %v3952, %v3977
    %v3983 = vmul.f32 %v3967, %v3979
    %3986 = vrot.lane.b32.xlu0 %v3982, 16
    %v3987 = vpop.permute.xlu0 %3986
    %3988 = vrot.lane.b32.xlu0 %v3983, 16
    %v3989 = vpop.permute.xlu0 %3988
    %v3992 = vadd.f32 %v3972, %v3987
    %v3993 = vadd.f32 %v3973, %v3989
    %v3994 = vtanh.pop %v3992
    %v3995 = vtanh.pop %v3993
    %3998 = vrot.lane.b32.xlu0 %v3994, 32
    %v3999 = vpop.permute.xlu0 %3998
    %4000 = vrot.lane.b32.xlu0 %v3995, 32
    %v4001 = vpop.permute.xlu0 %4000
    %v4004 = vmul.f32 %v3952, %v3999
    %v4005 = vmul.f32 %v3967, %v4001
    %v4006 = vsel %vm364, %v3765, 0
    %v4008 = vsel %vm364, %v3767, 0
    %4010 = vmatpush.msra.mxu0 0.0
    %4011 = vmatpush.msra.mxu0 0.0
    %4012 = vmatpush.msra.mxu0 0.0
    %4013 = vmatpush.msra.mxu0 0.0
    %4014 = vmatpush.msra.mxu0 0.0
    %4015 = vmatpush.msra.mxu0 0.0
    %4016 = vmatpush.msra.mxu0 0.0
    %4017 = vmatpush.msra.mxu0 0.0
    %4018 = vmatpush.msra.mxu0 0.0
    %4019 = vmatpush.msra.mxu0 0.0
    %4020 = vmatpush.msra.mxu0 0.0
    %4021 = vmatpush.msra.mxu0 0.0
    %4022 = vmatpush.msra.mxu0 %v201
    %4023 = vmatpush.msra.mxu0 %v200
    %4024 = vmatpush.msra.mxu0 %v199
    %4025 = vmatpush.msra.mxu0 %v198
    %4026 = vmatmul.f32.gmra.mxu0 %v4006
    %v4027 = vpop.f32.mrf.mxu0
    %v4028 = vadd.f32 0.0, %v4027
    %4029 = vmatmul.f32.gmra.mxu0 %v4008
    %v4030 = vpop.f32.mrf.mxu0
    %v4031 = vadd.f32 0.0, %v4030
    %4032 = vdwg.mxu0
    %v4033 = vadd.f32 %v2256, %v4028
    %v4034 = vadd.f32 %v2257, %v4031
    %v4035 = vxor.u32 %v4033, 2147483648
    %v4036 = vxor.u32 %v4034, 2147483648
    %v4037 = vmul.f32 %v4035, 1.442695
    %v4038 = vpow.pop %v4037
    %v4039 = vmul.f32 %v4036, 1.442695
    %v4040 = vpow.pop %v4039
    %v4041 = vadd.f32 %v4038, 1.0
    %v4042 = vadd.f32 %v4040, 1.0
    %v4043 = vrcp.pop %v4041
    %v4044 = vmul.f32 %v4041, %v4043
    %v4045 = vsub.f32 1.0, %v4044
    %v4046 = vmul.f32 %v4043, %v4045
    %v4047 = vadd.f32 %v4043, %v4046
    %vm4048 = vweird.f32 %v4041
    %vm4049 = vweird.f32 %v4043
    %vm4050 = vmor %vm4048, %vm4049
    %v4051 = vsel %vm4050, %v4043, %v4047
    %v4052 = vand.u32 2147483647, %v4041
    %vm4053 = vcmp.eq.f32.partialorder %v4052, 8.507059e+37
    %v4054 = vand.u32 %v4041, 2147483648
    %v4055 = vor.u32 1.1754944e-38, %v4054
    %v4056 = vsel %vm4053, %v4055, %v4051
    %v4057 = vmul.f32 1.0, %v4056
    %v4058 = vrcp.pop %v4042
    %v4059 = vmul.f32 %v4042, %v4058
    %v4060 = vsub.f32 1.0, %v4059
    %v4061 = vmul.f32 %v4058, %v4060
    %v4062 = vadd.f32 %v4058, %v4061
    %vm4063 = vweird.f32 %v4042
    %vm4064 = vweird.f32 %v4058
    %vm4065 = vmor %vm4063, %vm4064
    %v4066 = vsel %vm4065, %v4058, %v4062
    %v4067 = vand.u32 2147483647, %v4042
    %vm4068 = vcmp.eq.f32.partialorder %v4067, 8.507059e+37
    %v4069 = vand.u32 %v4042, 2147483648
    %v4070 = vor.u32 1.1754944e-38, %v4069
    %v4071 = vsel %vm4068, %v4070, %v4066
    %v4072 = vmul.f32 1.0, %v4071
    %v4073 = vmul.f32 %v4057, 2.0
    %v4074 = vmul.f32 %v4072, 2.0
    %v4075 = vsub.f32 %v4073, 1.0
    %v4076 = vsub.f32 %v4074, 1.0
    %v4077 = vmul.f32 %v4057, %v3748
    %v4078 = vmul.f32 %v4072, %v3749
    %4081 = vrot.lane.b32.xlu0 %v4075, 64
    %v4082 = vpop.permute.xlu0 %4081
    %4083 = vrot.lane.b32.xlu0 %v4076, 64
    %v4084 = vpop.permute.xlu0 %4083
    %v4087 = vmul.f32 %v4057, %v4082
    %v4088 = vmul.f32 %v4072, %v4084
    %4091 = vrot.lane.b32.xlu0 %v4087, 32
    %v4092 = vpop.permute.xlu0 %4091
    %4093 = vrot.lane.b32.xlu0 %v4088, 32
    %v4094 = vpop.permute.xlu0 %4093
    %v4097 = vadd.f32 %v4077, %v4092
    %v4098 = vadd.f32 %v4078, %v4094
    %v4099 = vtanh.pop %v4097
    %v4100 = vtanh.pop %v4098
    %4103 = vrot.lane.b32.xlu0 %v4099, 64
    %v4104 = vpop.permute.xlu0 %4103
    %4105 = vrot.lane.b32.xlu0 %v4100, 64
    %v4106 = vpop.permute.xlu0 %4105
    %v4109 = vmul.f32 %v4057, %v4104
    %v4110 = vmul.f32 %v4072, %v4106
    %4113 = vrot.lane.b32.xlu0 %v4109, 32
    %v4114 = vpop.permute.xlu0 %4113
    %4115 = vrot.lane.b32.xlu0 %v4110, 32
    %v4116 = vpop.permute.xlu0 %4115
    %4119 = vrot.lane.b32.xlu0 %v3881, 64
    %v4120 = vpop.permute.xlu0 %4119
    %4121 = vrot.lane.b32.xlu0 %v3882, 64
    %v4122 = vpop.permute.xlu0 %4121
    %v4125 = vsel %vm364, %v4114, %v4120
    %v4126 = vsel %vm364, %v4116, %v4122
    %v4128 = vsel %vm479, %v4125, 0
    %v4131 = vsel %vm479, %v4126, 0
    %4133 = vmatpush.msra.mxu0 0.0
    %4134 = vmatpush.msra.mxu0 0.0
    %4135 = vmatpush.msra.mxu0 0.0
    %4136 = vmatpush.msra.mxu0 0.0
    %4137 = vmatpush.msra.mxu0 0.0
    %4138 = vmatpush.msra.mxu0 0.0
    %4139 = vmatpush.msra.mxu0 0.0
    %4140 = vmatpush.msra.mxu0 0.0
    %4141 = vmatpush.msra.mxu0 %v209
    %4142 = vmatpush.msra.mxu0 %v208
    %4143 = vmatpush.msra.mxu0 %v207
    %4144 = vmatpush.msra.mxu0 %v206
    %4145 = vmatpush.msra.mxu0 %v205
    %4146 = vmatpush.msra.mxu0 %v204
    %4147 = vmatpush.msra.mxu0 %v203
    %4148 = vmatpush.msra.mxu0 %v202
    %4149 = vmatmul.f32.gmra.mxu0 %v4128
    %v4150 = vpop.f32.mrf.mxu0
    %v4151 = vadd.f32 %v222, %v4150
    %4152 = vmatmul.f32.gmra.mxu0 %v4131
    %v4153 = vpop.f32.mrf.mxu0
    %v4154 = vadd.f32 %v222, %v4153
    %4155 = vdwg.mxu0
    %v4156 = vxor.u32 %v4151, 2147483648
    %v4157 = vxor.u32 %v4154, 2147483648
    %v4158 = vmul.f32 %v4156, 1.442695
    %v4159 = vpow.pop %v4158
    %v4160 = vmul.f32 %v4157, 1.442695
    %v4161 = vpow.pop %v4160
    %v4162 = vadd.f32 %v4159, 1.0
    %v4163 = vadd.f32 %v4161, 1.0
    %v4164 = vrcp.pop %v4162
    %v4165 = vmul.f32 %v4162, %v4164
    %v4166 = vsub.f32 1.0, %v4165
    %v4167 = vmul.f32 %v4164, %v4166
    %v4168 = vadd.f32 %v4164, %v4167
    %vm4169 = vweird.f32 %v4162
    %vm4170 = vweird.f32 %v4164
    %vm4171 = vmor %vm4169, %vm4170
    %v4172 = vsel %vm4171, %v4164, %v4168
    %v4173 = vand.u32 2147483647, %v4162
    %vm4174 = vcmp.eq.f32.partialorder %v4173, 8.507059e+37
    %v4175 = vand.u32 %v4162, 2147483648
    %v4176 = vor.u32 1.1754944e-38, %v4175
    %v4177 = vsel %vm4174, %v4176, %v4172
    %v4178 = vmul.f32 1.0, %v4177
    %v4179 = vrcp.pop %v4163
    %v4180 = vmul.f32 %v4163, %v4179
    %v4181 = vsub.f32 1.0, %v4180
    %v4182 = vmul.f32 %v4179, %v4181
    %v4183 = vadd.f32 %v4179, %v4182
    %vm4184 = vweird.f32 %v4163
    %vm4185 = vweird.f32 %v4179
    %vm4186 = vmor %vm4184, %vm4185
    %v4187 = vsel %vm4186, %v4179, %v4183
    %v4188 = vand.u32 2147483647, %v4163
    %vm4189 = vcmp.eq.f32.partialorder %v4188, 8.507059e+37
    %v4190 = vand.u32 %v4163, 2147483648
    %v4191 = vor.u32 1.1754944e-38, %v4190
    %v4192 = vsel %vm4189, %v4191, %v4187
    %v4193 = vmul.f32 1.0, %v4192
    %v4194 = vmul.f32 %v4178, 2.0
    %v4195 = vmul.f32 %v4193, 2.0
    %v4196 = vsub.f32 %v4194, 1.0
    %v4197 = vsub.f32 %v4195, 1.0
    %v4198 = vmul.f32 %v4178, %v3869
    %v4199 = vmul.f32 %v4193, %v3870
    %4202 = vrot.lane.b32.xlu0 %v4196, 64
    %v4203 = vpop.permute.xlu0 %4202
    %4204 = vrot.lane.b32.xlu0 %v4197, 64
    %v4205 = vpop.permute.xlu0 %4204
    %v4208 = vmul.f32 %v4178, %v4203
    %v4209 = vmul.f32 %v4193, %v4205
    %4212 = vrot.lane.b32.xlu0 %v4208, 32
    %v4213 = vpop.permute.xlu0 %4212
    %4214 = vrot.lane.b32.xlu0 %v4209, 32
    %v4215 = vpop.permute.xlu0 %4214
    %v4218 = vadd.f32 %v4198, %v4213
    %v4219 = vadd.f32 %v4199, %v4215
    %v4220 = vtanh.pop %v4218
    %v4221 = vtanh.pop %v4219
    %4224 = vrot.lane.b32.xlu0 %v4220, 64
    %v4225 = vpop.permute.xlu0 %4224
    %4226 = vrot.lane.b32.xlu0 %v4221, 64
    %v4227 = vpop.permute.xlu0 %4226
    %v4230 = vmul.f32 %v4178, %v4225
    %v4231 = vmul.f32 %v4193, %v4227
    %4234 = vrot.lane.b32.xlu0 %v4230, 32
    %v4235 = vpop.permute.xlu0 %4234
    %4236 = vrot.lane.b32.xlu0 %v4231, 32
    %v4237 = vpop.permute.xlu0 %4236
    %4242 = vrot.lane.b32.xlu0 %v4004, 112
    %v4243 = vpop.permute.xlu0 %4242
    %4244 = vrot.lane.b32.xlu0 %v4005, 112
    %v4245 = vpop.permute.xlu0 %4244
    %v4248 = vsel %vm364, %v4235, %v4243
    %v4249 = vsel %vm364, %v4237, %v4245
    %v4251 = vsel %vm2504, %v4248, 0
    %v4254 = vsel %vm2504, %v4249, 0
    %4256 = vmatpush.msra.mxu0 0.0
    %4257 = vmatpush.msra.mxu0 0.0
    %4258 = vmatpush.msra.mxu0 0.0
    %4259 = vmatpush.msra.mxu0 0.0
    %4260 = vmatpush.msra.mxu0 0.0
    %4261 = vmatpush.msra.mxu0 0.0
    %4262 = vmatpush.msra.mxu0 0.0
    %4263 = vmatpush.msra.mxu0 0.0
    %4264 = vmatpush.msra.mxu0 0.0
    %4265 = vmatpush.msra.mxu0 0.0
    %4266 = vmatpush.msra.mxu0 %v215
    %4267 = vmatpush.msra.mxu0 %v214
    %4268 = vmatpush.msra.mxu0 %v213
    %4269 = vmatpush.msra.mxu0 %v212
    %4270 = vmatpush.msra.mxu0 %v211
    %4271 = vmatpush.msra.mxu0 %v210
    %4272 = vmatmul.f32.gmra.mxu0 %v4251
    %v4273 = vpop.f32.mrf.mxu0
    %v4274 = vadd.f32 %v226, %v4273
    %4275 = vmatmul.f32.gmra.mxu0 %v4254
    %v4276 = vpop.f32.mrf.mxu0
    %v4277 = vadd.f32 %v226, %v4276
    %4278 = vdwg.mxu0
    %v4279 = vxor.u32 %v4274, 2147483648
    %v4280 = vxor.u32 %v4277, 2147483648
    %v4281 = vmul.f32 %v4279, 1.442695
    %v4282 = vpow.pop %v4281
    %v4283 = vmul.f32 %v4280, 1.442695
    %v4284 = vpow.pop %v4283
    %v4285 = vadd.f32 %v4282, 1.0
    %v4286 = vadd.f32 %v4284, 1.0
    %v4287 = vrcp.pop %v4285
    %v4288 = vmul.f32 %v4285, %v4287
    %v4289 = vsub.f32 1.0, %v4288
    %v4290 = vmul.f32 %v4287, %v4289
    %v4291 = vadd.f32 %v4287, %v4290
    %vm4292 = vweird.f32 %v4285
    %vm4293 = vweird.f32 %v4287
    %vm4294 = vmor %vm4292, %vm4293
    %v4295 = vsel %vm4294, %v4287, %v4291
    %v4296 = vand.u32 2147483647, %v4285
    %vm4297 = vcmp.eq.f32.partialorder %v4296, 8.507059e+37
    %v4298 = vand.u32 %v4285, 2147483648
    %v4299 = vor.u32 1.1754944e-38, %v4298
    %v4300 = vsel %vm4297, %v4299, %v4295
    %v4301 = vmul.f32 1.0, %v4300
    %v4302 = vrcp.pop %v4286
    %v4303 = vmul.f32 %v4286, %v4302
    %v4304 = vsub.f32 1.0, %v4303
    %v4305 = vmul.f32 %v4302, %v4304
    %v4306 = vadd.f32 %v4302, %v4305
    %vm4307 = vweird.f32 %v4286
    %vm4308 = vweird.f32 %v4302
    %vm4309 = vmor %vm4307, %vm4308
    %v4310 = vsel %vm4309, %v4302, %v4306
    %v4311 = vand.u32 2147483647, %v4286
    %vm4312 = vcmp.eq.f32.partialorder %v4311, 8.507059e+37
    %v4313 = vand.u32 %v4286, 2147483648
    %v4314 = vor.u32 1.1754944e-38, %v4313
    %v4315 = vsel %vm4312, %v4314, %v4310
    %v4316 = vmul.f32 1.0, %v4315
    %v4317 = vmul.f32 %v4301, 2.0
    %v4318 = vmul.f32 %v4316, 2.0
    %v4319 = vsub.f32 %v4317, 1.0
    %v4320 = vsub.f32 %v4318, 1.0
    %v4321 = vmul.f32 %v4301, %v3992
    %v4322 = vmul.f32 %v4316, %v3993
    %4325 = vrot.lane.b32.xlu0 %v4319, 96
    %v4326 = vpop.permute.xlu0 %4325
    %4327 = vrot.lane.b32.xlu0 %v4320, 96
    %v4328 = vpop.permute.xlu0 %4327
    %v4331 = vmul.f32 %v4301, %v4326
    %v4332 = vmul.f32 %v4316, %v4328
    %4335 = vrot.lane.b32.xlu0 %v4331, 16
    %v4336 = vpop.permute.xlu0 %4335
    %4337 = vrot.lane.b32.xlu0 %v4332, 16
    %v4338 = vpop.permute.xlu0 %4337
    %v4341 = vadd.f32 %v4321, %v4336
    %v4342 = vadd.f32 %v4322, %v4338
    %v4343 = vtanh.pop %v4341
    %v4344 = vtanh.pop %v4342
    %4347 = vrot.lane.b32.xlu0 %v4343, 32
    %v4348 = vpop.permute.xlu0 %4347
    %4349 = vrot.lane.b32.xlu0 %v4344, 32
    %v4350 = vpop.permute.xlu0 %4349
    %v4353 = vmul.f32 %v4301, %v4348
    %v4354 = vmul.f32 %v4316, %v4350
    %v4355 = vsel %vm364, %v4114, 0
    %v4357 = vsel %vm364, %v4116, 0
    %4359 = vmatpush.msra.mxu0 0.0
    %4360 = vmatpush.msra.mxu0 0.0
    %4361 = vmatpush.msra.mxu0 0.0
    %4362 = vmatpush.msra.mxu0 0.0
    %4363 = vmatpush.msra.mxu0 0.0
    %4364 = vmatpush.msra.mxu0 0.0
    %4365 = vmatpush.msra.mxu0 0.0
    %4366 = vmatpush.msra.mxu0 0.0
    %4367 = vmatpush.msra.mxu0 0.0
    %4368 = vmatpush.msra.mxu0 0.0
    %4369 = vmatpush.msra.mxu0 0.0
    %4370 = vmatpush.msra.mxu0 0.0
    %4371 = vmatpush.msra.mxu0 %v201
    %4372 = vmatpush.msra.mxu0 %v200
    %4373 = vmatpush.msra.mxu0 %v199
    %4374 = vmatpush.msra.mxu0 %v198
    %4375 = vmatmul.f32.gmra.mxu0 %v4355
    %v4376 = vpop.f32.mrf.mxu0
    %v4377 = vadd.f32 0.0, %v4376
    %4378 = vmatmul.f32.gmra.mxu0 %v4357
    %v4379 = vpop.f32.mrf.mxu0
    %v4380 = vadd.f32 0.0, %v4379
    %4381 = vdwg.mxu0
    %v4382 = vadd.f32 %v2254, %v4377
    %v4383 = vadd.f32 %v2255, %v4380
    %v4384 = vxor.u32 %v4382, 2147483648
    %v4385 = vxor.u32 %v4383, 2147483648
    %v4386 = vmul.f32 %v4384, 1.442695
    %v4387 = vpow.pop %v4386
    %v4388 = vmul.f32 %v4385, 1.442695
    %v4389 = vpow.pop %v4388
    %v4390 = vadd.f32 %v4387, 1.0
    %v4391 = vadd.f32 %v4389, 1.0
    %v4392 = vrcp.pop %v4390
    %v4393 = vmul.f32 %v4390, %v4392
    %v4394 = vsub.f32 1.0, %v4393
    %v4395 = vmul.f32 %v4392, %v4394
    %v4396 = vadd.f32 %v4392, %v4395
    %vm4397 = vweird.f32 %v4390
    %vm4398 = vweird.f32 %v4392
    %vm4399 = vmor %vm4397, %vm4398
    %v4400 = vsel %vm4399, %v4392, %v4396
    %v4401 = vand.u32 2147483647, %v4390
    %vm4402 = vcmp.eq.f32.partialorder %v4401, 8.507059e+37
    %v4403 = vand.u32 %v4390, 2147483648
    %v4404 = vor.u32 1.1754944e-38, %v4403
    %v4405 = vsel %vm4402, %v4404, %v4400
    %v4406 = vmul.f32 1.0, %v4405
    %v4407 = vrcp.pop %v4391
    %v4408 = vmul.f32 %v4391, %v4407
    %v4409 = vsub.f32 1.0, %v4408
    %v4410 = vmul.f32 %v4407, %v4409
    %v4411 = vadd.f32 %v4407, %v4410
    %vm4412 = vweird.f32 %v4391
    %vm4413 = vweird.f32 %v4407
    %vm4414 = vmor %vm4412, %vm4413
    %v4415 = vsel %vm4414, %v4407, %v4411
    %v4416 = vand.u32 2147483647, %v4391
    %vm4417 = vcmp.eq.f32.partialorder %v4416, 8.507059e+37
    %v4418 = vand.u32 %v4391, 2147483648
    %v4419 = vor.u32 1.1754944e-38, %v4418
    %v4420 = vsel %vm4417, %v4419, %v4415
    %v4421 = vmul.f32 1.0, %v4420
    %v4422 = vmul.f32 %v4406, 2.0
    %v4423 = vmul.f32 %v4421, 2.0
    %v4424 = vsub.f32 %v4422, 1.0
    %v4425 = vsub.f32 %v4423, 1.0
    %v4426 = vmul.f32 %v4406, %v4097
    %v4427 = vmul.f32 %v4421, %v4098
    %4430 = vrot.lane.b32.xlu0 %v4424, 64
    %v4431 = vpop.permute.xlu0 %4430
    %4432 = vrot.lane.b32.xlu0 %v4425, 64
    %v4433 = vpop.permute.xlu0 %4432
    %v4436 = vmul.f32 %v4406, %v4431
    %v4437 = vmul.f32 %v4421, %v4433
    %4440 = vrot.lane.b32.xlu0 %v4436, 32
    %v4441 = vpop.permute.xlu0 %4440
    %4442 = vrot.lane.b32.xlu0 %v4437, 32
    %v4443 = vpop.permute.xlu0 %4442
    %v4446 = vadd.f32 %v4426, %v4441
    %v4447 = vadd.f32 %v4427, %v4443
    %v4448 = vtanh.pop %v4446
    %v4449 = vtanh.pop %v4447
    %4452 = vrot.lane.b32.xlu0 %v4448, 64
    %v4453 = vpop.permute.xlu0 %4452
    %4454 = vrot.lane.b32.xlu0 %v4449, 64
    %v4455 = vpop.permute.xlu0 %4454
    %v4458 = vmul.f32 %v4406, %v4453
    %v4459 = vmul.f32 %v4421, %v4455
    %4462 = vrot.lane.b32.xlu0 %v4458, 32
    %v4463 = vpop.permute.xlu0 %4462
    %4464 = vrot.lane.b32.xlu0 %v4459, 32
    %v4465 = vpop.permute.xlu0 %4464
    %4468 = vrot.lane.b32.xlu0 %v4230, 64
    %v4469 = vpop.permute.xlu0 %4468
    %4470 = vrot.lane.b32.xlu0 %v4231, 64
    %v4471 = vpop.permute.xlu0 %4470
    %v4474 = vsel %vm364, %v4463, %v4469
    %v4475 = vsel %vm364, %v4465, %v4471
    %v4477 = vsel %vm479, %v4474, 0
    %v4480 = vsel %vm479, %v4475, 0
    %4482 = vmatpush.msra.mxu0 0.0
    %4483 = vmatpush.msra.mxu0 0.0
    %4484 = vmatpush.msra.mxu0 0.0
    %4485 = vmatpush.msra.mxu0 0.0
    %4486 = vmatpush.msra.mxu0 0.0
    %4487 = vmatpush.msra.mxu0 0.0
    %4488 = vmatpush.msra.mxu0 0.0
    %4489 = vmatpush.msra.mxu0 0.0
    %4490 = vmatpush.msra.mxu0 %v209
    %4491 = vmatpush.msra.mxu0 %v208
    %4492 = vmatpush.msra.mxu0 %v207
    %4493 = vmatpush.msra.mxu0 %v206
    %4494 = vmatpush.msra.mxu0 %v205
    %4495 = vmatpush.msra.mxu0 %v204
    %4496 = vmatpush.msra.mxu0 %v203
    %4497 = vmatpush.msra.mxu0 %v202
    %4498 = vmatmul.f32.gmra.mxu0 %v4477
    %v4499 = vpop.f32.mrf.mxu0
    %v4500 = vadd.f32 %v222, %v4499
    %4501 = vmatmul.f32.gmra.mxu0 %v4480
    %v4502 = vpop.f32.mrf.mxu0
    %v4503 = vadd.f32 %v222, %v4502
    %4504 = vdwg.mxu0
    %v4505 = vxor.u32 %v4500, 2147483648
    %v4506 = vxor.u32 %v4503, 2147483648
    %v4507 = vmul.f32 %v4505, 1.442695
    %v4508 = vpow.pop %v4507
    %v4509 = vmul.f32 %v4506, 1.442695
    %v4510 = vpow.pop %v4509
    %v4511 = vadd.f32 %v4508, 1.0
    %v4512 = vadd.f32 %v4510, 1.0
    %v4513 = vrcp.pop %v4511
    %v4514 = vmul.f32 %v4511, %v4513
    %v4515 = vsub.f32 1.0, %v4514
    %v4516 = vmul.f32 %v4513, %v4515
    %v4517 = vadd.f32 %v4513, %v4516
    %vm4518 = vweird.f32 %v4511
    %vm4519 = vweird.f32 %v4513
    %vm4520 = vmor %vm4518, %vm4519
    %v4521 = vsel %vm4520, %v4513, %v4517
    %v4522 = vand.u32 2147483647, %v4511
    %vm4523 = vcmp.eq.f32.partialorder %v4522, 8.507059e+37
    %v4524 = vand.u32 %v4511, 2147483648
    %v4525 = vor.u32 1.1754944e-38, %v4524
    %v4526 = vsel %vm4523, %v4525, %v4521
    %v4527 = vmul.f32 1.0, %v4526
    %v4528 = vrcp.pop %v4512
    %v4529 = vmul.f32 %v4512, %v4528
    %v4530 = vsub.f32 1.0, %v4529
    %v4531 = vmul.f32 %v4528, %v4530
    %v4532 = vadd.f32 %v4528, %v4531
    %vm4533 = vweird.f32 %v4512
    %vm4534 = vweird.f32 %v4528
    %vm4535 = vmor %vm4533, %vm4534
    %v4536 = vsel %vm4535, %v4528, %v4532
    %v4537 = vand.u32 2147483647, %v4512
    %vm4538 = vcmp.eq.f32.partialorder %v4537, 8.507059e+37
    %v4539 = vand.u32 %v4512, 2147483648
    %v4540 = vor.u32 1.1754944e-38, %v4539
    %v4541 = vsel %vm4538, %v4540, %v4536
    %v4542 = vmul.f32 1.0, %v4541
    %v4543 = vmul.f32 %v4527, 2.0
    %v4544 = vmul.f32 %v4542, 2.0
    %v4545 = vsub.f32 %v4543, 1.0
    %v4546 = vsub.f32 %v4544, 1.0
    %v4547 = vmul.f32 %v4527, %v4218
    %v4548 = vmul.f32 %v4542, %v4219
    %4551 = vrot.lane.b32.xlu0 %v4545, 64
    %v4552 = vpop.permute.xlu0 %4551
    %4553 = vrot.lane.b32.xlu0 %v4546, 64
    %v4554 = vpop.permute.xlu0 %4553
    %v4557 = vmul.f32 %v4527, %v4552
    %v4558 = vmul.f32 %v4542, %v4554
    %4561 = vrot.lane.b32.xlu0 %v4557, 32
    %v4562 = vpop.permute.xlu0 %4561
    %4563 = vrot.lane.b32.xlu0 %v4558, 32
    %v4564 = vpop.permute.xlu0 %4563
    %v4567 = vadd.f32 %v4547, %v4562
    %v4568 = vadd.f32 %v4548, %v4564
    %v4569 = vtanh.pop %v4567
    %v4570 = vtanh.pop %v4568
    %4573 = vrot.lane.b32.xlu0 %v4569, 64
    %v4574 = vpop.permute.xlu0 %4573
    %4575 = vrot.lane.b32.xlu0 %v4570, 64
    %v4576 = vpop.permute.xlu0 %4575
    %v4579 = vmul.f32 %v4527, %v4574
    %v4580 = vmul.f32 %v4542, %v4576
    %4583 = vrot.lane.b32.xlu0 %v4579, 32
    %v4584 = vpop.permute.xlu0 %4583
    %4585 = vrot.lane.b32.xlu0 %v4580, 32
    %v4586 = vpop.permute.xlu0 %4585
    %4591 = vrot.lane.b32.xlu0 %v4353, 112
    %v4592 = vpop.permute.xlu0 %4591
    %4593 = vrot.lane.b32.xlu0 %v4354, 112
    %v4594 = vpop.permute.xlu0 %4593
    %v4597 = vsel %vm364, %v4584, %v4592
    %v4598 = vsel %vm364, %v4586, %v4594
    %v4600 = vsel %vm2504, %v4597, 0
    %v4603 = vsel %vm2504, %v4598, 0
    %4605 = vmatpush.msra.mxu0 0.0
    %4606 = vmatpush.msra.mxu0 0.0
    %4607 = vmatpush.msra.mxu0 0.0
    %4608 = vmatpush.msra.mxu0 0.0
    %4609 = vmatpush.msra.mxu0 0.0
    %4610 = vmatpush.msra.mxu0 0.0
    %4611 = vmatpush.msra.mxu0 0.0
    %4612 = vmatpush.msra.mxu0 0.0
    %4613 = vmatpush.msra.mxu0 0.0
    %4614 = vmatpush.msra.mxu0 0.0
    %4615 = vmatpush.msra.mxu0 %v215
    %4616 = vmatpush.msra.mxu0 %v214
    %4617 = vmatpush.msra.mxu0 %v213
    %4618 = vmatpush.msra.mxu0 %v212
    %4619 = vmatpush.msra.mxu0 %v211
    %4620 = vmatpush.msra.mxu0 %v210
    %4621 = vmatmul.f32.gmra.mxu0 %v4600
    %v4622 = vpop.f32.mrf.mxu0
    %v4623 = vadd.f32 %v226, %v4622
    %4624 = vmatmul.f32.gmra.mxu0 %v4603
    %v4625 = vpop.f32.mrf.mxu0
    %v4626 = vadd.f32 %v226, %v4625
    %4627 = vdwg.mxu0
    %v4628 = vxor.u32 %v4623, 2147483648
    %v4629 = vxor.u32 %v4626, 2147483648
    %v4630 = vmul.f32 %v4628, 1.442695
    %v4631 = vpow.pop %v4630
    %v4632 = vmul.f32 %v4629, 1.442695
    %v4633 = vpow.pop %v4632
    %v4634 = vadd.f32 %v4631, 1.0
    %v4635 = vadd.f32 %v4633, 1.0
    %v4636 = vrcp.pop %v4634
    %v4637 = vmul.f32 %v4634, %v4636
    %v4638 = vsub.f32 1.0, %v4637
    %v4639 = vmul.f32 %v4636, %v4638
    %v4640 = vadd.f32 %v4636, %v4639
    %vm4641 = vweird.f32 %v4634
    %vm4642 = vweird.f32 %v4636
    %vm4643 = vmor %vm4641, %vm4642
    %v4644 = vsel %vm4643, %v4636, %v4640
    %v4645 = vand.u32 2147483647, %v4634
    %vm4646 = vcmp.eq.f32.partialorder %v4645, 8.507059e+37
    %v4647 = vand.u32 %v4634, 2147483648
    %v4648 = vor.u32 1.1754944e-38, %v4647
    %v4649 = vsel %vm4646, %v4648, %v4644
    %v4650 = vmul.f32 1.0, %v4649
    %v4651 = vrcp.pop %v4635
    %v4652 = vmul.f32 %v4635, %v4651
    %v4653 = vsub.f32 1.0, %v4652
    %v4654 = vmul.f32 %v4651, %v4653
    %v4655 = vadd.f32 %v4651, %v4654
    %vm4656 = vweird.f32 %v4635
    %vm4657 = vweird.f32 %v4651
    %vm4658 = vmor %vm4656, %vm4657
    %v4659 = vsel %vm4658, %v4651, %v4655
    %v4660 = vand.u32 2147483647, %v4635
    %vm4661 = vcmp.eq.f32.partialorder %v4660, 8.507059e+37
    %v4662 = vand.u32 %v4635, 2147483648
    %v4663 = vor.u32 1.1754944e-38, %v4662
    %v4664 = vsel %vm4661, %v4663, %v4659
    %v4665 = vmul.f32 1.0, %v4664
    %v4666 = vmul.f32 %v4650, 2.0
    %v4667 = vmul.f32 %v4665, 2.0
    %v4668 = vsub.f32 %v4666, 1.0
    %v4669 = vsub.f32 %v4667, 1.0
    %v4670 = vmul.f32 %v4650, %v4341
    %v4671 = vmul.f32 %v4665, %v4342
    %4674 = vrot.lane.b32.xlu0 %v4668, 96
    %v4675 = vpop.permute.xlu0 %4674
    %4676 = vrot.lane.b32.xlu0 %v4669, 96
    %v4677 = vpop.permute.xlu0 %4676
    %v4680 = vmul.f32 %v4650, %v4675
    %v4681 = vmul.f32 %v4665, %v4677
    %4684 = vrot.lane.b32.xlu0 %v4680, 16
    %v4685 = vpop.permute.xlu0 %4684
    %4686 = vrot.lane.b32.xlu0 %v4681, 16
    %v4687 = vpop.permute.xlu0 %4686
    %v4690 = vadd.f32 %v4670, %v4685
    %v4691 = vadd.f32 %v4671, %v4687
    %v4692 = vtanh.pop %v4690
    %v4693 = vtanh.pop %v4691
    %4696 = vrot.lane.b32.xlu0 %v4692, 32
    %v4697 = vpop.permute.xlu0 %4696
    %4698 = vrot.lane.b32.xlu0 %v4693, 32
    %v4699 = vpop.permute.xlu0 %4698
    %v4702 = vmul.f32 %v4650, %v4697
    %v4703 = vmul.f32 %v4665, %v4699
    %v4704 = vsel %vm364, %v4463, 0
    %v4706 = vsel %vm364, %v4465, 0
    %4708 = vmatpush.msra.mxu0 0.0
    %4709 = vmatpush.msra.mxu0 0.0
    %4710 = vmatpush.msra.mxu0 0.0
    %4711 = vmatpush.msra.mxu0 0.0
    %4712 = vmatpush.msra.mxu0 0.0
    %4713 = vmatpush.msra.mxu0 0.0
    %4714 = vmatpush.msra.mxu0 0.0
    %4715 = vmatpush.msra.mxu0 0.0
    %4716 = vmatpush.msra.mxu0 0.0
    %4717 = vmatpush.msra.mxu0 0.0
    %4718 = vmatpush.msra.mxu0 0.0
    %4719 = vmatpush.msra.mxu0 0.0
    %4720 = vmatpush.msra.mxu0 %v201
    %4721 = vmatpush.msra.mxu0 %v200
    %4722 = vmatpush.msra.mxu0 %v199
    %4723 = vmatpush.msra.mxu0 %v198
    %4724 = vmatmul.f32.gmra.mxu0 %v4704
    %v4725 = vpop.f32.mrf.mxu0
    %v4726 = vadd.f32 0.0, %v4725
    %4727 = vmatmul.f32.gmra.mxu0 %v4706
    %v4728 = vpop.f32.mrf.mxu0
    %v4729 = vadd.f32 0.0, %v4728
    %4730 = vdwg.mxu0
    %v4731 = vadd.f32 %v2252, %v4726
    %v4732 = vadd.f32 %v2253, %v4729
    %v4733 = vxor.u32 %v4731, 2147483648
    %v4734 = vxor.u32 %v4732, 2147483648
    %v4735 = vmul.f32 %v4733, 1.442695
    %v4736 = vpow.pop %v4735
    %v4737 = vmul.f32 %v4734, 1.442695
    %v4738 = vpow.pop %v4737
    %v4739 = vadd.f32 %v4736, 1.0
    %v4740 = vadd.f32 %v4738, 1.0
    %v4741 = vrcp.pop %v4739
    %v4742 = vmul.f32 %v4739, %v4741
    %v4743 = vsub.f32 1.0, %v4742
    %v4744 = vmul.f32 %v4741, %v4743
    %v4745 = vadd.f32 %v4741, %v4744
    %vm4746 = vweird.f32 %v4739
    %vm4747 = vweird.f32 %v4741
    %vm4748 = vmor %vm4746, %vm4747
    %v4749 = vsel %vm4748, %v4741, %v4745
    %v4750 = vand.u32 2147483647, %v4739
    %vm4751 = vcmp.eq.f32.partialorder %v4750, 8.507059e+37
    %v4752 = vand.u32 %v4739, 2147483648
    %v4753 = vor.u32 1.1754944e-38, %v4752
    %v4754 = vsel %vm4751, %v4753, %v4749
    %v4755 = vmul.f32 1.0, %v4754
    %v4756 = vrcp.pop %v4740
    %v4757 = vmul.f32 %v4740, %v4756
    %v4758 = vsub.f32 1.0, %v4757
    %v4759 = vmul.f32 %v4756, %v4758
    %v4760 = vadd.f32 %v4756, %v4759
    %vm4761 = vweird.f32 %v4740
    %vm4762 = vweird.f32 %v4756
    %vm4763 = vmor %vm4761, %vm4762
    %v4764 = vsel %vm4763, %v4756, %v4760
    %v4765 = vand.u32 2147483647, %v4740
    %vm4766 = vcmp.eq.f32.partialorder %v4765, 8.507059e+37
    %v4767 = vand.u32 %v4740, 2147483648
    %v4768 = vor.u32 1.1754944e-38, %v4767
    %v4769 = vsel %vm4766, %v4768, %v4764
    %v4770 = vmul.f32 1.0, %v4769
    %v4771 = vmul.f32 %v4755, 2.0
    %v4772 = vmul.f32 %v4770, 2.0
    %v4773 = vsub.f32 %v4771, 1.0
    %v4774 = vsub.f32 %v4772, 1.0
    %v4775 = vmul.f32 %v4755, %v4446
    %v4776 = vmul.f32 %v4770, %v4447
    %4779 = vrot.lane.b32.xlu0 %v4773, 64
    %v4780 = vpop.permute.xlu0 %4779
    %4781 = vrot.lane.b32.xlu0 %v4774, 64
    %v4782 = vpop.permute.xlu0 %4781
    %v4785 = vmul.f32 %v4755, %v4780
    %v4786 = vmul.f32 %v4770, %v4782
    %4789 = vrot.lane.b32.xlu0 %v4785, 32
    %v4790 = vpop.permute.xlu0 %4789
    %4791 = vrot.lane.b32.xlu0 %v4786, 32
    %v4792 = vpop.permute.xlu0 %4791
    %v4795 = vadd.f32 %v4775, %v4790
    %v4796 = vadd.f32 %v4776, %v4792
    %v4797 = vtanh.pop %v4795
    %v4798 = vtanh.pop %v4796
    %4801 = vrot.lane.b32.xlu0 %v4797, 64
    %v4802 = vpop.permute.xlu0 %4801
    %4803 = vrot.lane.b32.xlu0 %v4798, 64
    %v4804 = vpop.permute.xlu0 %4803
    %v4807 = vmul.f32 %v4755, %v4802
    %v4808 = vmul.f32 %v4770, %v4804
    %4811 = vrot.lane.b32.xlu0 %v4807, 32
    %v4812 = vpop.permute.xlu0 %4811
    %4813 = vrot.lane.b32.xlu0 %v4808, 32
    %v4814 = vpop.permute.xlu0 %4813
    %4817 = vrot.lane.b32.xlu0 %v4579, 64
    %v4818 = vpop.permute.xlu0 %4817
    %4819 = vrot.lane.b32.xlu0 %v4580, 64
    %v4820 = vpop.permute.xlu0 %4819
    %v4823 = vsel %vm364, %v4812, %v4818
    %v4824 = vsel %vm364, %v4814, %v4820
    %v4826 = vsel %vm479, %v4823, 0
    %v4829 = vsel %vm479, %v4824, 0
    %4831 = vmatpush.msra.mxu0 0.0
    %4832 = vmatpush.msra.mxu0 0.0
    %4833 = vmatpush.msra.mxu0 0.0
    %4834 = vmatpush.msra.mxu0 0.0
    %4835 = vmatpush.msra.mxu0 0.0
    %4836 = vmatpush.msra.mxu0 0.0
    %4837 = vmatpush.msra.mxu0 0.0
    %4838 = vmatpush.msra.mxu0 0.0
    %4839 = vmatpush.msra.mxu0 %v209
    %4840 = vmatpush.msra.mxu0 %v208
    %4841 = vmatpush.msra.mxu0 %v207
    %4842 = vmatpush.msra.mxu0 %v206
    %4843 = vmatpush.msra.mxu0 %v205
    %4844 = vmatpush.msra.mxu0 %v204
    %4845 = vmatpush.msra.mxu0 %v203
    %4846 = vmatpush.msra.mxu0 %v202
    %4847 = vmatmul.f32.gmra.mxu0 %v4826
    %v4848 = vpop.f32.mrf.mxu0
    %v4849 = vadd.f32 %v222, %v4848
    %4850 = vmatmul.f32.gmra.mxu0 %v4829
    %v4851 = vpop.f32.mrf.mxu0
    %v4852 = vadd.f32 %v222, %v4851
    %4853 = vdwg.mxu0
    %v4854 = vxor.u32 %v4849, 2147483648
    %v4855 = vxor.u32 %v4852, 2147483648
    %v4856 = vmul.f32 %v4854, 1.442695
    %v4857 = vpow.pop %v4856
    %v4858 = vmul.f32 %v4855, 1.442695
    %v4859 = vpow.pop %v4858
    %v4860 = vadd.f32 %v4857, 1.0
    %v4861 = vadd.f32 %v4859, 1.0
    %v4862 = vrcp.pop %v4860
    %v4863 = vmul.f32 %v4860, %v4862
    %v4864 = vsub.f32 1.0, %v4863
    %v4865 = vmul.f32 %v4862, %v4864
    %v4866 = vadd.f32 %v4862, %v4865
    %vm4867 = vweird.f32 %v4860
    %vm4868 = vweird.f32 %v4862
    %vm4869 = vmor %vm4867, %vm4868
    %v4870 = vsel %vm4869, %v4862, %v4866
    %v4871 = vand.u32 2147483647, %v4860
    %vm4872 = vcmp.eq.f32.partialorder %v4871, 8.507059e+37
    %v4873 = vand.u32 %v4860, 2147483648
    %v4874 = vor.u32 1.1754944e-38, %v4873
    %v4875 = vsel %vm4872, %v4874, %v4870
    %v4876 = vmul.f32 1.0, %v4875
    %v4877 = vrcp.pop %v4861
    %v4878 = vmul.f32 %v4861, %v4877
    %v4879 = vsub.f32 1.0, %v4878
    %v4880 = vmul.f32 %v4877, %v4879
    %v4881 = vadd.f32 %v4877, %v4880
    %vm4882 = vweird.f32 %v4861
    %vm4883 = vweird.f32 %v4877
    %vm4884 = vmor %vm4882, %vm4883
    %v4885 = vsel %vm4884, %v4877, %v4881
    %v4886 = vand.u32 2147483647, %v4861
    %vm4887 = vcmp.eq.f32.partialorder %v4886, 8.507059e+37
    %v4888 = vand.u32 %v4861, 2147483648
    %v4889 = vor.u32 1.1754944e-38, %v4888
    %v4890 = vsel %vm4887, %v4889, %v4885
    %v4891 = vmul.f32 1.0, %v4890
    %v4892 = vmul.f32 %v4876, 2.0
    %v4893 = vmul.f32 %v4891, 2.0
    %v4894 = vsub.f32 %v4892, 1.0
    %v4895 = vsub.f32 %v4893, 1.0
    %v4896 = vmul.f32 %v4876, %v4567
    %v4897 = vmul.f32 %v4891, %v4568
    %4900 = vrot.lane.b32.xlu0 %v4894, 64
    %v4901 = vpop.permute.xlu0 %4900
    %4902 = vrot.lane.b32.xlu0 %v4895, 64
    %v4903 = vpop.permute.xlu0 %4902
    %v4906 = vmul.f32 %v4876, %v4901
    %v4907 = vmul.f32 %v4891, %v4903
    %4910 = vrot.lane.b32.xlu0 %v4906, 32
    %v4911 = vpop.permute.xlu0 %4910
    %4912 = vrot.lane.b32.xlu0 %v4907, 32
    %v4913 = vpop.permute.xlu0 %4912
    %v4916 = vadd.f32 %v4896, %v4911
    %v4917 = vadd.f32 %v4897, %v4913
    %v4918 = vtanh.pop %v4916
    %v4919 = vtanh.pop %v4917
    %4922 = vrot.lane.b32.xlu0 %v4918, 64
    %v4923 = vpop.permute.xlu0 %4922
    %4924 = vrot.lane.b32.xlu0 %v4919, 64
    %v4925 = vpop.permute.xlu0 %4924
    %v4928 = vmul.f32 %v4876, %v4923
    %v4929 = vmul.f32 %v4891, %v4925
    %4932 = vrot.lane.b32.xlu0 %v4928, 32
    %v4933 = vpop.permute.xlu0 %4932
    %4934 = vrot.lane.b32.xlu0 %v4929, 32
    %v4935 = vpop.permute.xlu0 %4934
    %4940 = vrot.lane.b32.xlu0 %v4702, 112
    %v4941 = vpop.permute.xlu0 %4940
    %4942 = vrot.lane.b32.xlu0 %v4703, 112
    %v4943 = vpop.permute.xlu0 %4942
    %v4946 = vsel %vm364, %v4933, %v4941
    %v4947 = vsel %vm364, %v4935, %v4943
    %v4949 = vsel %vm2504, %v4946, 0
    %v4952 = vsel %vm2504, %v4947, 0
    %4954 = vmatpush.msra.mxu0 0.0
    %4955 = vmatpush.msra.mxu0 0.0
    %4956 = vmatpush.msra.mxu0 0.0
    %4957 = vmatpush.msra.mxu0 0.0
    %4958 = vmatpush.msra.mxu0 0.0
    %4959 = vmatpush.msra.mxu0 0.0
    %4960 = vmatpush.msra.mxu0 0.0
    %4961 = vmatpush.msra.mxu0 0.0
    %4962 = vmatpush.msra.mxu0 0.0
    %4963 = vmatpush.msra.mxu0 0.0
    %4964 = vmatpush.msra.mxu0 %v215
    %4965 = vmatpush.msra.mxu0 %v214
    %4966 = vmatpush.msra.mxu0 %v213
    %4967 = vmatpush.msra.mxu0 %v212
    %4968 = vmatpush.msra.mxu0 %v211
    %4969 = vmatpush.msra.mxu0 %v210
    %4970 = vmatmul.f32.gmra.mxu0 %v4949
    %v4971 = vpop.f32.mrf.mxu0
    %v4972 = vadd.f32 %v226, %v4971
    %4973 = vmatmul.f32.gmra.mxu0 %v4952
    %v4974 = vpop.f32.mrf.mxu0
    %v4975 = vadd.f32 %v226, %v4974
    %4976 = vdwg.mxu0
    %v4977 = vxor.u32 %v4972, 2147483648
    %v4978 = vxor.u32 %v4975, 2147483648
    %v4979 = vmul.f32 %v4977, 1.442695
    %v4980 = vpow.pop %v4979
    %v4981 = vmul.f32 %v4978, 1.442695
    %v4982 = vpow.pop %v4981
    %v4983 = vadd.f32 %v4980, 1.0
    %v4984 = vadd.f32 %v4982, 1.0
    %v4985 = vrcp.pop %v4983
    %v4986 = vmul.f32 %v4983, %v4985
    %v4987 = vsub.f32 1.0, %v4986
    %v4988 = vmul.f32 %v4985, %v4987
    %v4989 = vadd.f32 %v4985, %v4988
    %vm4990 = vweird.f32 %v4983
    %vm4991 = vweird.f32 %v4985
    %vm4992 = vmor %vm4990, %vm4991
    %v4993 = vsel %vm4992, %v4985, %v4989
    %v4994 = vand.u32 2147483647, %v4983
    %vm4995 = vcmp.eq.f32.partialorder %v4994, 8.507059e+37
    %v4996 = vand.u32 %v4983, 2147483648
    %v4997 = vor.u32 1.1754944e-38, %v4996
    %v4998 = vsel %vm4995, %v4997, %v4993
    %v4999 = vmul.f32 1.0, %v4998
    %v5000 = vrcp.pop %v4984
    %v5001 = vmul.f32 %v4984, %v5000
    %v5002 = vsub.f32 1.0, %v5001
    %v5003 = vmul.f32 %v5000, %v5002
    %v5004 = vadd.f32 %v5000, %v5003
    %vm5005 = vweird.f32 %v4984
    %vm5006 = vweird.f32 %v5000
    %vm5007 = vmor %vm5005, %vm5006
    %v5008 = vsel %vm5007, %v5000, %v5004
    %v5009 = vand.u32 2147483647, %v4984
    %vm5010 = vcmp.eq.f32.partialorder %v5009, 8.507059e+37
    %v5011 = vand.u32 %v4984, 2147483648
    %v5012 = vor.u32 1.1754944e-38, %v5011
    %v5013 = vsel %vm5010, %v5012, %v5008
    %v5014 = vmul.f32 1.0, %v5013
    %v5015 = vmul.f32 %v4999, 2.0
    %v5016 = vmul.f32 %v5014, 2.0
    %v5017 = vsub.f32 %v5015, 1.0
    %v5018 = vsub.f32 %v5016, 1.0
    %v5019 = vmul.f32 %v4999, %v4690
    %v5020 = vmul.f32 %v5014, %v4691
    %5023 = vrot.lane.b32.xlu0 %v5017, 96
    %v5024 = vpop.permute.xlu0 %5023
    %5025 = vrot.lane.b32.xlu0 %v5018, 96
    %v5026 = vpop.permute.xlu0 %5025
    %v5029 = vmul.f32 %v4999, %v5024
    %v5030 = vmul.f32 %v5014, %v5026
    %5033 = vrot.lane.b32.xlu0 %v5029, 16
    %v5034 = vpop.permute.xlu0 %5033
    %5035 = vrot.lane.b32.xlu0 %v5030, 16
    %v5036 = vpop.permute.xlu0 %5035
    %v5039 = vadd.f32 %v5019, %v5034
    %v5040 = vadd.f32 %v5020, %v5036
    %v5041 = vtanh.pop %v5039
    %v5042 = vtanh.pop %v5040
    %5045 = vrot.lane.b32.xlu0 %v5041, 32
    %v5046 = vpop.permute.xlu0 %5045
    %5047 = vrot.lane.b32.xlu0 %v5042, 32
    %v5048 = vpop.permute.xlu0 %5047
    %v5051 = vmul.f32 %v4999, %v5046
    %v5052 = vmul.f32 %v5014, %v5048
    %5053 = vrot.lane.b32.xlu0 %v2608, 80
    %v5054 = vpop.permute.xlu0 %5053
    %5055 = vrot.lane.b32.xlu0 %v2609, 80
    %v5056 = vpop.permute.xlu0 %5055
    %5059 = vrot.lane.b32.xlu0 %v2957, 96
    %v5060 = vpop.permute.xlu0 %5059
    %5061 = vrot.lane.b32.xlu0 %v2958, 96
    %v5062 = vpop.permute.xlu0 %5061
    %5065 = vrot.lane.b32.xlu0 %v4004, 16
    %v5066 = vpop.permute.xlu0 %5065
    %5067 = vrot.lane.b32.xlu0 %v4005, 16
    %v5068 = vpop.permute.xlu0 %5067
    %5071 = vrot.lane.b32.xlu0 %v4353, 32
    %v5072 = vpop.permute.xlu0 %5071
    %5073 = vrot.lane.b32.xlu0 %v4354, 32
    %v5074 = vpop.permute.xlu0 %5073
    %5077 = vrot.lane.b32.xlu0 %v4702, 48
    %v5078 = vpop.permute.xlu0 %5077
    %5079 = vrot.lane.b32.xlu0 %v4703, 48
    %v5080 = vpop.permute.xlu0 %5079
    %5085 = vrot.lane.b32.xlu0 %v5051, 64
    %v5086 = vpop.permute.xlu0 %5085
    %5087 = vrot.lane.b32.xlu0 %v5052, 64
    %v5088 = vpop.permute.xlu0 %5087
    %v5091 = vsel %vm230, %v5054, %v5060
    %v5092 = vsel %vm230, %v5056, %v5062
    %v5093 = vsel %vm364, %v5091, %v3545
    %v5094 = vsel %vm364, %v5092, %v3547
    %v5095 = vsel %vm2504, %v5093, %v3655
    %v5096 = vsel %vm2504, %v5094, %v3656
    %v5097 = vsel %vm479, %v5095, %v5066
    %v5098 = vsel %vm479, %v5096, %v5068
    %vm5099 = vcmask 654336
    %v5100 = vsel %vm5099, %v5097, %v5072
    %v5101 = vsel %vm5099, %v5098, %v5074
    %vm5102 = vcmask 785408
    %v5103 = vsel %vm5102, %v5100, %v5078
    %v5104 = vsel %vm5102, %v5101, %v5080
    %vm5105 = vcmask 916480
    %v5106 = vsel %vm5105, %v5103, %v5086
    %v5107 = vsel %vm5105, %v5104, %v5088
    %5108 = vst [vmem:[#allocation16] sm:$0xff] %v5106
    %5109 = vst [vmem:[#allocation16 + $0x8] sm:$0xff] %v5107
    // Predicated region
    $region86: #{tpu_custom_call.1} parent=1 // pred_check
      _
    $region87: #{tpu_custom_call.1} parent=1 // pred_check_branch
      %5111 = sbr.rel (0) target = $region89
    $region88: #{tpu_custom_call.1} parent=1 // pred_region
      %5113 = vsyncadd [#allocation4], 0
      %s5114 = sshll.u32 [#allocation16], 4
      %s5115 = int_to_ptr.vmem [resolvable:$true] %s5114
      %s5116 = sshll.u32 %s13, 4
      %s5117 = int_to_ptr.hbm [resolvable:$true] %s5116
      %5122 = dma.vmem_to_hbm [thread:$0]  %s5115, 256, %s5117, [#allocation4], 128, 128, 8
    $region89: #{tpu_custom_call.1} parent=1 // pred_fallthru
      _
    // Predicated region
    $region90: #{tpu_custom_call.1} parent=1 // pred_check
      _
    $region91: #{tpu_custom_call.1} parent=1 // pred_check_branch
      %5124 = sbr.rel (0) target = $region93
    $region92: #{tpu_custom_call.1} parent=1 // pred_region
      %5126 = dma.done [#allocation4], 256
    $region93: #{tpu_custom_call.1} parent=1 // pred_fallthru
      _
    %5127 = vsyncpa [#allocation3], 1
    %5128 = vsyncpa [#allocation6], 1
    %5129 = vsyncpa [#allocation9], 1
    %5130 = vsyncpa [#allocation12], 1
    %5131 = vsyncpa [#allocation15], 1
    %5132 = vsyncpa [#allocation4], 1

</llo_original>
